<compile_context>
chip_gen: v6e
topology: v6e:2x2x1
jax: 0.10.0
libtpu: 0.0.40
codegen_flags: <defaults>
</compile_context>

<pallas_src>
import numpy as np
import jax
import jax.numpy as jnp
from jax.experimental import pallas as pl
from jax.experimental.pallas import tpu as pltpu

KW = 4           # conv kernel size (fixed by the module)
PAD = 1          # conv padding (fixed by the module)
NEG_SLOPE = 0.2  # LeakyReLU slope


def _round_up(x, m):
    return (x + m - 1) // m * m


# ----------------------------------------------------------------------------
# Static layer plan (mirrors the PyTorch patchGAN_discriminator structure)
# ----------------------------------------------------------------------------
def build_plan(input_nc, ndf, n_layers, H, W):
    specs = [(input_nc, ndf, 2)]
    nf_mult = 1
    for n in range(1, n_layers):
        nf_prev, nf_mult = nf_mult, min(2 ** n, 8)
        specs.append((ndf * nf_prev, ndf * nf_mult, 2))
    nf_prev, nf_mult = nf_mult, min(2 ** n_layers, 8)
    specs.append((ndf * nf_prev, ndf * nf_mult, 1))
    specs.append((ndf * nf_mult, 1, 1))          # final 1-channel conv

    plan = []
    h, w = H, W
    for cin, cout, s in specs:
        hp = h + 2 * PAD
        wp = w + 2 * PAD
        hout = (hp - KW) // s + 1
        wout = (wp - KW) // s + 1
        assert hout > 0 and wout > 0, "input too small for the conv stack"
        if s == 2:
            assert hp % 2 == 0, "stride-2 layers need an even padded height"
        plan.append(dict(cin=cin, cout=cout, stride=s, Hin=h, Win=w,
                         Hp=hp, Hout=hout, Wout=wout))
        h, w = hout, wout
    return plan


def init_patchgan_params(key, plan):
    """PyTorch-default-style uniform init, (Cout,Cin,4,4) weights + (Cout,) bias."""
    params = []
    for L in plan:
        cin, cout = L["cin"], L["cout"]
        key, k1, k2 = jax.random.split(key, 3)
        bound = 1.0 / np.sqrt(float(cin * KW * KW))
        w = jax.random.uniform(k1, (cout, cin, KW, KW), jnp.float32, -bound, bound)
        b = jax.random.uniform(k2, (cout,), jnp.float32, -bound, bound)
        params.append((w, b))
    return params


# ----------------------------------------------------------------------------
# One-time weight packing: per kernel-row "row-Toeplitz" matrices + tiled bias
# ----------------------------------------------------------------------------
def _row_toeplitz(w_oihw, stride, Win, Wout):
    """(Cout,Cin,4,4) -> (4, Win*Cin, Wout*Cout).

    T[i, w*Cin + c, wo*Cout + co] = W[co, c, i, j] where w = stride*wo + j - PAD
    (taps that fall on the zero W-padding are simply dropped)."""
    cout, cin, kh, kw = w_oihw.shape
    T = np.zeros((kh, Win * cin, Wout * cout), np.float32)
    for i in range(kh):
        for wo in range(Wout):
            for j in range(kw):
                w_in = stride * wo + j - PAD
                if 0 <= w_in < Win:
                    T[i, w_in * cin:(w_in + 1) * cin,
                         wo * cout:(wo + 1) * cout] = w_oihw[:, :, i, j].T
    return T


def pack_params(params, plan):
    """bf16 Toeplitz taps (halves weight HBM/VMEM bytes) + f32 pre-tiled bias."""
    packed = []
    for (w, b), L in zip(params, plan):
        T = _row_toeplitz(np.asarray(w), L["stride"], L["Win"], L["Wout"])
        packed.append((jnp.asarray(T, dtype=jnp.bfloat16),
                       jnp.tile(b, L["Wout"]).reshape(1, L["Wout"] * L["cout"])))
    return packed


# ----------------------------------------------------------------------------
# Fused Pallas kernel: all layers, activations resident in VMEM scratch
# ----------------------------------------------------------------------------
def _make_fused_kernel(plan, bb):
    """bb = images handled by one grid program (batch is folded into GEMM M)."""
    n_layers = len(plan)

    def kernel(*refs):
        x_ref = refs[0]
        t_refs = [refs[1 + 2 * l] for l in range(n_layers)]
        b_refs = [refs[2 + 2 * l] for l in range(n_layers)]
        o_ref = refs[1 + 2 * n_layers]
        scratch = list(refs[2 + 2 * n_layers:])    # padded input slabs, layers 1..

        # Zero ONLY the H-padding rows (first / last bb rows) of each scratch
        # slab; all interior rows are fully overwritten by the producer layer.
        for s_ref, L in zip(scratch, plan[1:]):
            k = L["Win"] * L["cin"]
            zero = jnp.zeros((bb, k), jnp.float32)
            s_ref[pl.ds(0, bb), :] = zero
            s_ref[pl.ds((L["Hp"] - 1) * bb, bb), :] = zero

        src_refs = [x_ref] + scratch               # input slab of each layer

        for l, L in enumerate(plan):
            stride, hout = L["stride"], L["Hout"]
            hp_half = L["Hp"] // 2
            m = hout * bb                          # GEMM M = Hout * batch_block
            last = l == n_layers - 1

            # 4 tap GEMMs with batch folded into M; taps loaded one at a time
            # from the (bf16) Ref and upcast right before the MXU.
            acc = None
            for i in range(KW):
                if stride == 2:
                    # parity-split source: padded row h = 2a+p lives at
                    # row (p*Hp/2 + a)*bb + n  -> contiguous block per tap.
                    r0 = ((i % 2) * hp_half + i // 2) * bb
                else:
                    r0 = i * bb
                rows = src_refs[l][pl.ds(r0, m), :]             # (M, Win*Cin) f32
                t_tap = t_refs[l][i].astype(jnp.float32)        # (Win*Cin, N)
                part = jnp.dot(rows, t_tap, preferred_element_type=jnp.float32)
                acc = part if acc is None else acc + part

            acc = acc + b_refs[l][...]                          # (1, N) bias
            if not last:
                acc = jnp.where(acc >= 0.0, acc, NEG_SLOPE * acc)

            if last:
                o_ref[pl.ds(0, m), :] = acc
                pad = o_ref.shape[0] - m                        # alignment tail
                if pad > 0:
                    o_ref[pl.ds(m, pad), :] = jnp.zeros(
                        (pad, o_ref.shape[1]), jnp.float32)
            else:
                nxt = plan[l + 1]
                if nxt["stride"] == 1:
                    # Plain destination: padded rows h = 1..Hout, 1 block store.
                    scratch[l][pl.ds(bb, m), :] = acc
                else:
                    # Parity-split destination: deinterleave acc by output-row
                    # parity and write TWO contiguous block stores.
                    n_cols = acc.shape[1]
                    half = hout // 2
                    acc4 = acc.reshape(half, 2, bb, n_cols)
                    even = acc4[:, 0].reshape(half * bb, n_cols)  # ho even -> h odd (p=1)
                    odd = acc4[:, 1].reshape(half * bb, n_cols)   # ho odd  -> h even (p=0)
                    nxt_half = nxt["Hp"] // 2
                    scratch[l][pl.ds(nxt_half * bb, half * bb), :] = even
                    scratch[l][pl.ds(bb, half * bb), :] = odd

    return kernel


def patchgan_forward(x_nchw, packed, plan, *, batch_block=None):
    batch = x_nchw.shape[0]
    bb = batch if batch_block is None else batch_block
    assert batch % bb == 0
    G = batch // bb                               # grid programs (parallel)

    L0, Ll = plan[0], plan[-1]
    hp0, k0 = L0["Hp"], L0["Win"] * L0["cin"]

    # Host-side prep (once): NCHW -> NHWC, zero-pad H only (W padding is folded
    # into the packed weights), split padded rows by parity for the stride-2
    # first layer, fold batch into the row (M) dimension (h-major, batch-minor),
    # group-major for the batch grid axis; pad each group's row block to x8.
    x = jnp.transpose(x_nchw, (0, 2, 3, 1)).astype(jnp.float32)
    xp = jnp.pad(x, ((0, 0), (PAD, PAD), (0, 0), (0, 0))).reshape(batch, hp0, k0)
    xg = (xp.reshape(G, bb, hp0 // 2, 2, k0)
            .transpose(0, 3, 2, 1, 4)             # (G, parity, a, n, W*C)
            .reshape(G, hp0 * bb, k0))
    rows_in = _round_up(hp0 * bb, 8)
    if rows_in > hp0 * bb:
        xg = jnp.pad(xg, ((0, 0), (0, rows_in - hp0 * bb), (0, 0)))
    x2d = xg.reshape(G * rows_in, k0)

    inputs = [x2d]
    in_specs = [pl.BlockSpec((rows_in, k0), lambda g: (g, 0))]
    for T, b_row in packed:
        inputs += [T, b_row]
        in_specs += [pl.BlockSpec(T.shape, lambda g: (0, 0, 0)),
                     pl.BlockSpec(b_row.shape, lambda g: (0, 0))]

    scratch_shapes = [
        pltpu.VMEM((L["Hp"] * bb, L["Win"] * L["cin"]), jnp.float32)
        for L in plan[1:]
    ]

    out_rows_g = Ll["Hout"] * bb
    out_rows = _round_up(out_rows_g, 8)
    out_cols = Ll["Wout"] * Ll["cout"]

    flops = sum(2 * batch * KW * L["Hout"] * (L["Win"] * L["cin"])
                * (L["Wout"] * L["cout"]) for L in plan)
    bytes_accessed = (x2d.nbytes + G * out_rows * out_cols * 4
                      + G * sum(T.nbytes + b.nbytes for T, b in packed))

    out2d = pl.pallas_call(
        _make_fused_kernel(plan, bb),
        out_shape=jax.ShapeDtypeStruct((G * out_rows, out_cols), jnp.float32),
        grid=(G,),
        in_specs=in_specs,
        out_specs=pl.BlockSpec((out_rows, out_cols), lambda g: (g, 0)),
        scratch_shapes=scratch_shapes,
        compiler_params=pltpu.CompilerParams(dimension_semantics=("parallel",)),
        cost_estimate=pl.CostEstimate(flops=int(flops), transcendentals=0,
                                      bytes_accessed=int(bytes_accessed)),
    )(*inputs)

    out = (out2d.reshape(G, out_rows, out_cols)[:, :out_rows_g]
                 .reshape(G, Ll["Hout"], bb, Ll["Wout"], Ll["cout"])
                 .transpose(0, 2, 4, 1, 3)
                 .reshape(batch, Ll["cout"], Ll["Hout"], Ll["Wout"]))
    return out


# Plain-JAX reference (correctness sanity check only).
def _reference_forward(x_nchw, params, plan):
    x = x_nchw
    n = len(params)
    for idx, ((w, b), L) in enumerate(zip(params, plan)):
        x = jax.lax.conv_general_dilated(
            x, w, window_strides=(L["stride"], L["stride"]),
            padding=((PAD, PAD), (PAD, PAD)),
            dimension_numbers=("NCHW", "OIHW", "NCHW"),
        ) + b[None, :, None, None]
        if idx < n - 1:
            x = jnp.where(x >= 0.0, x, NEG_SLOPE * x)
    return x


if __name__ == "__main__":
    key = jax.random.PRNGKey(0)
    k_in, k_par = jax.random.split(key)

    # batch=2, input_nc=4 channels, 32x32 spatial (>=32 so the 5-conv stack
    # with kernel 4 produces a non-empty patch map), ndf=8, n_layers=3.
    batch, input_nc, H, W = 2, 4, 32, 32
    x = jax.random.normal(k_in, (batch, input_nc, H, W), jnp.float32)

    plan = build_plan(input_nc, ndf=8, n_layers=3, H=H, W=W)
    params = init_patchgan_params(k_par, plan)
    packed = pack_params(params, plan)        # one-time bf16 weight repack

    # Default: whole batch in one program (best MXU fill on v5e/v6e).
    fwd = jax.jit(lambda inp, p: patchgan_forward(inp, p, plan))
    out = jax.block_until_ready(fwd(x, packed))

    # Grid-parallel path: one image per program; on v7x the "parallel" grid
    # axis spreads the batch across both TensorCores. Must match.
    fwd2 = jax.jit(lambda inp, p: patchgan_forward(inp, p, plan, batch_block=1))
    out2 = jax.block_until_ready(fwd2(x, packed))

    # References: (a) same bf16-rounded weights as the kernel -> tight check of
    # the kernel logic; (b) original f32 weights -> bf16 weight-storage drift.
    params_q = [(w.astype(jnp.bfloat16).astype(jnp.float32), b) for w, b in params]
    ref_q = jax.block_until_ready(_reference_forward(x, params_q, plan))
    ref_f = jax.block_until_ready(_reference_forward(x, params, plan))

    assert out.shape == ref_q.shape == (batch, 1, 2, 2), out.shape
    assert jnp.allclose(out, out2, rtol=1e-5, atol=1e-5), "grid-split mismatch"
    assert jnp.allclose(out, ref_q, rtol=2e-3, atol=2e-3), "mismatch vs bf16-weight ref"
    assert jnp.allclose(out, ref_f, rtol=1e-2, atol=1e-2), "mismatch vs f32 ref"

    print("KERNEL_OK")
</pallas_src>

<mosaic_0001>
module attributes {stable_mosaic.version = 11 : i64} {
  func.func @kernel(%arg0: i32, %arg1: memref<72x128xf32, #tpu.memory_space<vmem>>, %arg2: memref<4x128x128xbf16, #tpu.memory_space<vmem>>, %arg3: memref<1x128xf32, #tpu.memory_space<vmem>>, %arg4: memref<4x128x128xbf16, #tpu.memory_space<vmem>>, %arg5: memref<1x128xf32, #tpu.memory_space<vmem>>, %arg6: memref<4x128x128xbf16, #tpu.memory_space<vmem>>, %arg7: memref<1x128xf32, #tpu.memory_space<vmem>>, %arg8: memref<4x128x192xbf16, #tpu.memory_space<vmem>>, %arg9: memref<1x192xf32, #tpu.memory_space<vmem>>, %arg10: memref<4x192x2xbf16, #tpu.memory_space<vmem>>, %arg11: memref<1x2xf32, #tpu.memory_space<vmem>>, %arg12: memref<8x2xf32, #tpu.memory_space<vmem>>, %arg13: memref<36x128xf32, #tpu.memory_space<vmem>>, %arg14: memref<20x128xf32, #tpu.memory_space<vmem>>, %arg15: memref<12x128xf32, #tpu.memory_space<vmem>>, %arg16: memref<10x192xf32, #tpu.memory_space<vmem>>) attributes {dimension_semantics = [#tpu.dimension_semantics<parallel>], iteration_bounds = array<i64: 1>, scalar_prefetch = 0 : i64, scratch_operands = 4 : i64, tpu.core_type = #tpu.core_type<tc>, window_params = [{transform_indices = @transform_0, window_bounds = array<i64: 72, 128>}, {pipeline_mode = #tpu.pipeline_mode<synchronous>, transform_indices = @transform_1, window_bounds = array<i64: 4, 128, 128>}, {pipeline_mode = #tpu.pipeline_mode<synchronous>, transform_indices = @transform_2, window_bounds = array<i64: 1, 128>}, {pipeline_mode = #tpu.pipeline_mode<synchronous>, transform_indices = @transform_3, window_bounds = array<i64: 4, 128, 128>}, {pipeline_mode = #tpu.pipeline_mode<synchronous>, transform_indices = @transform_4, window_bounds = array<i64: 1, 128>}, {pipeline_mode = #tpu.pipeline_mode<synchronous>, transform_indices = @transform_5, window_bounds = array<i64: 4, 128, 128>}, {pipeline_mode = #tpu.pipeline_mode<synchronous>, transform_indices = @transform_6, window_bounds = array<i64: 1, 128>}, {pipeline_mode = #tpu.pipeline_mode<synchronous>, transform_indices = @transform_7, window_bounds = array<i64: 4, 128, 192>}, {pipeline_mode = #tpu.pipeline_mode<synchronous>, transform_indices = @transform_8, window_bounds = array<i64: 1, 192>}, {pipeline_mode = #tpu.pipeline_mode<synchronous>, transform_indices = @transform_9, window_bounds = array<i64: 4, 192, 2>}, {pipeline_mode = #tpu.pipeline_mode<synchronous>, transform_indices = @transform_10, window_bounds = array<i64: 1, 2>}, {transform_indices = @transform_11, window_bounds = array<i64: 8, 2>}]} {
    %cst = arith.constant 0.000000e+00 : f32
    %0 = vector.broadcast %cst : f32 to vector<2x128xf32>
    %c0 = arith.constant 0 : index
    %c0_0 = arith.constant 0 : index
    %1 = vector.load %arg13[%c0, %c0_0] : memref<36x128xf32, #tpu.memory_space<vmem>>, vector<2x128xf32>
    tpu.vector_store %arg13[%c0, %c0_0], %0 {strides = array<i32>} : memref<36x128xf32, #tpu.memory_space<vmem>>, vector<2x128xf32>,
    %c34 = arith.constant 34 : index
    %c0_1 = arith.constant 0 : index
    %2 = vector.load %arg13[%c34, %c0_1] : memref<36x128xf32, #tpu.memory_space<vmem>>, vector<2x128xf32>
    tpu.vector_store %arg13[%c34, %c0_1], %0 {strides = array<i32>} : memref<36x128xf32, #tpu.memory_space<vmem>>, vector<2x128xf32>,
    %cst_2 = arith.constant 0.000000e+00 : f32
    %3 = vector.broadcast %cst_2 : f32 to vector<2x128xf32>
    %c0_3 = arith.constant 0 : index
    %c0_4 = arith.constant 0 : index
    %4 = vector.load %arg14[%c0_3, %c0_4] : memref<20x128xf32, #tpu.memory_space<vmem>>, vector<2x128xf32>
    tpu.vector_store %arg14[%c0_3, %c0_4], %3 {strides = array<i32>} : memref<20x128xf32, #tpu.memory_space<vmem>>, vector<2x128xf32>,
    %c18 = arith.constant 18 : index
    %c0_5 = arith.constant 0 : index
    %5 = vector.load %arg14[%c18, %c0_5] : memref<20x128xf32, #tpu.memory_space<vmem>>, vector<2x128xf32>
    tpu.vector_store %arg14[%c18, %c0_5], %3 {strides = array<i32>} : memref<20x128xf32, #tpu.memory_space<vmem>>, vector<2x128xf32>,
    %cst_6 = arith.constant 0.000000e+00 : f32
    %6 = vector.broadcast %cst_6 : f32 to vector<2x128xf32>
    %c0_7 = arith.constant 0 : index
    %c0_8 = arith.constant 0 : index
    %7 = vector.load %arg15[%c0_7, %c0_8] : memref<12x128xf32, #tpu.memory_space<vmem>>, vector<2x128xf32>
    tpu.vector_store %arg15[%c0_7, %c0_8], %6 {strides = array<i32>} : memref<12x128xf32, #tpu.memory_space<vmem>>, vector<2x128xf32>,
    %c10 = arith.constant 10 : index
    %c0_9 = arith.constant 0 : index
    %8 = vector.load %arg15[%c10, %c0_9] : memref<12x128xf32, #tpu.memory_space<vmem>>, vector<2x128xf32>
    tpu.vector_store %arg15[%c10, %c0_9], %6 {strides = array<i32>} : memref<12x128xf32, #tpu.memory_space<vmem>>, vector<2x128xf32>,
    %cst_10 = arith.constant 0.000000e+00 : f32
    %9 = vector.broadcast %cst_10 : f32 to vector<2x192xf32>
    %c0_11 = arith.constant 0 : index
    %c0_12 = arith.constant 0 : index
    %10 = vector.load %arg16[%c0_11, %c0_12] : memref<10x192xf32, #tpu.memory_space<vmem>>, vector<2x192xf32>
    tpu.vector_store %arg16[%c0_11, %c0_12], %9 {strides = array<i32>} : memref<10x192xf32, #tpu.memory_space<vmem>>, vector<2x192xf32>,
    %c8 = arith.constant 8 : index
    %c0_13 = arith.constant 0 : index
    %11 = vector.load %arg16[%c8, %c0_13] : memref<10x192xf32, #tpu.memory_space<vmem>>, vector<2x192xf32>
    tpu.vector_store %arg16[%c8, %c0_13], %9 {strides = array<i32>} : memref<10x192xf32, #tpu.memory_space<vmem>>, vector<2x192xf32>,
    %c0_14 = arith.constant 0 : index
    %c0_15 = arith.constant 0 : index
    %12 = vector.load %arg1[%c0_14, %c0_15] : memref<72x128xf32, #tpu.memory_space<vmem>>, vector<32x128xf32>
    %c0_16 = arith.constant 0 : index
    %c0_17 = arith.constant 0 : index
    %c0_18 = arith.constant 0 : index
    %13 = vector.load %arg2[%c0_16, %c0_17, %c0_18] : memref<4x128x128xbf16, #tpu.memory_space<vmem>>, vector<1x128x128xbf16>
    %14 = vector.shape_cast %13 : vector<1x128x128xbf16> to vector<128x128xbf16>
    %15 = arith.extf %14 : vector<128x128xbf16> to vector<128x128xf32>
    %cst_19 = arith.constant dense<0.000000e+00> : vector<32x128xf32>
    %16 = tpu.matmul %12, %15, %cst_19 {dimension_numbers = #tpu.dot_dimension_numbers<[1], [0], [0], [1], [0, 0, 1, 1], [], []>} : vector<32x128xf32>, vector<128x128xf32>, vector<32x128xf32> -> vector<32x128xf32>
    %c34_20 = arith.constant 34 : index
    %c0_21 = arith.constant 0 : index
    %17 = vector.load %arg1[%c34_20, %c0_21] : memref<72x128xf32, #tpu.memory_space<vmem>>, vector<32x128xf32>
    %c1 = arith.constant 1 : index
    %c0_22 = arith.constant 0 : index
    %c0_23 = arith.constant 0 : index
    %18 = vector.load %arg2[%c1, %c0_22, %c0_23] : memref<4x128x128xbf16, #tpu.memory_space<vmem>>, vector<1x128x128xbf16>
    %19 = vector.shape_cast %18 : vector<1x128x128xbf16> to vector<128x128xbf16>
    %20 = arith.extf %19 : vector<128x128xbf16> to vector<128x128xf32>
    %cst_24 = arith.constant dense<0.000000e+00> : vector<32x128xf32>
    %21 = tpu.matmul %17, %20, %cst_24 {dimension_numbers = #tpu.dot_dimension_numbers<[1], [0], [0], [1], [0, 0, 1, 1], [], []>} : vector<32x128xf32>, vector<128x128xf32>, vector<32x128xf32> -> vector<32x128xf32>
    %22 = arith.addf %16, %21 : vector<32x128xf32>
    %c2 = arith.constant 2 : index
    %c0_25 = arith.constant 0 : index
    %23 = vector.load %arg1[%c2, %c0_25] : memref<72x128xf32, #tpu.memory_space<vmem>>, vector<32x128xf32>
    %c2_26 = arith.constant 2 : index
    %c0_27 = arith.constant 0 : index
    %c0_28 = arith.constant 0 : index
    %24 = vector.load %arg2[%c2_26, %c0_27, %c0_28] : memref<4x128x128xbf16, #tpu.memory_space<vmem>>, vector<1x128x128xbf16>
    %25 = vector.shape_cast %24 : vector<1x128x128xbf16> to vector<128x128xbf16>
    %26 = arith.extf %25 : vector<128x128xbf16> to vector<128x128xf32>
    %cst_29 = arith.constant dense<0.000000e+00> : vector<32x128xf32>
    %27 = tpu.matmul %23, %26, %cst_29 {dimension_numbers = #tpu.dot_dimension_numbers<[1], [0], [0], [1], [0, 0, 1, 1], [], []>} : vector<32x128xf32>, vector<128x128xf32>, vector<32x128xf32> -> vector<32x128xf32>
    %28 = arith.addf %22, %27 : vector<32x128xf32>
    %c36 = arith.constant 36 : index
    %c0_30 = arith.constant 0 : index
    %29 = vector.load %arg1[%c36, %c0_30] : memref<72x128xf32, #tpu.memory_space<vmem>>, vector<32x128xf32>
    %c3 = arith.constant 3 : index
    %c0_31 = arith.constant 0 : index
    %c0_32 = arith.constant 0 : index
    %30 = vector.load %arg2[%c3, %c0_31, %c0_32] : memref<4x128x128xbf16, #tpu.memory_space<vmem>>, vector<1x128x128xbf16>
    %31 = vector.shape_cast %30 : vector<1x128x128xbf16> to vector<128x128xbf16>
    %32 = arith.extf %31 : vector<128x128xbf16> to vector<128x128xf32>
    %cst_33 = arith.constant dense<0.000000e+00> : vector<32x128xf32>
    %33 = tpu.matmul %29, %32, %cst_33 {dimension_numbers = #tpu.dot_dimension_numbers<[1], [0], [0], [1], [0, 0, 1, 1], [], []>} : vector<32x128xf32>, vector<128x128xf32>, vector<32x128xf32> -> vector<32x128xf32>
    %34 = arith.addf %28, %33 : vector<32x128xf32>
    %c0_34 = arith.constant 0 : index
    %c0_35 = arith.constant 0 : index
    %35 = vector.load %arg3[%c0_34, %c0_35] : memref<1x128xf32, #tpu.memory_space<vmem>>, vector<1x128xf32>
    %36 = vector.broadcast %35 : vector<1x128xf32> to vector<32x128xf32>
    %37 = arith.addf %34, %36 : vector<32x128xf32>
    %cst_36 = arith.constant 0.000000e+00 : f32
    %38 = vector.broadcast %cst_36 : f32 to vector<32x128xf32>
    %39 = arith.cmpf oge, %37, %38 : vector<32x128xf32>
    %cst_37 = arith.constant 2.000000e-01 : f32
    %40 = vector.broadcast %cst_37 : f32 to vector<32x128xf32>
    %41 = arith.mulf %40, %37 : vector<32x128xf32>
    %42 = arith.select %39, %37, %41 : vector<32x128xi1>, vector<32x128xf32>
    %43 = vector.shape_cast %42 : vector<32x128xf32> to vector<8x2x2x128xf32>
    %44 = vector.extract_strided_slice %43 {offsets = [0, 0, 0, 0], sizes = [8, 1, 2, 128], strides = [1, 1, 1, 1]} : vector<8x2x2x128xf32> to vector<8x1x2x128xf32>
    %45 = vector.shape_cast %44 : vector<8x1x2x128xf32> to vector<8x2x128xf32>
    %46 = vector.shape_cast %45 : vector<8x2x128xf32> to vector<16x128xf32>
    %47 = vector.extract_strided_slice %43 {offsets = [0, 1, 0, 0], sizes = [8, 1, 2, 128], strides = [1, 1, 1, 1]} : vector<8x2x2x128xf32> to vector<8x1x2x128xf32>
    %48 = vector.shape_cast %47 : vector<8x1x2x128xf32> to vector<8x2x128xf32>
    %49 = vector.shape_cast %48 : vector<8x2x128xf32> to vector<16x128xf32>
    %c18_38 = arith.constant 18 : index
    %c0_39 = arith.constant 0 : index
    %50 = vector.load %arg13[%c18_38, %c0_39] : memref<36x128xf32, #tpu.memory_space<vmem>>, vector<16x128xf32>
    tpu.vector_store %arg13[%c18_38, %c0_39], %46 {strides = array<i32>} : memref<36x128xf32, #tpu.memory_space<vmem>>, vector<16x128xf32>,
    %c2_40 = arith.constant 2 : index
    %c0_41 = arith.constant 0 : index
    %51 = vector.load %arg13[%c2_40, %c0_41] : memref<36x128xf32, #tpu.memory_space<vmem>>, vector<16x128xf32>
    tpu.vector_store %arg13[%c2_40, %c0_41], %49 {strides = array<i32>} : memref<36x128xf32, #tpu.memory_space<vmem>>, vector<16x128xf32>,
    %c0_42 = arith.constant 0 : index
    %c0_43 = arith.constant 0 : index
    %52 = vector.load %arg13[%c0_42, %c0_43] : memref<36x128xf32, #tpu.memory_space<vmem>>, vector<16x128xf32>
    %c0_44 = arith.constant 0 : index
    %c0_45 = arith.constant 0 : index
    %c0_46 = arith.constant 0 : index
    %53 = vector.load %arg4[%c0_44, %c0_45, %c0_46] : memref<4x128x128xbf16, #tpu.memory_space<vmem>>, vector<1x128x128xbf16>
    %54 = vector.shape_cast %53 : vector<1x128x128xbf16> to vector<128x128xbf16>
    %55 = arith.extf %54 : vector<128x128xbf16> to vector<128x128xf32>
    %cst_47 = arith.constant dense<0.000000e+00> : vector<16x128xf32>
    %56 = tpu.matmul %52, %55, %cst_47 {dimension_numbers = #tpu.dot_dimension_numbers<[1], [0], [0], [1], [0, 0, 1, 1], [], []>} : vector<16x128xf32>, vector<128x128xf32>, vector<16x128xf32> -> vector<16x128xf32>
    %c18_48 = arith.constant 18 : index
    %c0_49 = arith.constant 0 : index
    %57 = vector.load %arg13[%c18_48, %c0_49] : memref<36x128xf32, #tpu.memory_space<vmem>>, vector<16x128xf32>
    %c1_50 = arith.constant 1 : index
    %c0_51 = arith.constant 0 : index
    %c0_52 = arith.constant 0 : index
    %58 = vector.load %arg4[%c1_50, %c0_51, %c0_52] : memref<4x128x128xbf16, #tpu.memory_space<vmem>>, vector<1x128x128xbf16>
    %59 = vector.shape_cast %58 : vector<1x128x128xbf16> to vector<128x128xbf16>
    %60 = arith.extf %59 : vector<128x128xbf16> to vector<128x128xf32>
    %cst_53 = arith.constant dense<0.000000e+00> : vector<16x128xf32>
    %61 = tpu.matmul %57, %60, %cst_53 {dimension_numbers = #tpu.dot_dimension_numbers<[1], [0], [0], [1], [0, 0, 1, 1], [], []>} : vector<16x128xf32>, vector<128x128xf32>, vector<16x128xf32> -> vector<16x128xf32>
    %62 = arith.addf %56, %61 : vector<16x128xf32>
    %c2_54 = arith.constant 2 : index
    %c0_55 = arith.constant 0 : index
    %63 = vector.load %arg13[%c2_54, %c0_55] : memref<36x128xf32, #tpu.memory_space<vmem>>, vector<16x128xf32>
    %c2_56 = arith.constant 2 : index
    %c0_57 = arith.constant 0 : index
    %c0_58 = arith.constant 0 : index
    %64 = vector.load %arg4[%c2_56, %c0_57, %c0_58] : memref<4x128x128xbf16, #tpu.memory_space<vmem>>, vector<1x128x128xbf16>
    %65 = vector.shape_cast %64 : vector<1x128x128xbf16> to vector<128x128xbf16>
    %66 = arith.extf %65 : vector<128x128xbf16> to vector<128x128xf32>
    %cst_59 = arith.constant dense<0.000000e+00> : vector<16x128xf32>
    %67 = tpu.matmul %63, %66, %cst_59 {dimension_numbers = #tpu.dot_dimension_numbers<[1], [0], [0], [1], [0, 0, 1, 1], [], []>} : vector<16x128xf32>, vector<128x128xf32>, vector<16x128xf32> -> vector<16x128xf32>
    %68 = arith.addf %62, %67 : vector<16x128xf32>
    %c20 = arith.constant 20 : index
    %c0_60 = arith.constant 0 : index
    %69 = vector.load %arg13[%c20, %c0_60] : memref<36x128xf32, #tpu.memory_space<vmem>>, vector<16x128xf32>
    %c3_61 = arith.constant 3 : index
    %c0_62 = arith.constant 0 : index
    %c0_63 = arith.constant 0 : index
    %70 = vector.load %arg4[%c3_61, %c0_62, %c0_63] : memref<4x128x128xbf16, #tpu.memory_space<vmem>>, vector<1x128x128xbf16>
    %71 = vector.shape_cast %70 : vector<1x128x128xbf16> to vector<128x128xbf16>
    %72 = arith.extf %71 : vector<128x128xbf16> to vector<128x128xf32>
    %cst_64 = arith.constant dense<0.000000e+00> : vector<16x128xf32>
    %73 = tpu.matmul %69, %72, %cst_64 {dimension_numbers = #tpu.dot_dimension_numbers<[1], [0], [0], [1], [0, 0, 1, 1], [], []>} : vector<16x128xf32>, vector<128x128xf32>, vector<16x128xf32> -> vector<16x128xf32>
    %74 = arith.addf %68, %73 : vector<16x128xf32>
    %c0_65 = arith.constant 0 : index
    %c0_66 = arith.constant 0 : index
    %75 = vector.load %arg5[%c0_65, %c0_66] : memref<1x128xf32, #tpu.memory_space<vmem>>, vector<1x128xf32>
    %76 = vector.broadcast %75 : vector<1x128xf32> to vector<16x128xf32>
    %77 = arith.addf %74, %76 : vector<16x128xf32>
    %cst_67 = arith.constant 0.000000e+00 : f32
    %78 = vector.broadcast %cst_67 : f32 to vector<16x128xf32>
    %79 = arith.cmpf oge, %77, %78 : vector<16x128xf32>
    %cst_68 = arith.constant 2.000000e-01 : f32
    %80 = vector.broadcast %cst_68 : f32 to vector<16x128xf32>
    %81 = arith.mulf %80, %77 : vector<16x128xf32>
    %82 = arith.select %79, %77, %81 : vector<16x128xi1>, vector<16x128xf32>
    %83 = vector.shape_cast %82 : vector<16x128xf32> to vector<4x2x2x128xf32>
    %84 = vector.extract_strided_slice %83 {offsets = [0, 0, 0, 0], sizes = [4, 1, 2, 128], strides = [1, 1, 1, 1]} : vector<4x2x2x128xf32> to vector<4x1x2x128xf32>
    %85 = vector.shape_cast %84 : vector<4x1x2x128xf32> to vector<4x2x128xf32>
    %86 = vector.shape_cast %85 : vector<4x2x128xf32> to vector<8x128xf32>
    %87 = vector.extract_strided_slice %83 {offsets = [0, 1, 0, 0], sizes = [4, 1, 2, 128], strides = [1, 1, 1, 1]} : vector<4x2x2x128xf32> to vector<4x1x2x128xf32>
    %88 = vector.shape_cast %87 : vector<4x1x2x128xf32> to vector<4x2x128xf32>
    %89 = vector.shape_cast %88 : vector<4x2x128xf32> to vector<8x128xf32>
    %c10_69 = arith.constant 10 : index
    %c0_70 = arith.constant 0 : index
    %90 = vector.load %arg14[%c10_69, %c0_70] : memref<20x128xf32, #tpu.memory_space<vmem>>, vector<8x128xf32>
    tpu.vector_store %arg14[%c10_69, %c0_70], %86 {strides = array<i32>} : memref<20x128xf32, #tpu.memory_space<vmem>>, vector<8x128xf32>,
    %c2_71 = arith.constant 2 : index
    %c0_72 = arith.constant 0 : index
    %91 = vector.load %arg14[%c2_71, %c0_72] : memref<20x128xf32, #tpu.memory_space<vmem>>, vector<8x128xf32>
    tpu.vector_store %arg14[%c2_71, %c0_72], %89 {strides = array<i32>} : memref<20x128xf32, #tpu.memory_space<vmem>>, vector<8x128xf32>,
    %c0_73 = arith.constant 0 : index
    %c0_74 = arith.constant 0 : index
    %92 = vector.load %arg14[%c0_73, %c0_74] : memref<20x128xf32, #tpu.memory_space<vmem>>, vector<8x128xf32>
    %c0_75 = arith.constant 0 : index
    %c0_76 = arith.constant 0 : index
    %c0_77 = arith.constant 0 : index
    %93 = vector.load %arg6[%c0_75, %c0_76, %c0_77] : memref<4x128x128xbf16, #tpu.memory_space<vmem>>, vector<1x128x128xbf16>
    %94 = vector.shape_cast %93 : vector<1x128x128xbf16> to vector<128x128xbf16>
    %95 = arith.extf %94 : vector<128x128xbf16> to vector<128x128xf32>
    %cst_78 = arith.constant dense<0.000000e+00> : vector<8x128xf32>
    %96 = tpu.matmul %92, %95, %cst_78 {dimension_numbers = #tpu.dot_dimension_numbers<[1], [0], [0], [1], [0, 0, 1, 1], [], []>} : vector<8x128xf32>, vector<128x128xf32>, vector<8x128xf32> -> vector<8x128xf32>
    %c10_79 = arith.constant 10 : index
    %c0_80 = arith.constant 0 : index
    %97 = vector.load %arg14[%c10_79, %c0_80] : memref<20x128xf32, #tpu.memory_space<vmem>>, vector<8x128xf32>
    %c1_81 = arith.constant 1 : index
    %c0_82 = arith.constant 0 : index
    %c0_83 = arith.constant 0 : index
    %98 = vector.load %arg6[%c1_81, %c0_82, %c0_83] : memref<4x128x128xbf16, #tpu.memory_space<vmem>>, vector<1x128x128xbf16>
    %99 = vector.shape_cast %98 : vector<1x128x128xbf16> to vector<128x128xbf16>
    %100 = arith.extf %99 : vector<128x128xbf16> to vector<128x128xf32>
    %cst_84 = arith.constant dense<0.000000e+00> : vector<8x128xf32>
    %101 = tpu.matmul %97, %100, %cst_84 {dimension_numbers = #tpu.dot_dimension_numbers<[1], [0], [0], [1], [0, 0, 1, 1], [], []>} : vector<8x128xf32>, vector<128x128xf32>, vector<8x128xf32> -> vector<8x128xf32>
    %102 = arith.addf %96, %101 : vector<8x128xf32>
    %c2_85 = arith.constant 2 : index
    %c0_86 = arith.constant 0 : index
    %103 = vector.load %arg14[%c2_85, %c0_86] : memref<20x128xf32, #tpu.memory_space<vmem>>, vector<8x128xf32>
    %c2_87 = arith.constant 2 : index
    %c0_88 = arith.constant 0 : index
    %c0_89 = arith.constant 0 : index
    %104 = vector.load %arg6[%c2_87, %c0_88, %c0_89] : memref<4x128x128xbf16, #tpu.memory_space<vmem>>, vector<1x128x128xbf16>
    %105 = vector.shape_cast %104 : vector<1x128x128xbf16> to vector<128x128xbf16>
    %106 = arith.extf %105 : vector<128x128xbf16> to vector<128x128xf32>
    %cst_90 = arith.constant dense<0.000000e+00> : vector<8x128xf32>
    %107 = tpu.matmul %103, %106, %cst_90 {dimension_numbers = #tpu.dot_dimension_numbers<[1], [0], [0], [1], [0, 0, 1, 1], [], []>} : vector<8x128xf32>, vector<128x128xf32>, vector<8x128xf32> -> vector<8x128xf32>
    %108 = arith.addf %102, %107 : vector<8x128xf32>
    %c12 = arith.constant 12 : index
    %c0_91 = arith.constant 0 : index
    %109 = vector.load %arg14[%c12, %c0_91] : memref<20x128xf32, #tpu.memory_space<vmem>>, vector<8x128xf32>
    %c3_92 = arith.constant 3 : index
    %c0_93 = arith.constant 0 : index
    %c0_94 = arith.constant 0 : index
    %110 = vector.load %arg6[%c3_92, %c0_93, %c0_94] : memref<4x128x128xbf16, #tpu.memory_space<vmem>>, vector<1x128x128xbf16>
    %111 = vector.shape_cast %110 : vector<1x128x128xbf16> to vector<128x128xbf16>
    %112 = arith.extf %111 : vector<128x128xbf16> to vector<128x128xf32>
    %cst_95 = arith.constant dense<0.000000e+00> : vector<8x128xf32>
    %113 = tpu.matmul %109, %112, %cst_95 {dimension_numbers = #tpu.dot_dimension_numbers<[1], [0], [0], [1], [0, 0, 1, 1], [], []>} : vector<8x128xf32>, vector<128x128xf32>, vector<8x128xf32> -> vector<8x128xf32>
    %114 = arith.addf %108, %113 : vector<8x128xf32>
    %c0_96 = arith.constant 0 : index
    %c0_97 = arith.constant 0 : index
    %115 = vector.load %arg7[%c0_96, %c0_97] : memref<1x128xf32, #tpu.memory_space<vmem>>, vector<1x128xf32>
    %116 = vector.broadcast %115 : vector<1x128xf32> to vector<8x128xf32>
    %117 = arith.addf %114, %116 : vector<8x128xf32>
    %cst_98 = arith.constant 0.000000e+00 : f32
    %118 = vector.broadcast %cst_98 : f32 to vector<8x128xf32>
    %119 = arith.cmpf oge, %117, %118 : vector<8x128xf32>
    %cst_99 = arith.constant 2.000000e-01 : f32
    %120 = vector.broadcast %cst_99 : f32 to vector<8x128xf32>
    %121 = arith.mulf %120, %117 : vector<8x128xf32>
    %122 = arith.select %119, %117, %121 : vector<8x128xi1>, vector<8x128xf32>
    %c2_100 = arith.constant 2 : index
    %c0_101 = arith.constant 0 : index
    %123 = vector.load %arg15[%c2_100, %c0_101] : memref<12x128xf32, #tpu.memory_space<vmem>>, vector<8x128xf32>
    tpu.vector_store %arg15[%c2_100, %c0_101], %122 {strides = array<i32>} : memref<12x128xf32, #tpu.memory_space<vmem>>, vector<8x128xf32>,
    %c0_102 = arith.constant 0 : index
    %c0_103 = arith.constant 0 : index
    %124 = vector.load %arg15[%c0_102, %c0_103] : memref<12x128xf32, #tpu.memory_space<vmem>>, vector<6x128xf32>
    %c0_104 = arith.constant 0 : index
    %c0_105 = arith.constant 0 : index
    %c0_106 = arith.constant 0 : index
    %125 = vector.load %arg8[%c0_104, %c0_105, %c0_106] : memref<4x128x192xbf16, #tpu.memory_space<vmem>>, vector<1x128x192xbf16>
    %126 = vector.shape_cast %125 : vector<1x128x192xbf16> to vector<128x192xbf16>
    %127 = arith.extf %126 : vector<128x192xbf16> to vector<128x192xf32>
    %cst_107 = arith.constant dense<0.000000e+00> : vector<6x192xf32>
    %128 = tpu.matmul %124, %127, %cst_107 {dimension_numbers = #tpu.dot_dimension_numbers<[1], [0], [0], [1], [0, 0, 1, 1], [], []>} : vector<6x128xf32>, vector<128x192xf32>, vector<6x192xf32> -> vector<6x192xf32>
    %c2_108 = arith.constant 2 : index
    %c0_109 = arith.constant 0 : index
    %129 = vector.load %arg15[%c2_108, %c0_109] : memref<12x128xf32, #tpu.memory_space<vmem>>, vector<6x128xf32>
    %c1_110 = arith.constant 1 : index
    %c0_111 = arith.constant 0 : index
    %c0_112 = arith.constant 0 : index
    %130 = vector.load %arg8[%c1_110, %c0_111, %c0_112] : memref<4x128x192xbf16, #tpu.memory_space<vmem>>, vector<1x128x192xbf16>
    %131 = vector.shape_cast %130 : vector<1x128x192xbf16> to vector<128x192xbf16>
    %132 = arith.extf %131 : vector<128x192xbf16> to vector<128x192xf32>
    %cst_113 = arith.constant dense<0.000000e+00> : vector<6x192xf32>
    %133 = tpu.matmul %129, %132, %cst_113 {dimension_numbers = #tpu.dot_dimension_numbers<[1], [0], [0], [1], [0, 0, 1, 1], [], []>} : vector<6x128xf32>, vector<128x192xf32>, vector<6x192xf32> -> vector<6x192xf32>
    %134 = arith.addf %128, %133 : vector<6x192xf32>
    %c4 = arith.constant 4 : index
    %c0_114 = arith.constant 0 : index
    %135 = vector.load %arg15[%c4, %c0_114] : memref<12x128xf32, #tpu.memory_space<vmem>>, vector<6x128xf32>
    %c2_115 = arith.constant 2 : index
    %c0_116 = arith.constant 0 : index
    %c0_117 = arith.constant 0 : index
    %136 = vector.load %arg8[%c2_115, %c0_116, %c0_117] : memref<4x128x192xbf16, #tpu.memory_space<vmem>>, vector<1x128x192xbf16>
    %137 = vector.shape_cast %136 : vector<1x128x192xbf16> to vector<128x192xbf16>
    %138 = arith.extf %137 : vector<128x192xbf16> to vector<128x192xf32>
    %cst_118 = arith.constant dense<0.000000e+00> : vector<6x192xf32>
    %139 = tpu.matmul %135, %138, %cst_118 {dimension_numbers = #tpu.dot_dimension_numbers<[1], [0], [0], [1], [0, 0, 1, 1], [], []>} : vector<6x128xf32>, vector<128x192xf32>, vector<6x192xf32> -> vector<6x192xf32>
    %140 = arith.addf %134, %139 : vector<6x192xf32>
    %c6 = arith.constant 6 : index
    %c0_119 = arith.constant 0 : index
    %141 = vector.load %arg15[%c6, %c0_119] : memref<12x128xf32, #tpu.memory_space<vmem>>, vector<6x128xf32>
    %c3_120 = arith.constant 3 : index
    %c0_121 = arith.constant 0 : index
    %c0_122 = arith.constant 0 : index
    %142 = vector.load %arg8[%c3_120, %c0_121, %c0_122] : memref<4x128x192xbf16, #tpu.memory_space<vmem>>, vector<1x128x192xbf16>
    %143 = vector.shape_cast %142 : vector<1x128x192xbf16> to vector<128x192xbf16>
    %144 = arith.extf %143 : vector<128x192xbf16> to vector<128x192xf32>
    %cst_123 = arith.constant dense<0.000000e+00> : vector<6x192xf32>
    %145 = tpu.matmul %141, %144, %cst_123 {dimension_numbers = #tpu.dot_dimension_numbers<[1], [0], [0], [1], [0, 0, 1, 1], [], []>} : vector<6x128xf32>, vector<128x192xf32>, vector<6x192xf32> -> vector<6x192xf32>
    %146 = arith.addf %140, %145 : vector<6x192xf32>
    %c0_124 = arith.constant 0 : index
    %c0_125 = arith.constant 0 : index
    %147 = vector.load %arg9[%c0_124, %c0_125] : memref<1x192xf32, #tpu.memory_space<vmem>>, vector<1x192xf32>
    %148 = vector.broadcast %147 : vector<1x192xf32> to vector<6x192xf32>
    %149 = arith.addf %146, %148 : vector<6x192xf32>
    %cst_126 = arith.constant 0.000000e+00 : f32
    %150 = vector.broadcast %cst_126 : f32 to vector<6x192xf32>
    %151 = arith.cmpf oge, %149, %150 : vector<6x192xf32>
    %cst_127 = arith.constant 2.000000e-01 : f32
    %152 = vector.broadcast %cst_127 : f32 to vector<6x192xf32>
    %153 = arith.mulf %152, %149 : vector<6x192xf32>
    %154 = arith.select %151, %149, %153 : vector<6x192xi1>, vector<6x192xf32>
    %c2_128 = arith.constant 2 : index
    %c0_129 = arith.constant 0 : index
    %155 = vector.load %arg16[%c2_128, %c0_129] : memref<10x192xf32, #tpu.memory_space<vmem>>, vector<6x192xf32>
    tpu.vector_store %arg16[%c2_128, %c0_129], %154 {strides = array<i32>} : memref<10x192xf32, #tpu.memory_space<vmem>>, vector<6x192xf32>,
    %c0_130 = arith.constant 0 : index
    %c0_131 = arith.constant 0 : index
    %156 = vector.load %arg16[%c0_130, %c0_131] : memref<10x192xf32, #tpu.memory_space<vmem>>, vector<4x192xf32>
    %c0_132 = arith.constant 0 : index
    %c0_133 = arith.constant 0 : index
    %c0_134 = arith.constant 0 : index
    %157 = vector.load %arg10[%c0_132, %c0_133, %c0_134] : memref<4x192x2xbf16, #tpu.memory_space<vmem>>, vector<1x192x2xbf16>
    %158 = vector.shape_cast %157 : vector<1x192x2xbf16> to vector<192x2xbf16>
    %159 = arith.extf %158 : vector<192x2xbf16> to vector<192x2xf32>
    %cst_135 = arith.constant dense<0.000000e+00> : vector<4x2xf32>
    %160 = tpu.matmul %156, %159, %cst_135 {dimension_numbers = #tpu.dot_dimension_numbers<[1], [0], [0], [1], [0, 0, 1, 1], [], []>} : vector<4x192xf32>, vector<192x2xf32>, vector<4x2xf32> -> vector<4x2xf32>
    %c2_136 = arith.constant 2 : index
    %c0_137 = arith.constant 0 : index
    %161 = vector.load %arg16[%c2_136, %c0_137] : memref<10x192xf32, #tpu.memory_space<vmem>>, vector<4x192xf32>
    %c1_138 = arith.constant 1 : index
    %c0_139 = arith.constant 0 : index
    %c0_140 = arith.constant 0 : index
    %162 = vector.load %arg10[%c1_138, %c0_139, %c0_140] : memref<4x192x2xbf16, #tpu.memory_space<vmem>>, vector<1x192x2xbf16>
    %163 = vector.shape_cast %162 : vector<1x192x2xbf16> to vector<192x2xbf16>
    %164 = arith.extf %163 : vector<192x2xbf16> to vector<192x2xf32>
    %cst_141 = arith.constant dense<0.000000e+00> : vector<4x2xf32>
    %165 = tpu.matmul %161, %164, %cst_141 {dimension_numbers = #tpu.dot_dimension_numbers<[1], [0], [0], [1], [0, 0, 1, 1], [], []>} : vector<4x192xf32>, vector<192x2xf32>, vector<4x2xf32> -> vector<4x2xf32>
    %166 = arith.addf %160, %165 : vector<4x2xf32>
    %c4_142 = arith.constant 4 : index
    %c0_143 = arith.constant 0 : index
    %167 = vector.load %arg16[%c4_142, %c0_143] : memref<10x192xf32, #tpu.memory_space<vmem>>, vector<4x192xf32>
    %c2_144 = arith.constant 2 : index
    %c0_145 = arith.constant 0 : index
    %c0_146 = arith.constant 0 : index
    %168 = vector.load %arg10[%c2_144, %c0_145, %c0_146] : memref<4x192x2xbf16, #tpu.memory_space<vmem>>, vector<1x192x2xbf16>
    %169 = vector.shape_cast %168 : vector<1x192x2xbf16> to vector<192x2xbf16>
    %170 = arith.extf %169 : vector<192x2xbf16> to vector<192x2xf32>
    %cst_147 = arith.constant dense<0.000000e+00> : vector<4x2xf32>
    %171 = tpu.matmul %167, %170, %cst_147 {dimension_numbers = #tpu.dot_dimension_numbers<[1], [0], [0], [1], [0, 0, 1, 1], [], []>} : vector<4x192xf32>, vector<192x2xf32>, vector<4x2xf32> -> vector<4x2xf32>
    %172 = arith.addf %166, %171 : vector<4x2xf32>
    %c6_148 = arith.constant 6 : index
    %c0_149 = arith.constant 0 : index
    %173 = vector.load %arg16[%c6_148, %c0_149] : memref<10x192xf32, #tpu.memory_space<vmem>>, vector<4x192xf32>
    %c3_150 = arith.constant 3 : index
    %c0_151 = arith.constant 0 : index
    %c0_152 = arith.constant 0 : index
    %174 = vector.load %arg10[%c3_150, %c0_151, %c0_152] : memref<4x192x2xbf16, #tpu.memory_space<vmem>>, vector<1x192x2xbf16>
    %175 = vector.shape_cast %174 : vector<1x192x2xbf16> to vector<192x2xbf16>
    %176 = arith.extf %175 : vector<192x2xbf16> to vector<192x2xf32>
    %cst_153 = arith.constant dense<0.000000e+00> : vector<4x2xf32>
    %177 = tpu.matmul %173, %176, %cst_153 {dimension_numbers = #tpu.dot_dimension_numbers<[1], [0], [0], [1], [0, 0, 1, 1], [], []>} : vector<4x192xf32>, vector<192x2xf32>, vector<4x2xf32> -> vector<4x2xf32>
    %178 = arith.addf %172, %177 : vector<4x2xf32>
    %c0_154 = arith.constant 0 : index
    %c0_155 = arith.constant 0 : index
    %179 = vector.load %arg11[%c0_154, %c0_155] : memref<1x2xf32, #tpu.memory_space<vmem>>, vector<1x2xf32>
    %180 = vector.broadcast %179 : vector<1x2xf32> to vector<4x2xf32>
    %181 = arith.addf %178, %180 : vector<4x2xf32>
    %c0_156 = arith.constant 0 : index
    %c0_157 = arith.constant 0 : index
    %182 = vector.load %arg12[%c0_156, %c0_157] : memref<8x2xf32, #tpu.memory_space<vmem>>, vector<4x2xf32>
    tpu.vector_store %arg12[%c0_156, %c0_157], %181 {strides = array<i32>} : memref<8x2xf32, #tpu.memory_space<vmem>>, vector<4x2xf32>,
    %cst_158 = arith.constant 0.000000e+00 : f32
    %183 = vector.broadcast %cst_158 : f32 to vector<4x2xf32>
    %c4_159 = arith.constant 4 : index
    %c0_160 = arith.constant 0 : index
    %184 = vector.load %arg12[%c4_159, %c0_160] : memref<8x2xf32, #tpu.memory_space<vmem>>, vector<4x2xf32>
    tpu.vector_store %arg12[%c4_159, %c0_160], %183 {strides = array<i32>} : memref<8x2xf32, #tpu.memory_space<vmem>>, vector<4x2xf32>,
    return
  }
  func.func @transform_0(%arg0: i32) -> (i32, i32) {
    %c0_i32 = arith.constant 0 : i32
    %c0_i32_0 = arith.constant 0 : i32
    return %arg0, %c0_i32 : i32, i32
  }
  func.func @transform_1(%arg0: i32) -> (i32, i32, i32) {
    %c0_i32 = arith.constant 0 : i32
    %c0_i32_0 = arith.constant 0 : i32
    %c0_i32_1 = arith.constant 0 : i32
    %c0_i32_2 = arith.constant 0 : i32
    return %c0_i32, %c0_i32_0, %c0_i32_1 : i32, i32, i32
  }
  func.func @transform_2(%arg0: i32) -> (i32, i32) {
    %c0_i32 = arith.constant 0 : i32
    %c0_i32_0 = arith.constant 0 : i32
    %c0_i32_1 = arith.constant 0 : i32
    return %c0_i32, %c0_i32_0 : i32, i32
  }
  func.func @transform_3(%arg0: i32) -> (i32, i32, i32) {
    %c0_i32 = arith.constant 0 : i32
    %c0_i32_0 = arith.constant 0 : i32
    %c0_i32_1 = arith.constant 0 : i32
    %c0_i32_2 = arith.constant 0 : i32
    return %c0_i32, %c0_i32_0, %c0_i32_1 : i32, i32, i32
  }
  func.func @transform_4(%arg0: i32) -> (i32, i32) {
    %c0_i32 = arith.constant 0 : i32
    %c0_i32_0 = arith.constant 0 : i32
    %c0_i32_1 = arith.constant 0 : i32
    return %c0_i32, %c0_i32_0 : i32, i32
  }
  func.func @transform_5(%arg0: i32) -> (i32, i32, i32) {
    %c0_i32 = arith.constant 0 : i32
    %c0_i32_0 = arith.constant 0 : i32
    %c0_i32_1 = arith.constant 0 : i32
    %c0_i32_2 = arith.constant 0 : i32
    return %c0_i32, %c0_i32_0, %c0_i32_1 : i32, i32, i32
  }
  func.func @transform_6(%arg0: i32) -> (i32, i32) {
    %c0_i32 = arith.constant 0 : i32
    %c0_i32_0 = arith.constant 0 : i32
    %c0_i32_1 = arith.constant 0 : i32
    return %c0_i32, %c0_i32_0 : i32, i32
  }
  func.func @transform_7(%arg0: i32) -> (i32, i32, i32) {
    %c0_i32 = arith.constant 0 : i32
    %c0_i32_0 = arith.constant 0 : i32
    %c0_i32_1 = arith.constant 0 : i32
    %c0_i32_2 = arith.constant 0 : i32
    return %c0_i32, %c0_i32_0, %c0_i32_1 : i32, i32, i32
  }
  func.func @transform_8(%arg0: i32) -> (i32, i32) {
    %c0_i32 = arith.constant 0 : i32
    %c0_i32_0 = arith.constant 0 : i32
    %c0_i32_1 = arith.constant 0 : i32
    return %c0_i32, %c0_i32_0 : i32, i32
  }
  func.func @transform_9(%arg0: i32) -> (i32, i32, i32) {
    %c0_i32 = arith.constant 0 : i32
    %c0_i32_0 = arith.constant 0 : i32
    %c0_i32_1 = arith.constant 0 : i32
    %c0_i32_2 = arith.constant 0 : i32
    return %c0_i32, %c0_i32_0, %c0_i32_1 : i32, i32, i32
  }
  func.func @transform_10(%arg0: i32) -> (i32, i32) {
    %c0_i32 = arith.constant 0 : i32
    %c0_i32_0 = arith.constant 0 : i32
    %c0_i32_1 = arith.constant 0 : i32
    return %c0_i32, %c0_i32_0 : i32, i32
  }
  func.func @transform_11(%arg0: i32) -> (i32, i32) {
    %c0_i32 = arith.constant 0 : i32
    %c0_i32_0 = arith.constant 0 : i32
    return %arg0, %c0_i32 : i32, i32
  }
}

</mosaic_0001>

<llo_original>
// kernel: _lambda_.1
$region0: #{_lambda_.1}
  #allocation0 [shape = 'u32[]', space=smem, size = 0x4, offset = 0x4, fixed_abs, tag = 'smem constant byte address 0x4 - core index']
  #allocation1 [shape = 'u32[144,128]{1,0:T(1,128)}', space=vmem, size = 0x12000, scoped, tag = 'internal scratch']
  #allocation2 [shape = 'f32[36,128]{1,0:T(8,128)}', space=vmem, size = 0x5000, scoped, tag = 'scratch operand']
  #allocation3 [shape = 'f32[20,128]{1,0:T(8,128)}', space=vmem, size = 0x3000, scoped, tag = 'scratch operand']
  #allocation4 [shape = 'f32[12,128]{1,0:T(8,128)}', space=vmem, size = 0x2000, scoped, tag = 'scratch operand']
  #allocation5 [shape = 'f32[10,192]{1,0:T(8,128)}', space=vmem, size = 0x4000, scoped, tag = 'scratch operand']
  %s0 = inlined_call_operand.vmem [shape: f32[72,128], index: 0, kind: input, shape index: {}]
  %s1 = inlined_call_operand.vmem [shape: bf16[4,128,128], index: 1, kind: input, shape index: {}]
  %s2 = inlined_call_operand.vmem [shape: f32[1,128], index: 2, kind: input, shape index: {}]
  %s3 = inlined_call_operand.vmem [shape: bf16[4,128,128], index: 3, kind: input, shape index: {}]
  %s4 = inlined_call_operand.vmem [shape: f32[1,128], index: 4, kind: input, shape index: {}]
  %s5 = inlined_call_operand.vmem [shape: bf16[4,128,128], index: 5, kind: input, shape index: {}]
  %s6 = inlined_call_operand.vmem [shape: f32[1,128], index: 6, kind: input, shape index: {}]
  %s7 = inlined_call_operand.vmem [shape: bf16[4,128,192], index: 7, kind: input, shape index: {}]
  %s8 = inlined_call_operand.vmem [shape: f32[1,192], index: 8, kind: input, shape index: {}]
  %s9 = inlined_call_operand.vmem [shape: bf16[4,192,2], index: 9, kind: input, shape index: {}]
  %s10 = inlined_call_operand.vmem [shape: f32[1,2], index: 10, kind: input, shape index: {}]
  %s11 = inlined_call_operand.vmem [shape: f32[8,2], index: 11, kind: output, shape index: {}]
  %s12 = sld [smem:[#allocation0]]
  $region54: #{_lambda_.1} parent=0
    _
  %s14 = ssub.s32 1, %s12
  %s15 = scalar_select 0, %s14, %s12
  // Predicated region
  $region2: #{_lambda_.1} parent=0 // pred_check
    _
  $region3: #{_lambda_.1} parent=0 // pred_check_branch
    %17 = sbr.rel (0) target = $region5
  $region4: #{_lambda_.1} parent=0 // pred_region
    _
  $region5: #{_lambda_.1} parent=0 // pred_fallthru
    _
  // Predicated region
  $region6: #{_lambda_.1} parent=0 // pred_check
    _
  $region7: #{_lambda_.1} parent=0 // pred_check_branch
    %19 = sbr.rel (0) target = $region9
  $region8: #{_lambda_.1} parent=0 // pred_region
    _
  $region9: #{_lambda_.1} parent=0 // pred_fallthru
    _
  // Predicated region
  $region10: #{_lambda_.1} parent=0 // pred_check
    _
  $region11: #{_lambda_.1} parent=0 // pred_check_branch
    %21 = sbr.rel (0) target = $region13
  $region12: #{_lambda_.1} parent=0 // pred_region
    _
  $region13: #{_lambda_.1} parent=0 // pred_fallthru
    _
  // Predicated region
  $region14: #{_lambda_.1} parent=0 // pred_check
    _
  $region15: #{_lambda_.1} parent=0 // pred_check_branch
    %23 = sbr.rel (0) target = $region17
  $region16: #{_lambda_.1} parent=0 // pred_region
    _
  $region17: #{_lambda_.1} parent=0 // pred_fallthru
    _
  // Predicated region
  $region18: #{_lambda_.1} parent=0 // pred_check
    _
  $region19: #{_lambda_.1} parent=0 // pred_check_branch
    %25 = sbr.rel (0) target = $region21
  $region20: #{_lambda_.1} parent=0 // pred_region
    _
  $region21: #{_lambda_.1} parent=0 // pred_fallthru
    _
  // Predicated region
  $region22: #{_lambda_.1} parent=0 // pred_check
    _
  $region23: #{_lambda_.1} parent=0 // pred_check_branch
    %27 = sbr.rel (0) target = $region25
  $region24: #{_lambda_.1} parent=0 // pred_region
    _
  $region25: #{_lambda_.1} parent=0 // pred_fallthru
    _
  // Predicated region
  $region26: #{_lambda_.1} parent=0 // pred_check
    _
  $region27: #{_lambda_.1} parent=0 // pred_check_branch
    %29 = sbr.rel (0) target = $region29
  $region28: #{_lambda_.1} parent=0 // pred_region
    _
  $region29: #{_lambda_.1} parent=0 // pred_fallthru
    _
  // Predicated region
  $region30: #{_lambda_.1} parent=0 // pred_check
    _
  $region31: #{_lambda_.1} parent=0 // pred_check_branch
    %31 = sbr.rel (0) target = $region33
  $region32: #{_lambda_.1} parent=0 // pred_region
    _
  $region33: #{_lambda_.1} parent=0 // pred_fallthru
    _
  // Predicated region
  $region34: #{_lambda_.1} parent=0 // pred_check
    _
  $region35: #{_lambda_.1} parent=0 // pred_check_branch
    %33 = sbr.rel (0) target = $region37
  $region36: #{_lambda_.1} parent=0 // pred_region
    _
  $region37: #{_lambda_.1} parent=0 // pred_fallthru
    _
  // Predicated region
  $region38: #{_lambda_.1} parent=0 // pred_check
    _
  $region39: #{_lambda_.1} parent=0 // pred_check_branch
    %35 = sbr.rel (0) target = $region41
  $region40: #{_lambda_.1} parent=0 // pred_region
    _
  $region41: #{_lambda_.1} parent=0 // pred_fallthru
    _
  // Predicated region
  $region42: #{_lambda_.1} parent=0 // pred_check
    _
  $region43: #{_lambda_.1} parent=0 // pred_check_branch
    %37 = sbr.rel (0) target = $region45
  $region44: #{_lambda_.1} parent=0 // pred_region
    _
  $region45: #{_lambda_.1} parent=0 // pred_fallthru
    _
  %38 = vst [vmem:[#allocation2] sm:$0x3] 0.0
  %39 = vst [vmem:[#allocation2 + $0x22] sm:$0x3] 0.0
  %40 = vst [vmem:[#allocation3] sm:$0x3] 0.0
  %41 = vst [vmem:[#allocation3 + $0x12] sm:$0x3] 0.0
  %42 = vst [vmem:[#allocation4] sm:$0x3] 0.0
  %43 = vst [vmem:[#allocation4 + $0xa] sm:$0x3] 0.0
  %44 = vst [vmem:[#allocation5] sm:$0x3] 0.0
  %vm45 = vcmask 517120
  %46 = vst.msk [vmem:[#allocation5 + $0x8] sm:$0x3] %vm45, 0.0
  %47 = vst [vmem:[#allocation5 + $0x10] sm:$0x3] 0.0
  %48 = vst.msk [vmem:[#allocation5 + $0x18] sm:$0x3] %vm45, 0.0
  %v49 = vld [vmem:[%s0] sm:$0xff]
  %v50 = vld [vmem:[%s0 + $0x8] sm:$0xff]
  %v51 = vld [vmem:[%s0 + $0x10] sm:$0xff]
  %v52 = vld [vmem:[%s0 + $0x18] sm:$0xff]
  %v53 = vld [vmem:[%s1] sm:$0xf]
  %v54 = vld [vmem:[%s1 + $0x4] sm:$0xf]
  %v55 = vld [vmem:[%s1 + $0x8] sm:$0xf]
  %v56 = vld [vmem:[%s1 + $0xc] sm:$0xf]
  %v57 = vld [vmem:[%s1 + $0x10] sm:$0xf]
  %v58 = vld [vmem:[%s1 + $0x14] sm:$0xf]
  %v59 = vld [vmem:[%s1 + $0x18] sm:$0xf]
  %v60 = vld [vmem:[%s1 + $0x1c] sm:$0xf]
  %v61 = vld [vmem:[%s1 + $0x20] sm:$0xf]
  %v62 = vld [vmem:[%s1 + $0x24] sm:$0xf]
  %v63 = vld [vmem:[%s1 + $0x28] sm:$0xf]
  %v64 = vld [vmem:[%s1 + $0x2c] sm:$0xf]
  %v65 = vld [vmem:[%s1 + $0x30] sm:$0xf]
  %v66 = vld [vmem:[%s1 + $0x34] sm:$0xf]
  %v67 = vld [vmem:[%s1 + $0x38] sm:$0xf]
  %v68 = vld [vmem:[%s1 + $0x3c] sm:$0xf]
  %v69 = vunpack.c.l.bf16 %v53
  %v70 = vunpack.c.l.bf16 %v54
  %v71 = vunpack.c.l.bf16 %v55
  %v72 = vunpack.c.l.bf16 %v56
  %v73 = vunpack.c.l.bf16 %v57
  %v74 = vunpack.c.l.bf16 %v58
  %v75 = vunpack.c.l.bf16 %v59
  %v76 = vunpack.c.l.bf16 %v60
  %v77 = vunpack.c.l.bf16 %v61
  %v78 = vunpack.c.l.bf16 %v62
  %v79 = vunpack.c.l.bf16 %v63
  %v80 = vunpack.c.l.bf16 %v64
  %v81 = vunpack.c.l.bf16 %v65
  %v82 = vunpack.c.l.bf16 %v66
  %v83 = vunpack.c.l.bf16 %v67
  %v84 = vunpack.c.l.bf16 %v68
  %v85 = vld [vmem:[%s0 + $0x22] sm:$0xff]
  %v86 = vld [vmem:[%s0 + $0x2a] sm:$0xff]
  %v87 = vld [vmem:[%s0 + $0x32] sm:$0xff]
  %v88 = vld [vmem:[%s0 + $0x3a] sm:$0xff]
  %s89 = scalar_lea.vmem %s1, 64
  %v90 = vld [vmem:[%s89] sm:$0xf]
  %v91 = vld [vmem:[%s89 + $0x4] sm:$0xf]
  %v92 = vld [vmem:[%s89 + $0x8] sm:$0xf]
  %v93 = vld [vmem:[%s89 + $0xc] sm:$0xf]
  %v94 = vld [vmem:[%s89 + $0x10] sm:$0xf]
  %v95 = vld [vmem:[%s89 + $0x14] sm:$0xf]
  %v96 = vld [vmem:[%s89 + $0x18] sm:$0xf]
  %v97 = vld [vmem:[%s89 + $0x1c] sm:$0xf]
  %v98 = vld [vmem:[%s89 + $0x20] sm:$0xf]
  %v99 = vld [vmem:[%s89 + $0x24] sm:$0xf]
  %v100 = vld [vmem:[%s89 + $0x28] sm:$0xf]
  %v101 = vld [vmem:[%s89 + $0x2c] sm:$0xf]
  %v102 = vld [vmem:[%s89 + $0x30] sm:$0xf]
  %v103 = vld [vmem:[%s89 + $0x34] sm:$0xf]
  %v104 = vld [vmem:[%s89 + $0x38] sm:$0xf]
  %v105 = vld [vmem:[%s89 + $0x3c] sm:$0xf]
  %v106 = vunpack.c.l.bf16 %v90
  %v107 = vunpack.c.l.bf16 %v91
  %v108 = vunpack.c.l.bf16 %v92
  %v109 = vunpack.c.l.bf16 %v93
  %v110 = vunpack.c.l.bf16 %v94
  %v111 = vunpack.c.l.bf16 %v95
  %v112 = vunpack.c.l.bf16 %v96
  %v113 = vunpack.c.l.bf16 %v97
  %v114 = vunpack.c.l.bf16 %v98
  %v115 = vunpack.c.l.bf16 %v99
  %v116 = vunpack.c.l.bf16 %v100
  %v117 = vunpack.c.l.bf16 %v101
  %v118 = vunpack.c.l.bf16 %v102
  %v119 = vunpack.c.l.bf16 %v103
  %v120 = vunpack.c.l.bf16 %v104
  %v121 = vunpack.c.l.bf16 %v105
  %122 = vmatprep.subr.mxu0 0.0
  %123 = vmatpush1.msra.mxu0 %v121
  %124 = vmatprep.subr.mxu0 0.0
  %125 = vmatpush1.msra.mxu0 %v120
  %126 = vmatprep.subr.mxu0 0.0
  %127 = vmatpush1.msra.mxu0 %v119
  %128 = vmatprep.subr.mxu0 0.0
  %129 = vmatpush1.msra.mxu0 %v118
  %130 = vmatprep.subr.mxu0 0.0
  %131 = vmatpush1.msra.mxu0 %v117
  %132 = vmatprep.subr.mxu0 0.0
  %133 = vmatpush1.msra.mxu0 %v116
  %134 = vmatprep.subr.mxu0 0.0
  %135 = vmatpush1.msra.mxu0 %v115
  %136 = vmatprep.subr.mxu0 0.0
  %137 = vmatpush1.msra.mxu0 %v114
  %138 = vmatprep.subr.mxu0 0.0
  %139 = vmatpush1.msra.mxu0 %v113
  %140 = vmatprep.subr.mxu0 0.0
  %141 = vmatpush1.msra.mxu0 %v112
  %142 = vmatprep.subr.mxu0 0.0
  %143 = vmatpush1.msra.mxu0 %v111
  %144 = vmatprep.subr.mxu0 0.0
  %145 = vmatpush1.msra.mxu0 %v110
  %146 = vmatprep.subr.mxu0 0.0
  %147 = vmatpush1.msra.mxu0 %v109
  %148 = vmatprep.subr.mxu0 0.0
  %149 = vmatpush1.msra.mxu0 %v108
  %150 = vmatprep.subr.mxu0 0.0
  %151 = vmatpush1.msra.mxu0 %v107
  %152 = vmatprep.subr.mxu0 0.0
  %153 = vmatpush1.msra.mxu0 %v106
  %154 = vmatprep.subr.mxu0 0.0
  %155 = vmatpush2.msra.mxu0 0.0
  %156 = vmatprep.subr.mxu0 0.0
  %157 = vmatpush2.msra.mxu0 0.0
  %158 = vmatprep.subr.mxu0 0.0
  %159 = vmatpush2.msra.mxu0 0.0
  %160 = vmatprep.subr.mxu0 0.0
  %161 = vmatpush2.msra.mxu0 0.0
  %162 = vmatprep.subr.mxu0 0.0
  %163 = vmatpush2.msra.mxu0 0.0
  %164 = vmatprep.subr.mxu0 0.0
  %165 = vmatpush2.msra.mxu0 0.0
  %166 = vmatprep.subr.mxu0 0.0
  %167 = vmatpush2.msra.mxu0 0.0
  %168 = vmatprep.subr.mxu0 0.0
  %169 = vmatpush2.msra.mxu0 0.0
  %170 = vmatprep.subr.mxu0 0.0
  %171 = vmatpush2.msra.mxu0 0.0
  %172 = vmatprep.subr.mxu0 0.0
  %173 = vmatpush2.msra.mxu0 0.0
  %174 = vmatprep.subr.mxu0 0.0
  %175 = vmatpush2.msra.mxu0 0.0
  %176 = vmatprep.subr.mxu0 0.0
  %177 = vmatpush2.msra.mxu0 0.0
  %178 = vmatprep.subr.mxu0 0.0
  %179 = vmatpush2.msra.mxu0 0.0
  %180 = vmatprep.subr.mxu0 0.0
  %181 = vmatpush2.msra.mxu0 0.0
  %182 = vmatprep.subr.mxu0 0.0
  %183 = vmatpush2.msra.mxu0 0.0
  %184 = vmatprep.subr.mxu0 0.0
  %185 = vmatpush2.msra.mxu0 0.0
  %186 = vmatprep.mubr.f32.mxu0 0.0
  %187 = vmatmul.mubr.f32.gmra.mxu0 %v85
  %v188 = vpop.f32.mrf.mxu0
  %v189 = vadd.f32 0.0, %v188
  %v190 = vpop.f32.mrf.mxu0
  %191 = vmatprep.mubr.f32.mxu0 0.0
  %192 = vmatmul.mubr.f32.gmra.mxu0 %v86
  %v193 = vpop.f32.mrf.mxu0
  %v194 = vadd.f32 0.0, %v193
  %v195 = vpop.f32.mrf.mxu0
  %196 = vmatprep.mubr.f32.mxu0 0.0
  %197 = vmatmul.mubr.f32.gmra.mxu0 %v87
  %v198 = vpop.f32.mrf.mxu0
  %v199 = vadd.f32 0.0, %v198
  %v200 = vpop.f32.mrf.mxu0
  %201 = vmatprep.mubr.f32.mxu0 0.0
  %202 = vmatmul.mubr.f32.gmra.mxu0 %v88
  %v203 = vpop.f32.mrf.mxu0
  %v204 = vadd.f32 0.0, %v203
  %v205 = vpop.f32.mrf.mxu0
  %206 = vdwg.mxu0
  %207 = vmatprep.subr.mxu0 0.0
  %208 = vmatpush1.msra.mxu0 %v84
  %209 = vmatprep.subr.mxu0 0.0
  %210 = vmatpush1.msra.mxu0 %v83
  %211 = vmatprep.subr.mxu0 0.0
  %212 = vmatpush1.msra.mxu0 %v82
  %213 = vmatprep.subr.mxu0 0.0
  %214 = vmatpush1.msra.mxu0 %v81
  %215 = vmatprep.subr.mxu0 0.0
  %216 = vmatpush1.msra.mxu0 %v80
  %217 = vmatprep.subr.mxu0 0.0
  %218 = vmatpush1.msra.mxu0 %v79
  %219 = vmatprep.subr.mxu0 0.0
  %220 = vmatpush1.msra.mxu0 %v78
  %221 = vmatprep.subr.mxu0 0.0
  %222 = vmatpush1.msra.mxu0 %v77
  %223 = vmatprep.subr.mxu0 0.0
  %224 = vmatpush1.msra.mxu0 %v76
  %225 = vmatprep.subr.mxu0 0.0
  %226 = vmatpush1.msra.mxu0 %v75
  %227 = vmatprep.subr.mxu0 0.0
  %228 = vmatpush1.msra.mxu0 %v74
  %229 = vmatprep.subr.mxu0 0.0
  %230 = vmatpush1.msra.mxu0 %v73
  %231 = vmatprep.subr.mxu0 0.0
  %232 = vmatpush1.msra.mxu0 %v72
  %233 = vmatprep.subr.mxu0 0.0
  %234 = vmatpush1.msra.mxu0 %v71
  %235 = vmatprep.subr.mxu0 0.0
  %236 = vmatpush1.msra.mxu0 %v70
  %237 = vmatprep.subr.mxu0 0.0
  %238 = vmatpush1.msra.mxu0 %v69
  %239 = vmatprep.subr.mxu0 0.0
  %240 = vmatpush2.msra.mxu0 0.0
  %241 = vmatprep.subr.mxu0 0.0
  %242 = vmatpush2.msra.mxu0 0.0
  %243 = vmatprep.subr.mxu0 0.0
  %244 = vmatpush2.msra.mxu0 0.0
  %245 = vmatprep.subr.mxu0 0.0
  %246 = vmatpush2.msra.mxu0 0.0
  %247 = vmatprep.subr.mxu0 0.0
  %248 = vmatpush2.msra.mxu0 0.0
  %249 = vmatprep.subr.mxu0 0.0
  %250 = vmatpush2.msra.mxu0 0.0
  %251 = vmatprep.subr.mxu0 0.0
  %252 = vmatpush2.msra.mxu0 0.0
  %253 = vmatprep.subr.mxu0 0.0
  %254 = vmatpush2.msra.mxu0 0.0
  %255 = vmatprep.subr.mxu0 0.0
  %256 = vmatpush2.msra.mxu0 0.0
  %257 = vmatprep.subr.mxu0 0.0
  %258 = vmatpush2.msra.mxu0 0.0
  %259 = vmatprep.subr.mxu0 0.0
  %260 = vmatpush2.msra.mxu0 0.0
  %261 = vmatprep.subr.mxu0 0.0
  %262 = vmatpush2.msra.mxu0 0.0
  %263 = vmatprep.subr.mxu0 0.0
  %264 = vmatpush2.msra.mxu0 0.0
  %265 = vmatprep.subr.mxu0 0.0
  %266 = vmatpush2.msra.mxu0 0.0
  %267 = vmatprep.subr.mxu0 0.0
  %268 = vmatpush2.msra.mxu0 0.0
  %269 = vmatprep.subr.mxu0 0.0
  %270 = vmatpush2.msra.mxu0 0.0
  %271 = vmatprep.mubr.f32.mxu0 0.0
  %272 = vmatmul.mubr.f32.gmra.mxu0 %v49
  %v273 = vpop.f32.mrf.mxu0
  %v274 = vadd.f32 %v189, %v273
  %v275 = vpop.f32.mrf.mxu0
  %276 = vmatprep.mubr.f32.mxu0 0.0
  %277 = vmatmul.mubr.f32.gmra.mxu0 %v50
  %v278 = vpop.f32.mrf.mxu0
  %v279 = vadd.f32 %v194, %v278
  %v280 = vpop.f32.mrf.mxu0
  %281 = vmatprep.mubr.f32.mxu0 0.0
  %282 = vmatmul.mubr.f32.gmra.mxu0 %v51
  %v283 = vpop.f32.mrf.mxu0
  %v284 = vadd.f32 %v199, %v283
  %v285 = vpop.f32.mrf.mxu0
  %286 = vmatprep.mubr.f32.mxu0 0.0
  %287 = vmatmul.mubr.f32.gmra.mxu0 %v52
  %v288 = vpop.f32.mrf.mxu0
  %v289 = vadd.f32 %v204, %v288
  %v290 = vpop.f32.mrf.mxu0
  %291 = vdwg.mxu0
  %v292 = vld [vmem:[%s0 + $0x2] sm:$0xff]
  %v293 = vld [vmem:[%s0 + $0xa] sm:$0xff]
  %v294 = vld [vmem:[%s0 + $0x12] sm:$0xff]
  %v295 = vld [vmem:[%s0 + $0x1a] sm:$0xff]
  %s296 = scalar_lea.vmem %s1, 128
  %v297 = vld [vmem:[%s296] sm:$0xf]
  %v298 = vld [vmem:[%s296 + $0x4] sm:$0xf]
  %v299 = vld [vmem:[%s296 + $0x8] sm:$0xf]
  %v300 = vld [vmem:[%s296 + $0xc] sm:$0xf]
  %v301 = vld [vmem:[%s296 + $0x10] sm:$0xf]
  %v302 = vld [vmem:[%s296 + $0x14] sm:$0xf]
  %v303 = vld [vmem:[%s296 + $0x18] sm:$0xf]
  %v304 = vld [vmem:[%s296 + $0x1c] sm:$0xf]
  %v305 = vld [vmem:[%s296 + $0x20] sm:$0xf]
  %v306 = vld [vmem:[%s296 + $0x24] sm:$0xf]
  %v307 = vld [vmem:[%s296 + $0x28] sm:$0xf]
  %v308 = vld [vmem:[%s296 + $0x2c] sm:$0xf]
  %v309 = vld [vmem:[%s296 + $0x30] sm:$0xf]
  %v310 = vld [vmem:[%s296 + $0x34] sm:$0xf]
  %v311 = vld [vmem:[%s296 + $0x38] sm:$0xf]
  %v312 = vld [vmem:[%s296 + $0x3c] sm:$0xf]
  %v313 = vunpack.c.l.bf16 %v297
  %v314 = vunpack.c.l.bf16 %v298
  %v315 = vunpack.c.l.bf16 %v299
  %v316 = vunpack.c.l.bf16 %v300
  %v317 = vunpack.c.l.bf16 %v301
  %v318 = vunpack.c.l.bf16 %v302
  %v319 = vunpack.c.l.bf16 %v303
  %v320 = vunpack.c.l.bf16 %v304
  %v321 = vunpack.c.l.bf16 %v305
  %v322 = vunpack.c.l.bf16 %v306
  %v323 = vunpack.c.l.bf16 %v307
  %v324 = vunpack.c.l.bf16 %v308
  %v325 = vunpack.c.l.bf16 %v309
  %v326 = vunpack.c.l.bf16 %v310
  %v327 = vunpack.c.l.bf16 %v311
  %v328 = vunpack.c.l.bf16 %v312
  %329 = vmatprep.subr.mxu0 0.0
  %330 = vmatpush1.msra.mxu0 %v328
  %331 = vmatprep.subr.mxu0 0.0
  %332 = vmatpush1.msra.mxu0 %v327
  %333 = vmatprep.subr.mxu0 0.0
  %334 = vmatpush1.msra.mxu0 %v326
  %335 = vmatprep.subr.mxu0 0.0
  %336 = vmatpush1.msra.mxu0 %v325
  %337 = vmatprep.subr.mxu0 0.0
  %338 = vmatpush1.msra.mxu0 %v324
  %339 = vmatprep.subr.mxu0 0.0
  %340 = vmatpush1.msra.mxu0 %v323
  %341 = vmatprep.subr.mxu0 0.0
  %342 = vmatpush1.msra.mxu0 %v322
  %343 = vmatprep.subr.mxu0 0.0
  %344 = vmatpush1.msra.mxu0 %v321
  %345 = vmatprep.subr.mxu0 0.0
  %346 = vmatpush1.msra.mxu0 %v320
  %347 = vmatprep.subr.mxu0 0.0
  %348 = vmatpush1.msra.mxu0 %v319
  %349 = vmatprep.subr.mxu0 0.0
  %350 = vmatpush1.msra.mxu0 %v318
  %351 = vmatprep.subr.mxu0 0.0
  %352 = vmatpush1.msra.mxu0 %v317
  %353 = vmatprep.subr.mxu0 0.0
  %354 = vmatpush1.msra.mxu0 %v316
  %355 = vmatprep.subr.mxu0 0.0
  %356 = vmatpush1.msra.mxu0 %v315
  %357 = vmatprep.subr.mxu0 0.0
  %358 = vmatpush1.msra.mxu0 %v314
  %359 = vmatprep.subr.mxu0 0.0
  %360 = vmatpush1.msra.mxu0 %v313
  %361 = vmatprep.subr.mxu0 0.0
  %362 = vmatpush2.msra.mxu0 0.0
  %363 = vmatprep.subr.mxu0 0.0
  %364 = vmatpush2.msra.mxu0 0.0
  %365 = vmatprep.subr.mxu0 0.0
  %366 = vmatpush2.msra.mxu0 0.0
  %367 = vmatprep.subr.mxu0 0.0
  %368 = vmatpush2.msra.mxu0 0.0
  %369 = vmatprep.subr.mxu0 0.0
  %370 = vmatpush2.msra.mxu0 0.0
  %371 = vmatprep.subr.mxu0 0.0
  %372 = vmatpush2.msra.mxu0 0.0
  %373 = vmatprep.subr.mxu0 0.0
  %374 = vmatpush2.msra.mxu0 0.0
  %375 = vmatprep.subr.mxu0 0.0
  %376 = vmatpush2.msra.mxu0 0.0
  %377 = vmatprep.subr.mxu0 0.0
  %378 = vmatpush2.msra.mxu0 0.0
  %379 = vmatprep.subr.mxu0 0.0
  %380 = vmatpush2.msra.mxu0 0.0
  %381 = vmatprep.subr.mxu0 0.0
  %382 = vmatpush2.msra.mxu0 0.0
  %383 = vmatprep.subr.mxu0 0.0
  %384 = vmatpush2.msra.mxu0 0.0
  %385 = vmatprep.subr.mxu0 0.0
  %386 = vmatpush2.msra.mxu0 0.0
  %387 = vmatprep.subr.mxu0 0.0
  %388 = vmatpush2.msra.mxu0 0.0
  %389 = vmatprep.subr.mxu0 0.0
  %390 = vmatpush2.msra.mxu0 0.0
  %391 = vmatprep.subr.mxu0 0.0
  %392 = vmatpush2.msra.mxu0 0.0
  %393 = vmatprep.mubr.f32.mxu0 0.0
  %394 = vmatmul.mubr.f32.gmra.mxu0 %v292
  %v395 = vpop.f32.mrf.mxu0
  %v396 = vadd.f32 0.0, %v395
  %v397 = vpop.f32.mrf.mxu0
  %398 = vmatprep.mubr.f32.mxu0 0.0
  %399 = vmatmul.mubr.f32.gmra.mxu0 %v293
  %v400 = vpop.f32.mrf.mxu0
  %v401 = vadd.f32 0.0, %v400
  %v402 = vpop.f32.mrf.mxu0
  %403 = vmatprep.mubr.f32.mxu0 0.0
  %404 = vmatmul.mubr.f32.gmra.mxu0 %v294
  %v405 = vpop.f32.mrf.mxu0
  %v406 = vadd.f32 0.0, %v405
  %v407 = vpop.f32.mrf.mxu0
  %408 = vmatprep.mubr.f32.mxu0 0.0
  %409 = vmatmul.mubr.f32.gmra.mxu0 %v295
  %v410 = vpop.f32.mrf.mxu0
  %v411 = vadd.f32 0.0, %v410
  %v412 = vpop.f32.mrf.mxu0
  %413 = vdwg.mxu0
  %v414 = vadd.f32 %v274, %v396
  %v415 = vadd.f32 %v279, %v401
  %v416 = vadd.f32 %v284, %v406
  %v417 = vadd.f32 %v289, %v411
  %v418 = vld [vmem:[%s0 + $0x24] sm:$0xff]
  %v419 = vld [vmem:[%s0 + $0x2c] sm:$0xff]
  %v420 = vld [vmem:[%s0 + $0x34] sm:$0xff]
  %v421 = vld [vmem:[%s0 + $0x3c] sm:$0xff]
  %s422 = scalar_lea.vmem %s1, 192
  %v423 = vld [vmem:[%s422] sm:$0xf]
  %v424 = vld [vmem:[%s422 + $0x4] sm:$0xf]
  %v425 = vld [vmem:[%s422 + $0x8] sm:$0xf]
  %v426 = vld [vmem:[%s422 + $0xc] sm:$0xf]
  %v427 = vld [vmem:[%s422 + $0x10] sm:$0xf]
  %v428 = vld [vmem:[%s422 + $0x14] sm:$0xf]
  %v429 = vld [vmem:[%s422 + $0x18] sm:$0xf]
  %v430 = vld [vmem:[%s422 + $0x1c] sm:$0xf]
  %v431 = vld [vmem:[%s422 + $0x20] sm:$0xf]
  %v432 = vld [vmem:[%s422 + $0x24] sm:$0xf]
  %v433 = vld [vmem:[%s422 + $0x28] sm:$0xf]
  %v434 = vld [vmem:[%s422 + $0x2c] sm:$0xf]
  %v435 = vld [vmem:[%s422 + $0x30] sm:$0xf]
  %v436 = vld [vmem:[%s422 + $0x34] sm:$0xf]
  %v437 = vld [vmem:[%s422 + $0x38] sm:$0xf]
  %v438 = vld [vmem:[%s422 + $0x3c] sm:$0xf]
  %v439 = vunpack.c.l.bf16 %v423
  %v440 = vunpack.c.l.bf16 %v424
  %v441 = vunpack.c.l.bf16 %v425
  %v442 = vunpack.c.l.bf16 %v426
  %v443 = vunpack.c.l.bf16 %v427
  %v444 = vunpack.c.l.bf16 %v428
  %v445 = vunpack.c.l.bf16 %v429
  %v446 = vunpack.c.l.bf16 %v430
  %v447 = vunpack.c.l.bf16 %v431
  %v448 = vunpack.c.l.bf16 %v432
  %v449 = vunpack.c.l.bf16 %v433
  %v450 = vunpack.c.l.bf16 %v434
  %v451 = vunpack.c.l.bf16 %v435
  %v452 = vunpack.c.l.bf16 %v436
  %v453 = vunpack.c.l.bf16 %v437
  %v454 = vunpack.c.l.bf16 %v438
  %455 = vmatprep.subr.mxu0 0.0
  %456 = vmatpush1.msra.mxu0 %v454
  %457 = vmatprep.subr.mxu0 0.0
  %458 = vmatpush1.msra.mxu0 %v453
  %459 = vmatprep.subr.mxu0 0.0
  %460 = vmatpush1.msra.mxu0 %v452
  %461 = vmatprep.subr.mxu0 0.0
  %462 = vmatpush1.msra.mxu0 %v451
  %463 = vmatprep.subr.mxu0 0.0
  %464 = vmatpush1.msra.mxu0 %v450
  %465 = vmatprep.subr.mxu0 0.0
  %466 = vmatpush1.msra.mxu0 %v449
  %467 = vmatprep.subr.mxu0 0.0
  %468 = vmatpush1.msra.mxu0 %v448
  %469 = vmatprep.subr.mxu0 0.0
  %470 = vmatpush1.msra.mxu0 %v447
  %471 = vmatprep.subr.mxu0 0.0
  %472 = vmatpush1.msra.mxu0 %v446
  %473 = vmatprep.subr.mxu0 0.0
  %474 = vmatpush1.msra.mxu0 %v445
  %475 = vmatprep.subr.mxu0 0.0
  %476 = vmatpush1.msra.mxu0 %v444
  %477 = vmatprep.subr.mxu0 0.0
  %478 = vmatpush1.msra.mxu0 %v443
  %479 = vmatprep.subr.mxu0 0.0
  %480 = vmatpush1.msra.mxu0 %v442
  %481 = vmatprep.subr.mxu0 0.0
  %482 = vmatpush1.msra.mxu0 %v441
  %483 = vmatprep.subr.mxu0 0.0
  %484 = vmatpush1.msra.mxu0 %v440
  %485 = vmatprep.subr.mxu0 0.0
  %486 = vmatpush1.msra.mxu0 %v439
  %487 = vmatprep.subr.mxu0 0.0
  %488 = vmatpush2.msra.mxu0 0.0
  %489 = vmatprep.subr.mxu0 0.0
  %490 = vmatpush2.msra.mxu0 0.0
  %491 = vmatprep.subr.mxu0 0.0
  %492 = vmatpush2.msra.mxu0 0.0
  %493 = vmatprep.subr.mxu0 0.0
  %494 = vmatpush2.msra.mxu0 0.0
  %495 = vmatprep.subr.mxu0 0.0
  %496 = vmatpush2.msra.mxu0 0.0
  %497 = vmatprep.subr.mxu0 0.0
  %498 = vmatpush2.msra.mxu0 0.0
  %499 = vmatprep.subr.mxu0 0.0
  %500 = vmatpush2.msra.mxu0 0.0
  %501 = vmatprep.subr.mxu0 0.0
  %502 = vmatpush2.msra.mxu0 0.0
  %503 = vmatprep.subr.mxu0 0.0
  %504 = vmatpush2.msra.mxu0 0.0
  %505 = vmatprep.subr.mxu0 0.0
  %506 = vmatpush2.msra.mxu0 0.0
  %507 = vmatprep.subr.mxu0 0.0
  %508 = vmatpush2.msra.mxu0 0.0
  %509 = vmatprep.subr.mxu0 0.0
  %510 = vmatpush2.msra.mxu0 0.0
  %511 = vmatprep.subr.mxu0 0.0
  %512 = vmatpush2.msra.mxu0 0.0
  %513 = vmatprep.subr.mxu0 0.0
  %514 = vmatpush2.msra.mxu0 0.0
  %515 = vmatprep.subr.mxu0 0.0
  %516 = vmatpush2.msra.mxu0 0.0
  %517 = vmatprep.subr.mxu0 0.0
  %518 = vmatpush2.msra.mxu0 0.0
  %519 = vmatprep.mubr.f32.mxu0 0.0
  %520 = vmatmul.mubr.f32.gmra.mxu0 %v418
  %v521 = vpop.f32.mrf.mxu0
  %v522 = vadd.f32 0.0, %v521
  %v523 = vpop.f32.mrf.mxu0
  %524 = vmatprep.mubr.f32.mxu0 0.0
  %525 = vmatmul.mubr.f32.gmra.mxu0 %v419
  %v526 = vpop.f32.mrf.mxu0
  %v527 = vadd.f32 0.0, %v526
  %v528 = vpop.f32.mrf.mxu0
  %529 = vmatprep.mubr.f32.mxu0 0.0
  %530 = vmatmul.mubr.f32.gmra.mxu0 %v420
  %v531 = vpop.f32.mrf.mxu0
  %v532 = vadd.f32 0.0, %v531
  %v533 = vpop.f32.mrf.mxu0
  %534 = vmatprep.mubr.f32.mxu0 0.0
  %535 = vmatmul.mubr.f32.gmra.mxu0 %v421
  %v536 = vpop.f32.mrf.mxu0
  %v537 = vadd.f32 0.0, %v536
  %v538 = vpop.f32.mrf.mxu0
  %539 = vdwg.mxu0
  %v540 = vadd.f32 %v414, %v522
  %v541 = vadd.f32 %v415, %v527
  %v542 = vadd.f32 %v416, %v532
  %v543 = vadd.f32 %v417, %v537
  %v544 = vld [vmem:[%s2] sm:$0x1]
  %v546 = vlaneseq
  %v547 = vshrl.u32 %v546, 7
  %v548 = vsub.s32 0, %v547
  %v549 = vrot.slane %v544, %v548
  %v551 = vadd.f32 %v540, %v549
  %v552 = vadd.f32 %v541, %v549
  %v553 = vadd.f32 %v542, %v549
  %v554 = vadd.f32 %v543, %v549
  %vm555 = vcmp.ge.f32.partialorder %v551, 0.0
  %vm556 = vcmp.ge.f32.partialorder %v552, 0.0
  %vm557 = vcmp.ge.f32.partialorder %v553, 0.0
  %vm558 = vcmp.ge.f32.partialorder %v554, 0.0
  %v559 = vmul.f32 %v551, 0.2
  %v560 = vmul.f32 %v552, 0.2
  %v561 = vmul.f32 %v553, 0.2
  %v562 = vmul.f32 %v554, 0.2
  %v563 = vsel %vm555, %v551, %v559
  %v564 = vsel %vm556, %v552, %v560
  %v565 = vsel %vm557, %v553, %v561
  %v566 = vsel %vm558, %v554, %v562
  %v571 = vcombine.high %v563, %v563
  %v573 = vunpack.c.l.s4 1983009808
  %v574 = vunpack.c.0.s8 %v573
  %v575 = vlaneseq
  %v576 = vshrl.u32 %v575, 7
  %v577 = vsub.s32 %v574, %v576
  %v578 = vrot.slane %v563, %v577
  %v580 = vunpack.c.l.s4 1983009808
  %v581 = vunpack.c.0.s8 %v580
  %v582 = vlaneseq
  %v583 = vshrl.u32 %v582, 7
  %v584 = vsub.s32 %v581, %v583
  %v585 = vrot.slane %v571, %v584
  %v586 = vcombine.high %v578, %v578
  %v587 = vcombine.high %v585, %v585
  %v588 = vcombine.high %v564, %v564
  %v590 = vunpack.c.l.s4 1983009808
  %v591 = vunpack.c.0.s8 %v590
  %v592 = vlaneseq
  %v593 = vshrl.u32 %v592, 7
  %v594 = vsub.s32 %v591, %v593
  %v595 = vrot.slane %v564, %v594
  %v597 = vunpack.c.l.s4 1983009808
  %v598 = vunpack.c.0.s8 %v597
  %v599 = vlaneseq
  %v600 = vshrl.u32 %v599, 7
  %v601 = vsub.s32 %v598, %v600
  %v602 = vrot.slane %v588, %v601
  %v603 = vcombine.high %v595, %v595
  %v604 = vcombine.high %v602, %v602
  %v605 = vcombine.high %v565, %v565
  %v607 = vunpack.c.l.s4 1983009808
  %v608 = vunpack.c.0.s8 %v607
  %v609 = vlaneseq
  %v610 = vshrl.u32 %v609, 7
  %v611 = vsub.s32 %v608, %v610
  %v612 = vrot.slane %v565, %v611
  %v614 = vunpack.c.l.s4 1983009808
  %v615 = vunpack.c.0.s8 %v614
  %v616 = vlaneseq
  %v617 = vshrl.u32 %v616, 7
  %v618 = vsub.s32 %v615, %v617
  %v619 = vrot.slane %v605, %v618
  %v620 = vcombine.high %v612, %v612
  %v621 = vcombine.high %v619, %v619
  %v622 = vcombine.high %v566, %v566
  %v624 = vunpack.c.l.s4 1983009808
  %v625 = vunpack.c.0.s8 %v624
  %v626 = vlaneseq
  %v627 = vshrl.u32 %v626, 7
  %v628 = vsub.s32 %v625, %v627
  %v629 = vrot.slane %v566, %v628
  %v631 = vunpack.c.l.s4 1983009808
  %v632 = vunpack.c.0.s8 %v631
  %v633 = vlaneseq
  %v634 = vshrl.u32 %v633, 7
  %v635 = vsub.s32 %v632, %v634
  %v636 = vrot.slane %v622, %v635
  %v637 = vcombine.high %v629, %v629
  %v638 = vcombine.high %v636, %v636
  %v639 = vcombine.low %v578, %v585
  %v640 = vcombine.low %v595, %v602
  %v642 = vunpack.c.l.s4 1983009808
  %v643 = vunpack.c.0.s8 %v642
  %v644 = vlaneseq
  %v645 = vshrl.u32 %v644, 7
  %v646 = vsub.s32 %v643, %v645
  %v647 = vrot.slane %v639, %v646
  %v649 = vunpack.c.l.s4 1983009808
  %v650 = vunpack.c.0.s8 %v649
  %v651 = vlaneseq
  %v652 = vshrl.u32 %v651, 7
  %v653 = vsub.s32 %v650, %v652
  %v654 = vrot.slane %v640, %v653
  %v655 = vcombine.low %v647, %v654
  %v656 = vcombine.low %v612, %v619
  %v657 = vcombine.low %v629, %v636
  %v659 = vunpack.c.l.s4 1983009808
  %v660 = vunpack.c.0.s8 %v659
  %v661 = vlaneseq
  %v662 = vshrl.u32 %v661, 7
  %v663 = vsub.s32 %v660, %v662
  %v664 = vrot.slane %v656, %v663
  %v666 = vunpack.c.l.s4 1983009808
  %v667 = vunpack.c.0.s8 %v666
  %v668 = vlaneseq
  %v669 = vshrl.u32 %v668, 7
  %v670 = vsub.s32 %v667, %v669
  %v671 = vrot.slane %v657, %v670
  %v672 = vcombine.low %v664, %v671
  %675 = vst [vmem:[#allocation2 + $0x12] sm:$0xff] %v655
  %676 = vst [vmem:[#allocation2 + $0x1a] sm:$0xff] %v672
  %v677 = vcombine.low %v586, %v587
  %v678 = vcombine.low %v603, %v604
  %v680 = vunpack.c.l.s4 1983009808
  %v681 = vunpack.c.0.s8 %v680
  %v682 = vlaneseq
  %v683 = vshrl.u32 %v682, 7
  %v684 = vsub.s32 %v681, %v683
  %v685 = vrot.slane %v677, %v684
  %v687 = vunpack.c.l.s4 1983009808
  %v688 = vunpack.c.0.s8 %v687
  %v689 = vlaneseq
  %v690 = vshrl.u32 %v689, 7
  %v691 = vsub.s32 %v688, %v690
  %v692 = vrot.slane %v678, %v691
  %v693 = vcombine.low %v685, %v692
  %v694 = vcombine.low %v620, %v621
  %v695 = vcombine.low %v637, %v638
  %v697 = vunpack.c.l.s4 1983009808
  %v698 = vunpack.c.0.s8 %v697
  %v699 = vlaneseq
  %v700 = vshrl.u32 %v699, 7
  %v701 = vsub.s32 %v698, %v700
  %v702 = vrot.slane %v694, %v701
  %v704 = vunpack.c.l.s4 1983009808
  %v705 = vunpack.c.0.s8 %v704
  %v706 = vlaneseq
  %v707 = vshrl.u32 %v706, 7
  %v708 = vsub.s32 %v705, %v707
  %v709 = vrot.slane %v695, %v708
  %v710 = vcombine.low %v702, %v709
  %713 = vst [vmem:[#allocation2 + $0x2] sm:$0xff] %v693
  %714 = vst [vmem:[#allocation2 + $0xa] sm:$0xff] %v710
  %v715 = vld [vmem:[#allocation2] sm:$0xff]
  %v716 = vld [vmem:[#allocation2 + $0x8] sm:$0xff]
  %v717 = vld [vmem:[%s3] sm:$0xf]
  %v718 = vld [vmem:[%s3 + $0x4] sm:$0xf]
  %v719 = vld [vmem:[%s3 + $0x8] sm:$0xf]
  %v720 = vld [vmem:[%s3 + $0xc] sm:$0xf]
  %v721 = vld [vmem:[%s3 + $0x10] sm:$0xf]
  %v722 = vld [vmem:[%s3 + $0x14] sm:$0xf]
  %v723 = vld [vmem:[%s3 + $0x18] sm:$0xf]
  %v724 = vld [vmem:[%s3 + $0x1c] sm:$0xf]
  %v725 = vld [vmem:[%s3 + $0x20] sm:$0xf]
  %v726 = vld [vmem:[%s3 + $0x24] sm:$0xf]
  %v727 = vld [vmem:[%s3 + $0x28] sm:$0xf]
  %v728 = vld [vmem:[%s3 + $0x2c] sm:$0xf]
  %v729 = vld [vmem:[%s3 + $0x30] sm:$0xf]
  %v730 = vld [vmem:[%s3 + $0x34] sm:$0xf]
  %v731 = vld [vmem:[%s3 + $0x38] sm:$0xf]
  %v732 = vld [vmem:[%s3 + $0x3c] sm:$0xf]
  %v733 = vunpack.c.l.bf16 %v717
  %v734 = vunpack.c.l.bf16 %v718
  %v735 = vunpack.c.l.bf16 %v719
  %v736 = vunpack.c.l.bf16 %v720
  %v737 = vunpack.c.l.bf16 %v721
  %v738 = vunpack.c.l.bf16 %v722
  %v739 = vunpack.c.l.bf16 %v723
  %v740 = vunpack.c.l.bf16 %v724
  %v741 = vunpack.c.l.bf16 %v725
  %v742 = vunpack.c.l.bf16 %v726
  %v743 = vunpack.c.l.bf16 %v727
  %v744 = vunpack.c.l.bf16 %v728
  %v745 = vunpack.c.l.bf16 %v729
  %v746 = vunpack.c.l.bf16 %v730
  %v747 = vunpack.c.l.bf16 %v731
  %v748 = vunpack.c.l.bf16 %v732
  %v749 = vld [vmem:[#allocation2 + $0x12] sm:$0xff]
  %v750 = vld [vmem:[#allocation2 + $0x1a] sm:$0xff]
  %s751 = scalar_lea.vmem %s3, 64
  %v752 = vld [vmem:[%s751] sm:$0xf]
  %v753 = vld [vmem:[%s751 + $0x4] sm:$0xf]
  %v754 = vld [vmem:[%s751 + $0x8] sm:$0xf]
  %v755 = vld [vmem:[%s751 + $0xc] sm:$0xf]
  %v756 = vld [vmem:[%s751 + $0x10] sm:$0xf]
  %v757 = vld [vmem:[%s751 + $0x14] sm:$0xf]
  %v758 = vld [vmem:[%s751 + $0x18] sm:$0xf]
  %v759 = vld [vmem:[%s751 + $0x1c] sm:$0xf]
  %v760 = vld [vmem:[%s751 + $0x20] sm:$0xf]
  %v761 = vld [vmem:[%s751 + $0x24] sm:$0xf]
  %v762 = vld [vmem:[%s751 + $0x28] sm:$0xf]
  %v763 = vld [vmem:[%s751 + $0x2c] sm:$0xf]
  %v764 = vld [vmem:[%s751 + $0x30] sm:$0xf]
  %v765 = vld [vmem:[%s751 + $0x34] sm:$0xf]
  %v766 = vld [vmem:[%s751 + $0x38] sm:$0xf]
  %v767 = vld [vmem:[%s751 + $0x3c] sm:$0xf]
  %v768 = vunpack.c.l.bf16 %v752
  %v769 = vunpack.c.l.bf16 %v753
  %v770 = vunpack.c.l.bf16 %v754
  %v771 = vunpack.c.l.bf16 %v755
  %v772 = vunpack.c.l.bf16 %v756
  %v773 = vunpack.c.l.bf16 %v757
  %v774 = vunpack.c.l.bf16 %v758
  %v775 = vunpack.c.l.bf16 %v759
  %v776 = vunpack.c.l.bf16 %v760
  %v777 = vunpack.c.l.bf16 %v761
  %v778 = vunpack.c.l.bf16 %v762
  %v779 = vunpack.c.l.bf16 %v763
  %v780 = vunpack.c.l.bf16 %v764
  %v781 = vunpack.c.l.bf16 %v765
  %v782 = vunpack.c.l.bf16 %v766
  %v783 = vunpack.c.l.bf16 %v767
  %784 = vmatprep.subr.mxu0 0.0
  %785 = vmatpush1.msra.mxu0 %v783
  %786 = vmatprep.subr.mxu0 0.0
  %787 = vmatpush1.msra.mxu0 %v782
  %788 = vmatprep.subr.mxu0 0.0
  %789 = vmatpush1.msra.mxu0 %v781
  %790 = vmatprep.subr.mxu0 0.0
  %791 = vmatpush1.msra.mxu0 %v780
  %792 = vmatprep.subr.mxu0 0.0
  %793 = vmatpush1.msra.mxu0 %v779
  %794 = vmatprep.subr.mxu0 0.0
  %795 = vmatpush1.msra.mxu0 %v778
  %796 = vmatprep.subr.mxu0 0.0
  %797 = vmatpush1.msra.mxu0 %v777
  %798 = vmatprep.subr.mxu0 0.0
  %799 = vmatpush1.msra.mxu0 %v776
  %800 = vmatprep.subr.mxu0 0.0
  %801 = vmatpush1.msra.mxu0 %v775
  %802 = vmatprep.subr.mxu0 0.0
  %803 = vmatpush1.msra.mxu0 %v774
  %804 = vmatprep.subr.mxu0 0.0
  %805 = vmatpush1.msra.mxu0 %v773
  %806 = vmatprep.subr.mxu0 0.0
  %807 = vmatpush1.msra.mxu0 %v772
  %808 = vmatprep.subr.mxu0 0.0
  %809 = vmatpush1.msra.mxu0 %v771
  %810 = vmatprep.subr.mxu0 0.0
  %811 = vmatpush1.msra.mxu0 %v770
  %812 = vmatprep.subr.mxu0 0.0
  %813 = vmatpush1.msra.mxu0 %v769
  %814 = vmatprep.subr.mxu0 0.0
  %815 = vmatpush1.msra.mxu0 %v768
  %816 = vmatprep.subr.mxu0 0.0
  %817 = vmatpush2.msra.mxu0 0.0
  %818 = vmatprep.subr.mxu0 0.0
  %819 = vmatpush2.msra.mxu0 0.0
  %820 = vmatprep.subr.mxu0 0.0
  %821 = vmatpush2.msra.mxu0 0.0
  %822 = vmatprep.subr.mxu0 0.0
  %823 = vmatpush2.msra.mxu0 0.0
  %824 = vmatprep.subr.mxu0 0.0
  %825 = vmatpush2.msra.mxu0 0.0
  %826 = vmatprep.subr.mxu0 0.0
  %827 = vmatpush2.msra.mxu0 0.0
  %828 = vmatprep.subr.mxu0 0.0
  %829 = vmatpush2.msra.mxu0 0.0
  %830 = vmatprep.subr.mxu0 0.0
  %831 = vmatpush2.msra.mxu0 0.0
  %832 = vmatprep.subr.mxu0 0.0
  %833 = vmatpush2.msra.mxu0 0.0
  %834 = vmatprep.subr.mxu0 0.0
  %835 = vmatpush2.msra.mxu0 0.0
  %836 = vmatprep.subr.mxu0 0.0
  %837 = vmatpush2.msra.mxu0 0.0
  %838 = vmatprep.subr.mxu0 0.0
  %839 = vmatpush2.msra.mxu0 0.0
  %840 = vmatprep.subr.mxu0 0.0
  %841 = vmatpush2.msra.mxu0 0.0
  %842 = vmatprep.subr.mxu0 0.0
  %843 = vmatpush2.msra.mxu0 0.0
  %844 = vmatprep.subr.mxu0 0.0
  %845 = vmatpush2.msra.mxu0 0.0
  %846 = vmatprep.subr.mxu0 0.0
  %847 = vmatpush2.msra.mxu0 0.0
  %848 = vmatprep.mubr.f32.mxu0 0.0
  %849 = vmatmul.mubr.f32.gmra.mxu0 %v749
  %v850 = vpop.f32.mrf.mxu0
  %v851 = vadd.f32 0.0, %v850
  %v852 = vpop.f32.mrf.mxu0
  %853 = vmatprep.mubr.f32.mxu0 0.0
  %854 = vmatmul.mubr.f32.gmra.mxu0 %v750
  %v855 = vpop.f32.mrf.mxu0
  %v856 = vadd.f32 0.0, %v855
  %v857 = vpop.f32.mrf.mxu0
  %858 = vdwg.mxu0
  %859 = vmatprep.subr.mxu0 0.0
  %860 = vmatpush1.msra.mxu0 %v748
  %861 = vmatprep.subr.mxu0 0.0
  %862 = vmatpush1.msra.mxu0 %v747
  %863 = vmatprep.subr.mxu0 0.0
  %864 = vmatpush1.msra.mxu0 %v746
  %865 = vmatprep.subr.mxu0 0.0
  %866 = vmatpush1.msra.mxu0 %v745
  %867 = vmatprep.subr.mxu0 0.0
  %868 = vmatpush1.msra.mxu0 %v744
  %869 = vmatprep.subr.mxu0 0.0
  %870 = vmatpush1.msra.mxu0 %v743
  %871 = vmatprep.subr.mxu0 0.0
  %872 = vmatpush1.msra.mxu0 %v742
  %873 = vmatprep.subr.mxu0 0.0
  %874 = vmatpush1.msra.mxu0 %v741
  %875 = vmatprep.subr.mxu0 0.0
  %876 = vmatpush1.msra.mxu0 %v740
  %877 = vmatprep.subr.mxu0 0.0
  %878 = vmatpush1.msra.mxu0 %v739
  %879 = vmatprep.subr.mxu0 0.0
  %880 = vmatpush1.msra.mxu0 %v738
  %881 = vmatprep.subr.mxu0 0.0
  %882 = vmatpush1.msra.mxu0 %v737
  %883 = vmatprep.subr.mxu0 0.0
  %884 = vmatpush1.msra.mxu0 %v736
  %885 = vmatprep.subr.mxu0 0.0
  %886 = vmatpush1.msra.mxu0 %v735
  %887 = vmatprep.subr.mxu0 0.0
  %888 = vmatpush1.msra.mxu0 %v734
  %889 = vmatprep.subr.mxu0 0.0
  %890 = vmatpush1.msra.mxu0 %v733
  %891 = vmatprep.subr.mxu0 0.0
  %892 = vmatpush2.msra.mxu0 0.0
  %893 = vmatprep.subr.mxu0 0.0
  %894 = vmatpush2.msra.mxu0 0.0
  %895 = vmatprep.subr.mxu0 0.0
  %896 = vmatpush2.msra.mxu0 0.0
  %897 = vmatprep.subr.mxu0 0.0
  %898 = vmatpush2.msra.mxu0 0.0
  %899 = vmatprep.subr.mxu0 0.0
  %900 = vmatpush2.msra.mxu0 0.0
  %901 = vmatprep.subr.mxu0 0.0
  %902 = vmatpush2.msra.mxu0 0.0
  %903 = vmatprep.subr.mxu0 0.0
  %904 = vmatpush2.msra.mxu0 0.0
  %905 = vmatprep.subr.mxu0 0.0
  %906 = vmatpush2.msra.mxu0 0.0
  %907 = vmatprep.subr.mxu0 0.0
  %908 = vmatpush2.msra.mxu0 0.0
  %909 = vmatprep.subr.mxu0 0.0
  %910 = vmatpush2.msra.mxu0 0.0
  %911 = vmatprep.subr.mxu0 0.0
  %912 = vmatpush2.msra.mxu0 0.0
  %913 = vmatprep.subr.mxu0 0.0
  %914 = vmatpush2.msra.mxu0 0.0
  %915 = vmatprep.subr.mxu0 0.0
  %916 = vmatpush2.msra.mxu0 0.0
  %917 = vmatprep.subr.mxu0 0.0
  %918 = vmatpush2.msra.mxu0 0.0
  %919 = vmatprep.subr.mxu0 0.0
  %920 = vmatpush2.msra.mxu0 0.0
  %921 = vmatprep.subr.mxu0 0.0
  %922 = vmatpush2.msra.mxu0 0.0
  %923 = vmatprep.mubr.f32.mxu0 0.0
  %924 = vmatmul.mubr.f32.gmra.mxu0 %v715
  %v925 = vpop.f32.mrf.mxu0
  %v926 = vadd.f32 %v851, %v925
  %v927 = vpop.f32.mrf.mxu0
  %928 = vmatprep.mubr.f32.mxu0 0.0
  %929 = vmatmul.mubr.f32.gmra.mxu0 %v716
  %v930 = vpop.f32.mrf.mxu0
  %v931 = vadd.f32 %v856, %v930
  %v932 = vpop.f32.mrf.mxu0
  %933 = vdwg.mxu0
  %v934 = vld [vmem:[#allocation2 + $0x2] sm:$0xff]
  %v935 = vld [vmem:[#allocation2 + $0xa] sm:$0xff]
  %s936 = scalar_lea.vmem %s3, 128
  %v937 = vld [vmem:[%s936] sm:$0xf]
  %v938 = vld [vmem:[%s936 + $0x4] sm:$0xf]
  %v939 = vld [vmem:[%s936 + $0x8] sm:$0xf]
  %v940 = vld [vmem:[%s936 + $0xc] sm:$0xf]
  %v941 = vld [vmem:[%s936 + $0x10] sm:$0xf]
  %v942 = vld [vmem:[%s936 + $0x14] sm:$0xf]
  %v943 = vld [vmem:[%s936 + $0x18] sm:$0xf]
  %v944 = vld [vmem:[%s936 + $0x1c] sm:$0xf]
  %v945 = vld [vmem:[%s936 + $0x20] sm:$0xf]
  %v946 = vld [vmem:[%s936 + $0x24] sm:$0xf]
  %v947 = vld [vmem:[%s936 + $0x28] sm:$0xf]
  %v948 = vld [vmem:[%s936 + $0x2c] sm:$0xf]
  %v949 = vld [vmem:[%s936 + $0x30] sm:$0xf]
  %v950 = vld [vmem:[%s936 + $0x34] sm:$0xf]
  %v951 = vld [vmem:[%s936 + $0x38] sm:$0xf]
  %v952 = vld [vmem:[%s936 + $0x3c] sm:$0xf]
  %v953 = vunpack.c.l.bf16 %v937
  %v954 = vunpack.c.l.bf16 %v938
  %v955 = vunpack.c.l.bf16 %v939
  %v956 = vunpack.c.l.bf16 %v940
  %v957 = vunpack.c.l.bf16 %v941
  %v958 = vunpack.c.l.bf16 %v942
  %v959 = vunpack.c.l.bf16 %v943
  %v960 = vunpack.c.l.bf16 %v944
  %v961 = vunpack.c.l.bf16 %v945
  %v962 = vunpack.c.l.bf16 %v946
  %v963 = vunpack.c.l.bf16 %v947
  %v964 = vunpack.c.l.bf16 %v948
  %v965 = vunpack.c.l.bf16 %v949
  %v966 = vunpack.c.l.bf16 %v950
  %v967 = vunpack.c.l.bf16 %v951
  %v968 = vunpack.c.l.bf16 %v952
  %969 = vmatprep.subr.mxu0 0.0
  %970 = vmatpush1.msra.mxu0 %v968
  %971 = vmatprep.subr.mxu0 0.0
  %972 = vmatpush1.msra.mxu0 %v967
  %973 = vmatprep.subr.mxu0 0.0
  %974 = vmatpush1.msra.mxu0 %v966
  %975 = vmatprep.subr.mxu0 0.0
  %976 = vmatpush1.msra.mxu0 %v965
  %977 = vmatprep.subr.mxu0 0.0
  %978 = vmatpush1.msra.mxu0 %v964
  %979 = vmatprep.subr.mxu0 0.0
  %980 = vmatpush1.msra.mxu0 %v963
  %981 = vmatprep.subr.mxu0 0.0
  %982 = vmatpush1.msra.mxu0 %v962
  %983 = vmatprep.subr.mxu0 0.0
  %984 = vmatpush1.msra.mxu0 %v961
  %985 = vmatprep.subr.mxu0 0.0
  %986 = vmatpush1.msra.mxu0 %v960
  %987 = vmatprep.subr.mxu0 0.0
  %988 = vmatpush1.msra.mxu0 %v959
  %989 = vmatprep.subr.mxu0 0.0
  %990 = vmatpush1.msra.mxu0 %v958
  %991 = vmatprep.subr.mxu0 0.0
  %992 = vmatpush1.msra.mxu0 %v957
  %993 = vmatprep.subr.mxu0 0.0
  %994 = vmatpush1.msra.mxu0 %v956
  %995 = vmatprep.subr.mxu0 0.0
  %996 = vmatpush1.msra.mxu0 %v955
  %997 = vmatprep.subr.mxu0 0.0
  %998 = vmatpush1.msra.mxu0 %v954
  %999 = vmatprep.subr.mxu0 0.0
  %1000 = vmatpush1.msra.mxu0 %v953
  %1001 = vmatprep.subr.mxu0 0.0
  %1002 = vmatpush2.msra.mxu0 0.0
  %1003 = vmatprep.subr.mxu0 0.0
  %1004 = vmatpush2.msra.mxu0 0.0
  %1005 = vmatprep.subr.mxu0 0.0
  %1006 = vmatpush2.msra.mxu0 0.0
  %1007 = vmatprep.subr.mxu0 0.0
  %1008 = vmatpush2.msra.mxu0 0.0
  %1009 = vmatprep.subr.mxu0 0.0
  %1010 = vmatpush2.msra.mxu0 0.0
  %1011 = vmatprep.subr.mxu0 0.0
  %1012 = vmatpush2.msra.mxu0 0.0
  %1013 = vmatprep.subr.mxu0 0.0
  %1014 = vmatpush2.msra.mxu0 0.0
  %1015 = vmatprep.subr.mxu0 0.0
  %1016 = vmatpush2.msra.mxu0 0.0
  %1017 = vmatprep.subr.mxu0 0.0
  %1018 = vmatpush2.msra.mxu0 0.0
  %1019 = vmatprep.subr.mxu0 0.0
  %1020 = vmatpush2.msra.mxu0 0.0
  %1021 = vmatprep.subr.mxu0 0.0
  %1022 = vmatpush2.msra.mxu0 0.0
  %1023 = vmatprep.subr.mxu0 0.0
  %1024 = vmatpush2.msra.mxu0 0.0
  %1025 = vmatprep.subr.mxu0 0.0
  %1026 = vmatpush2.msra.mxu0 0.0
  %1027 = vmatprep.subr.mxu0 0.0
  %1028 = vmatpush2.msra.mxu0 0.0
  %1029 = vmatprep.subr.mxu0 0.0
  %1030 = vmatpush2.msra.mxu0 0.0
  %1031 = vmatprep.subr.mxu0 0.0
  %1032 = vmatpush2.msra.mxu0 0.0
  %1033 = vmatprep.mubr.f32.mxu0 0.0
  %1034 = vmatmul.mubr.f32.gmra.mxu0 %v934
  %v1035 = vpop.f32.mrf.mxu0
  %v1036 = vadd.f32 0.0, %v1035
  %v1037 = vpop.f32.mrf.mxu0
  %1038 = vmatprep.mubr.f32.mxu0 0.0
  %1039 = vmatmul.mubr.f32.gmra.mxu0 %v935
  %v1040 = vpop.f32.mrf.mxu0
  %v1041 = vadd.f32 0.0, %v1040
  %v1042 = vpop.f32.mrf.mxu0
  %1043 = vdwg.mxu0
  %v1044 = vadd.f32 %v926, %v1036
  %v1045 = vadd.f32 %v931, %v1041
  %v1046 = vld [vmem:[#allocation2 + $0x14] sm:$0xff]
  %v1047 = vld [vmem:[#allocation2 + $0x1c] sm:$0xff]
  %s1048 = scalar_lea.vmem %s3, 192
  %v1049 = vld [vmem:[%s1048] sm:$0xf]
  %v1050 = vld [vmem:[%s1048 + $0x4] sm:$0xf]
  %v1051 = vld [vmem:[%s1048 + $0x8] sm:$0xf]
  %v1052 = vld [vmem:[%s1048 + $0xc] sm:$0xf]
  %v1053 = vld [vmem:[%s1048 + $0x10] sm:$0xf]
  %v1054 = vld [vmem:[%s1048 + $0x14] sm:$0xf]
  %v1055 = vld [vmem:[%s1048 + $0x18] sm:$0xf]
  %v1056 = vld [vmem:[%s1048 + $0x1c] sm:$0xf]
  %v1057 = vld [vmem:[%s1048 + $0x20] sm:$0xf]
  %v1058 = vld [vmem:[%s1048 + $0x24] sm:$0xf]
  %v1059 = vld [vmem:[%s1048 + $0x28] sm:$0xf]
  %v1060 = vld [vmem:[%s1048 + $0x2c] sm:$0xf]
  %v1061 = vld [vmem:[%s1048 + $0x30] sm:$0xf]
  %v1062 = vld [vmem:[%s1048 + $0x34] sm:$0xf]
  %v1063 = vld [vmem:[%s1048 + $0x38] sm:$0xf]
  %v1064 = vld [vmem:[%s1048 + $0x3c] sm:$0xf]
  %v1065 = vunpack.c.l.bf16 %v1049
  %v1066 = vunpack.c.l.bf16 %v1050
  %v1067 = vunpack.c.l.bf16 %v1051
  %v1068 = vunpack.c.l.bf16 %v1052
  %v1069 = vunpack.c.l.bf16 %v1053
  %v1070 = vunpack.c.l.bf16 %v1054
  %v1071 = vunpack.c.l.bf16 %v1055
  %v1072 = vunpack.c.l.bf16 %v1056
  %v1073 = vunpack.c.l.bf16 %v1057
  %v1074 = vunpack.c.l.bf16 %v1058
  %v1075 = vunpack.c.l.bf16 %v1059
  %v1076 = vunpack.c.l.bf16 %v1060
  %v1077 = vunpack.c.l.bf16 %v1061
  %v1078 = vunpack.c.l.bf16 %v1062
  %v1079 = vunpack.c.l.bf16 %v1063
  %v1080 = vunpack.c.l.bf16 %v1064
  %1081 = vmatprep.subr.mxu0 0.0
  %1082 = vmatpush1.msra.mxu0 %v1080
  %1083 = vmatprep.subr.mxu0 0.0
  %1084 = vmatpush1.msra.mxu0 %v1079
  %1085 = vmatprep.subr.mxu0 0.0
  %1086 = vmatpush1.msra.mxu0 %v1078
  %1087 = vmatprep.subr.mxu0 0.0
  %1088 = vmatpush1.msra.mxu0 %v1077
  %1089 = vmatprep.subr.mxu0 0.0
  %1090 = vmatpush1.msra.mxu0 %v1076
  %1091 = vmatprep.subr.mxu0 0.0
  %1092 = vmatpush1.msra.mxu0 %v1075
  %1093 = vmatprep.subr.mxu0 0.0
  %1094 = vmatpush1.msra.mxu0 %v1074
  %1095 = vmatprep.subr.mxu0 0.0
  %1096 = vmatpush1.msra.mxu0 %v1073
  %1097 = vmatprep.subr.mxu0 0.0
  %1098 = vmatpush1.msra.mxu0 %v1072
  %1099 = vmatprep.subr.mxu0 0.0
  %1100 = vmatpush1.msra.mxu0 %v1071
  %1101 = vmatprep.subr.mxu0 0.0
  %1102 = vmatpush1.msra.mxu0 %v1070
  %1103 = vmatprep.subr.mxu0 0.0
  %1104 = vmatpush1.msra.mxu0 %v1069
  %1105 = vmatprep.subr.mxu0 0.0
  %1106 = vmatpush1.msra.mxu0 %v1068
  %1107 = vmatprep.subr.mxu0 0.0
  %1108 = vmatpush1.msra.mxu0 %v1067
  %1109 = vmatprep.subr.mxu0 0.0
  %1110 = vmatpush1.msra.mxu0 %v1066
  %1111 = vmatprep.subr.mxu0 0.0
  %1112 = vmatpush1.msra.mxu0 %v1065
  %1113 = vmatprep.subr.mxu0 0.0
  %1114 = vmatpush2.msra.mxu0 0.0
  %1115 = vmatprep.subr.mxu0 0.0
  %1116 = vmatpush2.msra.mxu0 0.0
  %1117 = vmatprep.subr.mxu0 0.0
  %1118 = vmatpush2.msra.mxu0 0.0
  %1119 = vmatprep.subr.mxu0 0.0
  %1120 = vmatpush2.msra.mxu0 0.0
  %1121 = vmatprep.subr.mxu0 0.0
  %1122 = vmatpush2.msra.mxu0 0.0
  %1123 = vmatprep.subr.mxu0 0.0
  %1124 = vmatpush2.msra.mxu0 0.0
  %1125 = vmatprep.subr.mxu0 0.0
  %1126 = vmatpush2.msra.mxu0 0.0
  %1127 = vmatprep.subr.mxu0 0.0
  %1128 = vmatpush2.msra.mxu0 0.0
  %1129 = vmatprep.subr.mxu0 0.0
  %1130 = vmatpush2.msra.mxu0 0.0
  %1131 = vmatprep.subr.mxu0 0.0
  %1132 = vmatpush2.msra.mxu0 0.0
  %1133 = vmatprep.subr.mxu0 0.0
  %1134 = vmatpush2.msra.mxu0 0.0
  %1135 = vmatprep.subr.mxu0 0.0
  %1136 = vmatpush2.msra.mxu0 0.0
  %1137 = vmatprep.subr.mxu0 0.0
  %1138 = vmatpush2.msra.mxu0 0.0
  %1139 = vmatprep.subr.mxu0 0.0
  %1140 = vmatpush2.msra.mxu0 0.0
  %1141 = vmatprep.subr.mxu0 0.0
  %1142 = vmatpush2.msra.mxu0 0.0
  %1143 = vmatprep.subr.mxu0 0.0
  %1144 = vmatpush2.msra.mxu0 0.0
  %1145 = vmatprep.mubr.f32.mxu0 0.0
  %1146 = vmatmul.mubr.f32.gmra.mxu0 %v1046
  %v1147 = vpop.f32.mrf.mxu0
  %v1148 = vadd.f32 0.0, %v1147
  %v1149 = vpop.f32.mrf.mxu0
  %1150 = vmatprep.mubr.f32.mxu0 0.0
  %1151 = vmatmul.mubr.f32.gmra.mxu0 %v1047
  %v1152 = vpop.f32.mrf.mxu0
  %v1153 = vadd.f32 0.0, %v1152
  %v1154 = vpop.f32.mrf.mxu0
  %1155 = vdwg.mxu0
  %v1156 = vadd.f32 %v1044, %v1148
  %v1157 = vadd.f32 %v1045, %v1153
  %v1158 = vld [vmem:[%s4] sm:$0x1]
  %v1160 = vlaneseq
  %v1161 = vshrl.u32 %v1160, 7
  %v1162 = vsub.s32 0, %v1161
  %v1163 = vrot.slane %v1158, %v1162
  %v1165 = vadd.f32 %v1156, %v1163
  %v1166 = vadd.f32 %v1157, %v1163
  %vm1167 = vcmp.ge.f32.partialorder %v1165, 0.0
  %vm1168 = vcmp.ge.f32.partialorder %v1166, 0.0
  %v1169 = vmul.f32 %v1165, 0.2
  %v1170 = vmul.f32 %v1166, 0.2
  %v1171 = vsel %vm1167, %v1165, %v1169
  %v1172 = vsel %vm1168, %v1166, %v1170
  %v1175 = vcombine.high %v1171, %v1171
  %v1177 = vunpack.c.l.s4 1983009808
  %v1178 = vunpack.c.0.s8 %v1177
  %v1179 = vlaneseq
  %v1180 = vshrl.u32 %v1179, 7
  %v1181 = vsub.s32 %v1178, %v1180
  %v1182 = vrot.slane %v1171, %v1181
  %v1184 = vunpack.c.l.s4 1983009808
  %v1185 = vunpack.c.0.s8 %v1184
  %v1186 = vlaneseq
  %v1187 = vshrl.u32 %v1186, 7
  %v1188 = vsub.s32 %v1185, %v1187
  %v1189 = vrot.slane %v1175, %v1188
  %v1190 = vcombine.high %v1182, %v1182
  %v1191 = vcombine.high %v1189, %v1189
  %v1192 = vcombine.high %v1172, %v1172
  %v1194 = vunpack.c.l.s4 1983009808
  %v1195 = vunpack.c.0.s8 %v1194
  %v1196 = vlaneseq
  %v1197 = vshrl.u32 %v1196, 7
  %v1198 = vsub.s32 %v1195, %v1197
  %v1199 = vrot.slane %v1172, %v1198
  %v1201 = vunpack.c.l.s4 1983009808
  %v1202 = vunpack.c.0.s8 %v1201
  %v1203 = vlaneseq
  %v1204 = vshrl.u32 %v1203, 7
  %v1205 = vsub.s32 %v1202, %v1204
  %v1206 = vrot.slane %v1192, %v1205
  %v1207 = vcombine.high %v1199, %v1199
  %v1208 = vcombine.high %v1206, %v1206
  %v1209 = vcombine.low %v1182, %v1189
  %v1210 = vcombine.low %v1199, %v1206
  %v1212 = vunpack.c.l.s4 1983009808
  %v1213 = vunpack.c.0.s8 %v1212
  %v1214 = vlaneseq
  %v1215 = vshrl.u32 %v1214, 7
  %v1216 = vsub.s32 %v1213, %v1215
  %v1217 = vrot.slane %v1209, %v1216
  %v1219 = vunpack.c.l.s4 1983009808
  %v1220 = vunpack.c.0.s8 %v1219
  %v1221 = vlaneseq
  %v1222 = vshrl.u32 %v1221, 7
  %v1223 = vsub.s32 %v1220, %v1222
  %v1224 = vrot.slane %v1210, %v1223
  %v1225 = vcombine.low %v1217, %v1224
  %1227 = vst [vmem:[#allocation3 + $0xa] sm:$0xff] %v1225
  %v1228 = vcombine.low %v1190, %v1191
  %v1229 = vcombine.low %v1207, %v1208
  %v1231 = vunpack.c.l.s4 1983009808
  %v1232 = vunpack.c.0.s8 %v1231
  %v1233 = vlaneseq
  %v1234 = vshrl.u32 %v1233, 7
  %v1235 = vsub.s32 %v1232, %v1234
  %v1236 = vrot.slane %v1228, %v1235
  %v1238 = vunpack.c.l.s4 1983009808
  %v1239 = vunpack.c.0.s8 %v1238
  %v1240 = vlaneseq
  %v1241 = vshrl.u32 %v1240, 7
  %v1242 = vsub.s32 %v1239, %v1241
  %v1243 = vrot.slane %v1229, %v1242
  %v1244 = vcombine.low %v1236, %v1243
  %1246 = vst [vmem:[#allocation3 + $0x2] sm:$0xff] %v1244
  %v1247 = vld [vmem:[#allocation3] sm:$0xff]
  %v1248 = vld [vmem:[%s5] sm:$0xf]
  %v1249 = vld [vmem:[%s5 + $0x4] sm:$0xf]
  %v1250 = vld [vmem:[%s5 + $0x8] sm:$0xf]
  %v1251 = vld [vmem:[%s5 + $0xc] sm:$0xf]
  %v1252 = vld [vmem:[%s5 + $0x10] sm:$0xf]
  %v1253 = vld [vmem:[%s5 + $0x14] sm:$0xf]
  %v1254 = vld [vmem:[%s5 + $0x18] sm:$0xf]
  %v1255 = vld [vmem:[%s5 + $0x1c] sm:$0xf]
  %v1256 = vld [vmem:[%s5 + $0x20] sm:$0xf]
  %v1257 = vld [vmem:[%s5 + $0x24] sm:$0xf]
  %v1258 = vld [vmem:[%s5 + $0x28] sm:$0xf]
  %v1259 = vld [vmem:[%s5 + $0x2c] sm:$0xf]
  %v1260 = vld [vmem:[%s5 + $0x30] sm:$0xf]
  %v1261 = vld [vmem:[%s5 + $0x34] sm:$0xf]
  %v1262 = vld [vmem:[%s5 + $0x38] sm:$0xf]
  %v1263 = vld [vmem:[%s5 + $0x3c] sm:$0xf]
  %v1264 = vunpack.c.l.bf16 %v1248
  %v1265 = vunpack.c.l.bf16 %v1249
  %v1266 = vunpack.c.l.bf16 %v1250
  %v1267 = vunpack.c.l.bf16 %v1251
  %v1268 = vunpack.c.l.bf16 %v1252
  %v1269 = vunpack.c.l.bf16 %v1253
  %v1270 = vunpack.c.l.bf16 %v1254
  %v1271 = vunpack.c.l.bf16 %v1255
  %v1272 = vunpack.c.l.bf16 %v1256
  %v1273 = vunpack.c.l.bf16 %v1257
  %v1274 = vunpack.c.l.bf16 %v1258
  %v1275 = vunpack.c.l.bf16 %v1259
  %v1276 = vunpack.c.l.bf16 %v1260
  %v1277 = vunpack.c.l.bf16 %v1261
  %v1278 = vunpack.c.l.bf16 %v1262
  %v1279 = vunpack.c.l.bf16 %v1263
  %v1280 = vld [vmem:[#allocation3 + $0xa] sm:$0xff]
  %s1281 = scalar_lea.vmem %s5, 64
  %v1282 = vld [vmem:[%s1281] sm:$0xf]
  %v1283 = vld [vmem:[%s1281 + $0x4] sm:$0xf]
  %v1284 = vld [vmem:[%s1281 + $0x8] sm:$0xf]
  %v1285 = vld [vmem:[%s1281 + $0xc] sm:$0xf]
  %v1286 = vld [vmem:[%s1281 + $0x10] sm:$0xf]
  %v1287 = vld [vmem:[%s1281 + $0x14] sm:$0xf]
  %v1288 = vld [vmem:[%s1281 + $0x18] sm:$0xf]
  %v1289 = vld [vmem:[%s1281 + $0x1c] sm:$0xf]
  %v1290 = vld [vmem:[%s1281 + $0x20] sm:$0xf]
  %v1291 = vld [vmem:[%s1281 + $0x24] sm:$0xf]
  %v1292 = vld [vmem:[%s1281 + $0x28] sm:$0xf]
  %v1293 = vld [vmem:[%s1281 + $0x2c] sm:$0xf]
  %v1294 = vld [vmem:[%s1281 + $0x30] sm:$0xf]
  %v1295 = vld [vmem:[%s1281 + $0x34] sm:$0xf]
  %v1296 = vld [vmem:[%s1281 + $0x38] sm:$0xf]
  %v1297 = vld [vmem:[%s1281 + $0x3c] sm:$0xf]
  %v1298 = vunpack.c.l.bf16 %v1282
  %v1299 = vunpack.c.l.bf16 %v1283
  %v1300 = vunpack.c.l.bf16 %v1284
  %v1301 = vunpack.c.l.bf16 %v1285
  %v1302 = vunpack.c.l.bf16 %v1286
  %v1303 = vunpack.c.l.bf16 %v1287
  %v1304 = vunpack.c.l.bf16 %v1288
  %v1305 = vunpack.c.l.bf16 %v1289
  %v1306 = vunpack.c.l.bf16 %v1290
  %v1307 = vunpack.c.l.bf16 %v1291
  %v1308 = vunpack.c.l.bf16 %v1292
  %v1309 = vunpack.c.l.bf16 %v1293
  %v1310 = vunpack.c.l.bf16 %v1294
  %v1311 = vunpack.c.l.bf16 %v1295
  %v1312 = vunpack.c.l.bf16 %v1296
  %v1313 = vunpack.c.l.bf16 %v1297
  %1314 = vmatprep.subr.mxu0 0.0
  %1315 = vmatpush1.msra.mxu0 %v1313
  %1316 = vmatprep.subr.mxu0 0.0
  %1317 = vmatpush1.msra.mxu0 %v1312
  %1318 = vmatprep.subr.mxu0 0.0
  %1319 = vmatpush1.msra.mxu0 %v1311
  %1320 = vmatprep.subr.mxu0 0.0
  %1321 = vmatpush1.msra.mxu0 %v1310
  %1322 = vmatprep.subr.mxu0 0.0
  %1323 = vmatpush1.msra.mxu0 %v1309
  %1324 = vmatprep.subr.mxu0 0.0
  %1325 = vmatpush1.msra.mxu0 %v1308
  %1326 = vmatprep.subr.mxu0 0.0
  %1327 = vmatpush1.msra.mxu0 %v1307
  %1328 = vmatprep.subr.mxu0 0.0
  %1329 = vmatpush1.msra.mxu0 %v1306
  %1330 = vmatprep.subr.mxu0 0.0
  %1331 = vmatpush1.msra.mxu0 %v1305
  %1332 = vmatprep.subr.mxu0 0.0
  %1333 = vmatpush1.msra.mxu0 %v1304
  %1334 = vmatprep.subr.mxu0 0.0
  %1335 = vmatpush1.msra.mxu0 %v1303
  %1336 = vmatprep.subr.mxu0 0.0
  %1337 = vmatpush1.msra.mxu0 %v1302
  %1338 = vmatprep.subr.mxu0 0.0
  %1339 = vmatpush1.msra.mxu0 %v1301
  %1340 = vmatprep.subr.mxu0 0.0
  %1341 = vmatpush1.msra.mxu0 %v1300
  %1342 = vmatprep.subr.mxu0 0.0
  %1343 = vmatpush1.msra.mxu0 %v1299
  %1344 = vmatprep.subr.mxu0 0.0
  %1345 = vmatpush1.msra.mxu0 %v1298
  %1346 = vmatprep.subr.mxu0 0.0
  %1347 = vmatpush2.msra.mxu0 0.0
  %1348 = vmatprep.subr.mxu0 0.0
  %1349 = vmatpush2.msra.mxu0 0.0
  %1350 = vmatprep.subr.mxu0 0.0
  %1351 = vmatpush2.msra.mxu0 0.0
  %1352 = vmatprep.subr.mxu0 0.0
  %1353 = vmatpush2.msra.mxu0 0.0
  %1354 = vmatprep.subr.mxu0 0.0
  %1355 = vmatpush2.msra.mxu0 0.0
  %1356 = vmatprep.subr.mxu0 0.0
  %1357 = vmatpush2.msra.mxu0 0.0
  %1358 = vmatprep.subr.mxu0 0.0
  %1359 = vmatpush2.msra.mxu0 0.0
  %1360 = vmatprep.subr.mxu0 0.0
  %1361 = vmatpush2.msra.mxu0 0.0
  %1362 = vmatprep.subr.mxu0 0.0
  %1363 = vmatpush2.msra.mxu0 0.0
  %1364 = vmatprep.subr.mxu0 0.0
  %1365 = vmatpush2.msra.mxu0 0.0
  %1366 = vmatprep.subr.mxu0 0.0
  %1367 = vmatpush2.msra.mxu0 0.0
  %1368 = vmatprep.subr.mxu0 0.0
  %1369 = vmatpush2.msra.mxu0 0.0
  %1370 = vmatprep.subr.mxu0 0.0
  %1371 = vmatpush2.msra.mxu0 0.0
  %1372 = vmatprep.subr.mxu0 0.0
  %1373 = vmatpush2.msra.mxu0 0.0
  %1374 = vmatprep.subr.mxu0 0.0
  %1375 = vmatpush2.msra.mxu0 0.0
  %1376 = vmatprep.subr.mxu0 0.0
  %1377 = vmatpush2.msra.mxu0 0.0
  %1378 = vmatprep.mubr.f32.mxu0 0.0
  %1379 = vmatmul.mubr.f32.gmra.mxu0 %v1280
  %v1380 = vpop.f32.mrf.mxu0
  %v1381 = vadd.f32 0.0, %v1380
  %v1382 = vpop.f32.mrf.mxu0
  %1383 = vdwg.mxu0
  %1384 = vmatprep.subr.mxu0 0.0
  %1385 = vmatpush1.msra.mxu0 %v1279
  %1386 = vmatprep.subr.mxu0 0.0
  %1387 = vmatpush1.msra.mxu0 %v1278
  %1388 = vmatprep.subr.mxu0 0.0
  %1389 = vmatpush1.msra.mxu0 %v1277
  %1390 = vmatprep.subr.mxu0 0.0
  %1391 = vmatpush1.msra.mxu0 %v1276
  %1392 = vmatprep.subr.mxu0 0.0
  %1393 = vmatpush1.msra.mxu0 %v1275
  %1394 = vmatprep.subr.mxu0 0.0
  %1395 = vmatpush1.msra.mxu0 %v1274
  %1396 = vmatprep.subr.mxu0 0.0
  %1397 = vmatpush1.msra.mxu0 %v1273
  %1398 = vmatprep.subr.mxu0 0.0
  %1399 = vmatpush1.msra.mxu0 %v1272
  %1400 = vmatprep.subr.mxu0 0.0
  %1401 = vmatpush1.msra.mxu0 %v1271
  %1402 = vmatprep.subr.mxu0 0.0
  %1403 = vmatpush1.msra.mxu0 %v1270
  %1404 = vmatprep.subr.mxu0 0.0
  %1405 = vmatpush1.msra.mxu0 %v1269
  %1406 = vmatprep.subr.mxu0 0.0
  %1407 = vmatpush1.msra.mxu0 %v1268
  %1408 = vmatprep.subr.mxu0 0.0
  %1409 = vmatpush1.msra.mxu0 %v1267
  %1410 = vmatprep.subr.mxu0 0.0
  %1411 = vmatpush1.msra.mxu0 %v1266
  %1412 = vmatprep.subr.mxu0 0.0
  %1413 = vmatpush1.msra.mxu0 %v1265
  %1414 = vmatprep.subr.mxu0 0.0
  %1415 = vmatpush1.msra.mxu0 %v1264
  %1416 = vmatprep.subr.mxu0 0.0
  %1417 = vmatpush2.msra.mxu0 0.0
  %1418 = vmatprep.subr.mxu0 0.0
  %1419 = vmatpush2.msra.mxu0 0.0
  %1420 = vmatprep.subr.mxu0 0.0
  %1421 = vmatpush2.msra.mxu0 0.0
  %1422 = vmatprep.subr.mxu0 0.0
  %1423 = vmatpush2.msra.mxu0 0.0
  %1424 = vmatprep.subr.mxu0 0.0
  %1425 = vmatpush2.msra.mxu0 0.0
  %1426 = vmatprep.subr.mxu0 0.0
  %1427 = vmatpush2.msra.mxu0 0.0
  %1428 = vmatprep.subr.mxu0 0.0
  %1429 = vmatpush2.msra.mxu0 0.0
  %1430 = vmatprep.subr.mxu0 0.0
  %1431 = vmatpush2.msra.mxu0 0.0
  %1432 = vmatprep.subr.mxu0 0.0
  %1433 = vmatpush2.msra.mxu0 0.0
  %1434 = vmatprep.subr.mxu0 0.0
  %1435 = vmatpush2.msra.mxu0 0.0
  %1436 = vmatprep.subr.mxu0 0.0
  %1437 = vmatpush2.msra.mxu0 0.0
  %1438 = vmatprep.subr.mxu0 0.0
  %1439 = vmatpush2.msra.mxu0 0.0
  %1440 = vmatprep.subr.mxu0 0.0
  %1441 = vmatpush2.msra.mxu0 0.0
  %1442 = vmatprep.subr.mxu0 0.0
  %1443 = vmatpush2.msra.mxu0 0.0
  %1444 = vmatprep.subr.mxu0 0.0
  %1445 = vmatpush2.msra.mxu0 0.0
  %1446 = vmatprep.subr.mxu0 0.0
  %1447 = vmatpush2.msra.mxu0 0.0
  %1448 = vmatprep.mubr.f32.mxu0 0.0
  %1449 = vmatmul.mubr.f32.gmra.mxu0 %v1247
  %v1450 = vpop.f32.mrf.mxu0
  %v1451 = vadd.f32 %v1381, %v1450
  %v1452 = vpop.f32.mrf.mxu0
  %1453 = vdwg.mxu0
  %v1454 = vld [vmem:[#allocation3 + $0x2] sm:$0xff]
  %s1455 = scalar_lea.vmem %s5, 128
  %v1456 = vld [vmem:[%s1455] sm:$0xf]
  %v1457 = vld [vmem:[%s1455 + $0x4] sm:$0xf]
  %v1458 = vld [vmem:[%s1455 + $0x8] sm:$0xf]
  %v1459 = vld [vmem:[%s1455 + $0xc] sm:$0xf]
  %v1460 = vld [vmem:[%s1455 + $0x10] sm:$0xf]
  %v1461 = vld [vmem:[%s1455 + $0x14] sm:$0xf]
  %v1462 = vld [vmem:[%s1455 + $0x18] sm:$0xf]
  %v1463 = vld [vmem:[%s1455 + $0x1c] sm:$0xf]
  %v1464 = vld [vmem:[%s1455 + $0x20] sm:$0xf]
  %v1465 = vld [vmem:[%s1455 + $0x24] sm:$0xf]
  %v1466 = vld [vmem:[%s1455 + $0x28] sm:$0xf]
  %v1467 = vld [vmem:[%s1455 + $0x2c] sm:$0xf]
  %v1468 = vld [vmem:[%s1455 + $0x30] sm:$0xf]
  %v1469 = vld [vmem:[%s1455 + $0x34] sm:$0xf]
  %v1470 = vld [vmem:[%s1455 + $0x38] sm:$0xf]
  %v1471 = vld [vmem:[%s1455 + $0x3c] sm:$0xf]
  %v1472 = vunpack.c.l.bf16 %v1456
  %v1473 = vunpack.c.l.bf16 %v1457
  %v1474 = vunpack.c.l.bf16 %v1458
  %v1475 = vunpack.c.l.bf16 %v1459
  %v1476 = vunpack.c.l.bf16 %v1460
  %v1477 = vunpack.c.l.bf16 %v1461
  %v1478 = vunpack.c.l.bf16 %v1462
  %v1479 = vunpack.c.l.bf16 %v1463
  %v1480 = vunpack.c.l.bf16 %v1464
  %v1481 = vunpack.c.l.bf16 %v1465
  %v1482 = vunpack.c.l.bf16 %v1466
  %v1483 = vunpack.c.l.bf16 %v1467
  %v1484 = vunpack.c.l.bf16 %v1468
  %v1485 = vunpack.c.l.bf16 %v1469
  %v1486 = vunpack.c.l.bf16 %v1470
  %v1487 = vunpack.c.l.bf16 %v1471
  %1488 = vmatprep.subr.mxu0 0.0
  %1489 = vmatpush1.msra.mxu0 %v1487
  %1490 = vmatprep.subr.mxu0 0.0
  %1491 = vmatpush1.msra.mxu0 %v1486
  %1492 = vmatprep.subr.mxu0 0.0
  %1493 = vmatpush1.msra.mxu0 %v1485
  %1494 = vmatprep.subr.mxu0 0.0
  %1495 = vmatpush1.msra.mxu0 %v1484
  %1496 = vmatprep.subr.mxu0 0.0
  %1497 = vmatpush1.msra.mxu0 %v1483
  %1498 = vmatprep.subr.mxu0 0.0
  %1499 = vmatpush1.msra.mxu0 %v1482
  %1500 = vmatprep.subr.mxu0 0.0
  %1501 = vmatpush1.msra.mxu0 %v1481
  %1502 = vmatprep.subr.mxu0 0.0
  %1503 = vmatpush1.msra.mxu0 %v1480
  %1504 = vmatprep.subr.mxu0 0.0
  %1505 = vmatpush1.msra.mxu0 %v1479
  %1506 = vmatprep.subr.mxu0 0.0
  %1507 = vmatpush1.msra.mxu0 %v1478
  %1508 = vmatprep.subr.mxu0 0.0
  %1509 = vmatpush1.msra.mxu0 %v1477
  %1510 = vmatprep.subr.mxu0 0.0
  %1511 = vmatpush1.msra.mxu0 %v1476
  %1512 = vmatprep.subr.mxu0 0.0
  %1513 = vmatpush1.msra.mxu0 %v1475
  %1514 = vmatprep.subr.mxu0 0.0
  %1515 = vmatpush1.msra.mxu0 %v1474
  %1516 = vmatprep.subr.mxu0 0.0
  %1517 = vmatpush1.msra.mxu0 %v1473
  %1518 = vmatprep.subr.mxu0 0.0
  %1519 = vmatpush1.msra.mxu0 %v1472
  %1520 = vmatprep.subr.mxu0 0.0
  %1521 = vmatpush2.msra.mxu0 0.0
  %1522 = vmatprep.subr.mxu0 0.0
  %1523 = vmatpush2.msra.mxu0 0.0
  %1524 = vmatprep.subr.mxu0 0.0
  %1525 = vmatpush2.msra.mxu0 0.0
  %1526 = vmatprep.subr.mxu0 0.0
  %1527 = vmatpush2.msra.mxu0 0.0
  %1528 = vmatprep.subr.mxu0 0.0
  %1529 = vmatpush2.msra.mxu0 0.0
  %1530 = vmatprep.subr.mxu0 0.0
  %1531 = vmatpush2.msra.mxu0 0.0
  %1532 = vmatprep.subr.mxu0 0.0
  %1533 = vmatpush2.msra.mxu0 0.0
  %1534 = vmatprep.subr.mxu0 0.0
  %1535 = vmatpush2.msra.mxu0 0.0
  %1536 = vmatprep.subr.mxu0 0.0
  %1537 = vmatpush2.msra.mxu0 0.0
  %1538 = vmatprep.subr.mxu0 0.0
  %1539 = vmatpush2.msra.mxu0 0.0
  %1540 = vmatprep.subr.mxu0 0.0
  %1541 = vmatpush2.msra.mxu0 0.0
  %1542 = vmatprep.subr.mxu0 0.0
  %1543 = vmatpush2.msra.mxu0 0.0
  %1544 = vmatprep.subr.mxu0 0.0
  %1545 = vmatpush2.msra.mxu0 0.0
  %1546 = vmatprep.subr.mxu0 0.0
  %1547 = vmatpush2.msra.mxu0 0.0
  %1548 = vmatprep.subr.mxu0 0.0
  %1549 = vmatpush2.msra.mxu0 0.0
  %1550 = vmatprep.subr.mxu0 0.0
  %1551 = vmatpush2.msra.mxu0 0.0
  %1552 = vmatprep.mubr.f32.mxu0 0.0
  %1553 = vmatmul.mubr.f32.gmra.mxu0 %v1454
  %v1554 = vpop.f32.mrf.mxu0
  %v1555 = vadd.f32 0.0, %v1554
  %v1556 = vpop.f32.mrf.mxu0
  %1557 = vdwg.mxu0
  %v1558 = vadd.f32 %v1451, %v1555
  %v1559 = vld [vmem:[#allocation3 + $0xc] sm:$0xff]
  %s1560 = scalar_lea.vmem %s5, 192
  %v1561 = vld [vmem:[%s1560] sm:$0xf]
  %v1562 = vld [vmem:[%s1560 + $0x4] sm:$0xf]
  %v1563 = vld [vmem:[%s1560 + $0x8] sm:$0xf]
  %v1564 = vld [vmem:[%s1560 + $0xc] sm:$0xf]
  %v1565 = vld [vmem:[%s1560 + $0x10] sm:$0xf]
  %v1566 = vld [vmem:[%s1560 + $0x14] sm:$0xf]
  %v1567 = vld [vmem:[%s1560 + $0x18] sm:$0xf]
  %v1568 = vld [vmem:[%s1560 + $0x1c] sm:$0xf]
  %v1569 = vld [vmem:[%s1560 + $0x20] sm:$0xf]
  %v1570 = vld [vmem:[%s1560 + $0x24] sm:$0xf]
  %v1571 = vld [vmem:[%s1560 + $0x28] sm:$0xf]
  %v1572 = vld [vmem:[%s1560 + $0x2c] sm:$0xf]
  %v1573 = vld [vmem:[%s1560 + $0x30] sm:$0xf]
  %v1574 = vld [vmem:[%s1560 + $0x34] sm:$0xf]
  %v1575 = vld [vmem:[%s1560 + $0x38] sm:$0xf]
  %v1576 = vld [vmem:[%s1560 + $0x3c] sm:$0xf]
  %v1577 = vunpack.c.l.bf16 %v1561
  %v1578 = vunpack.c.l.bf16 %v1562
  %v1579 = vunpack.c.l.bf16 %v1563
  %v1580 = vunpack.c.l.bf16 %v1564
  %v1581 = vunpack.c.l.bf16 %v1565
  %v1582 = vunpack.c.l.bf16 %v1566
  %v1583 = vunpack.c.l.bf16 %v1567
  %v1584 = vunpack.c.l.bf16 %v1568
  %v1585 = vunpack.c.l.bf16 %v1569
  %v1586 = vunpack.c.l.bf16 %v1570
  %v1587 = vunpack.c.l.bf16 %v1571
  %v1588 = vunpack.c.l.bf16 %v1572
  %v1589 = vunpack.c.l.bf16 %v1573
  %v1590 = vunpack.c.l.bf16 %v1574
  %v1591 = vunpack.c.l.bf16 %v1575
  %v1592 = vunpack.c.l.bf16 %v1576
  %1593 = vmatprep.subr.mxu0 0.0
  %1594 = vmatpush1.msra.mxu0 %v1592
  %1595 = vmatprep.subr.mxu0 0.0
  %1596 = vmatpush1.msra.mxu0 %v1591
  %1597 = vmatprep.subr.mxu0 0.0
  %1598 = vmatpush1.msra.mxu0 %v1590
  %1599 = vmatprep.subr.mxu0 0.0
  %1600 = vmatpush1.msra.mxu0 %v1589
  %1601 = vmatprep.subr.mxu0 0.0
  %1602 = vmatpush1.msra.mxu0 %v1588
  %1603 = vmatprep.subr.mxu0 0.0
  %1604 = vmatpush1.msra.mxu0 %v1587
  %1605 = vmatprep.subr.mxu0 0.0
  %1606 = vmatpush1.msra.mxu0 %v1586
  %1607 = vmatprep.subr.mxu0 0.0
  %1608 = vmatpush1.msra.mxu0 %v1585
  %1609 = vmatprep.subr.mxu0 0.0
  %1610 = vmatpush1.msra.mxu0 %v1584
  %1611 = vmatprep.subr.mxu0 0.0
  %1612 = vmatpush1.msra.mxu0 %v1583
  %1613 = vmatprep.subr.mxu0 0.0
  %1614 = vmatpush1.msra.mxu0 %v1582
  %1615 = vmatprep.subr.mxu0 0.0
  %1616 = vmatpush1.msra.mxu0 %v1581
  %1617 = vmatprep.subr.mxu0 0.0
  %1618 = vmatpush1.msra.mxu0 %v1580
  %1619 = vmatprep.subr.mxu0 0.0
  %1620 = vmatpush1.msra.mxu0 %v1579
  %1621 = vmatprep.subr.mxu0 0.0
  %1622 = vmatpush1.msra.mxu0 %v1578
  %1623 = vmatprep.subr.mxu0 0.0
  %1624 = vmatpush1.msra.mxu0 %v1577
  %1625 = vmatprep.subr.mxu0 0.0
  %1626 = vmatpush2.msra.mxu0 0.0
  %1627 = vmatprep.subr.mxu0 0.0
  %1628 = vmatpush2.msra.mxu0 0.0
  %1629 = vmatprep.subr.mxu0 0.0
  %1630 = vmatpush2.msra.mxu0 0.0
  %1631 = vmatprep.subr.mxu0 0.0
  %1632 = vmatpush2.msra.mxu0 0.0
  %1633 = vmatprep.subr.mxu0 0.0
  %1634 = vmatpush2.msra.mxu0 0.0
  %1635 = vmatprep.subr.mxu0 0.0
  %1636 = vmatpush2.msra.mxu0 0.0
  %1637 = vmatprep.subr.mxu0 0.0
  %1638 = vmatpush2.msra.mxu0 0.0
  %1639 = vmatprep.subr.mxu0 0.0
  %1640 = vmatpush2.msra.mxu0 0.0
  %1641 = vmatprep.subr.mxu0 0.0
  %1642 = vmatpush2.msra.mxu0 0.0
  %1643 = vmatprep.subr.mxu0 0.0
  %1644 = vmatpush2.msra.mxu0 0.0
  %1645 = vmatprep.subr.mxu0 0.0
  %1646 = vmatpush2.msra.mxu0 0.0
  %1647 = vmatprep.subr.mxu0 0.0
  %1648 = vmatpush2.msra.mxu0 0.0
  %1649 = vmatprep.subr.mxu0 0.0
  %1650 = vmatpush2.msra.mxu0 0.0
  %1651 = vmatprep.subr.mxu0 0.0
  %1652 = vmatpush2.msra.mxu0 0.0
  %1653 = vmatprep.subr.mxu0 0.0
  %1654 = vmatpush2.msra.mxu0 0.0
  %1655 = vmatprep.subr.mxu0 0.0
  %1656 = vmatpush2.msra.mxu0 0.0
  %1657 = vmatprep.mubr.f32.mxu0 0.0
  %1658 = vmatmul.mubr.f32.gmra.mxu0 %v1559
  %v1659 = vpop.f32.mrf.mxu0
  %v1660 = vadd.f32 0.0, %v1659
  %v1661 = vpop.f32.mrf.mxu0
  %1662 = vdwg.mxu0
  %v1663 = vadd.f32 %v1558, %v1660
  %v1664 = vld [vmem:[%s6] sm:$0x1]
  %v1666 = vlaneseq
  %v1667 = vshrl.u32 %v1666, 7
  %v1668 = vsub.s32 0, %v1667
  %v1669 = vrot.slane %v1664, %v1668
  %v1671 = vadd.f32 %v1663, %v1669
  %vm1672 = vcmp.ge.f32.partialorder %v1671, 0.0
  %v1673 = vmul.f32 %v1671, 0.2
  %v1674 = vsel %vm1672, %v1671, %v1673
  %1675 = vst [vmem:[#allocation4 + $0x2] sm:$0xff] %v1674
  %v1676 = vld [vmem:[#allocation4] sm:$0x3f]
  %v1677 = vld [vmem:[%s7] sm:$0xff]
  %v1678 = vld [vmem:[%s7 + $0x8] sm:$0xff]
  %v1679 = vld [vmem:[%s7 + $0x10] sm:$0xff]
  %v1680 = vld [vmem:[%s7 + $0x18] sm:$0xff]
  %v1681 = vld [vmem:[%s7 + $0x20] sm:$0xff]
  %v1682 = vld [vmem:[%s7 + $0x28] sm:$0xff]
  %v1683 = vld [vmem:[%s7 + $0x30] sm:$0xff]
  %v1684 = vld [vmem:[%s7 + $0x38] sm:$0xff]
  %v1685 = vld [vmem:[%s7 + $0x40] sm:$0xff]
  %v1686 = vld [vmem:[%s7 + $0x48] sm:$0xff]
  %v1687 = vld [vmem:[%s7 + $0x50] sm:$0xff]
  %v1688 = vld [vmem:[%s7 + $0x58] sm:$0xff]
  %v1689 = vld [vmem:[%s7 + $0x60] sm:$0xff]
  %v1690 = vld [vmem:[%s7 + $0x68] sm:$0xff]
  %v1691 = vld [vmem:[%s7 + $0x70] sm:$0xff]
  %v1692 = vld [vmem:[%s7 + $0x78] sm:$0xff]
  %v1693 = vunpack.c.l.bf16 %v1677
  %v1694 = vunpack.c.h.bf16 %v1677
  %v1695 = vunpack.c.l.bf16 %v1678
  %v1696 = vunpack.c.h.bf16 %v1678
  %v1697 = vunpack.c.l.bf16 %v1679
  %v1698 = vunpack.c.h.bf16 %v1679
  %v1699 = vunpack.c.l.bf16 %v1680
  %v1700 = vunpack.c.h.bf16 %v1680
  %v1701 = vunpack.c.l.bf16 %v1681
  %v1702 = vunpack.c.h.bf16 %v1681
  %v1703 = vunpack.c.l.bf16 %v1682
  %v1704 = vunpack.c.h.bf16 %v1682
  %v1705 = vunpack.c.l.bf16 %v1683
  %v1706 = vunpack.c.h.bf16 %v1683
  %v1707 = vunpack.c.l.bf16 %v1684
  %v1708 = vunpack.c.h.bf16 %v1684
  %v1709 = vunpack.c.l.bf16 %v1685
  %v1710 = vunpack.c.h.bf16 %v1685
  %v1711 = vunpack.c.l.bf16 %v1686
  %v1712 = vunpack.c.h.bf16 %v1686
  %v1713 = vunpack.c.l.bf16 %v1687
  %v1714 = vunpack.c.h.bf16 %v1687
  %v1715 = vunpack.c.l.bf16 %v1688
  %v1716 = vunpack.c.h.bf16 %v1688
  %v1717 = vunpack.c.l.bf16 %v1689
  %v1718 = vunpack.c.h.bf16 %v1689
  %v1719 = vunpack.c.l.bf16 %v1690
  %v1720 = vunpack.c.h.bf16 %v1690
  %v1721 = vunpack.c.l.bf16 %v1691
  %v1722 = vunpack.c.h.bf16 %v1691
  %v1723 = vunpack.c.l.bf16 %v1692
  %v1724 = vunpack.c.h.bf16 %v1692
  %v1725 = vld [vmem:[#allocation4 + $0x2] sm:$0x3f]
  %s1726 = scalar_lea.vmem %s7, 128
  %v1727 = vld [vmem:[%s1726] sm:$0xff]
  %v1728 = vld [vmem:[%s1726 + $0x8] sm:$0xff]
  %v1729 = vld [vmem:[%s1726 + $0x10] sm:$0xff]
  %v1730 = vld [vmem:[%s1726 + $0x18] sm:$0xff]
  %v1731 = vld [vmem:[%s1726 + $0x20] sm:$0xff]
  %v1732 = vld [vmem:[%s1726 + $0x28] sm:$0xff]
  %v1733 = vld [vmem:[%s1726 + $0x30] sm:$0xff]
  %v1734 = vld [vmem:[%s1726 + $0x38] sm:$0xff]
  %v1735 = vld [vmem:[%s1726 + $0x40] sm:$0xff]
  %v1736 = vld [vmem:[%s1726 + $0x48] sm:$0xff]
  %v1737 = vld [vmem:[%s1726 + $0x50] sm:$0xff]
  %v1738 = vld [vmem:[%s1726 + $0x58] sm:$0xff]
  %v1739 = vld [vmem:[%s1726 + $0x60] sm:$0xff]
  %v1740 = vld [vmem:[%s1726 + $0x68] sm:$0xff]
  %v1741 = vld [vmem:[%s1726 + $0x70] sm:$0xff]
  %v1742 = vld [vmem:[%s1726 + $0x78] sm:$0xff]
  %v1743 = vunpack.c.l.bf16 %v1727
  %v1744 = vunpack.c.h.bf16 %v1727
  %v1745 = vunpack.c.l.bf16 %v1728
  %v1746 = vunpack.c.h.bf16 %v1728
  %v1747 = vunpack.c.l.bf16 %v1729
  %v1748 = vunpack.c.h.bf16 %v1729
  %v1749 = vunpack.c.l.bf16 %v1730
  %v1750 = vunpack.c.h.bf16 %v1730
  %v1751 = vunpack.c.l.bf16 %v1731
  %v1752 = vunpack.c.h.bf16 %v1731
  %v1753 = vunpack.c.l.bf16 %v1732
  %v1754 = vunpack.c.h.bf16 %v1732
  %v1755 = vunpack.c.l.bf16 %v1733
  %v1756 = vunpack.c.h.bf16 %v1733
  %v1757 = vunpack.c.l.bf16 %v1734
  %v1758 = vunpack.c.h.bf16 %v1734
  %v1759 = vunpack.c.l.bf16 %v1735
  %v1760 = vunpack.c.h.bf16 %v1735
  %v1761 = vunpack.c.l.bf16 %v1736
  %v1762 = vunpack.c.h.bf16 %v1736
  %v1763 = vunpack.c.l.bf16 %v1737
  %v1764 = vunpack.c.h.bf16 %v1737
  %v1765 = vunpack.c.l.bf16 %v1738
  %v1766 = vunpack.c.h.bf16 %v1738
  %v1767 = vunpack.c.l.bf16 %v1739
  %v1768 = vunpack.c.h.bf16 %v1739
  %v1769 = vunpack.c.l.bf16 %v1740
  %v1770 = vunpack.c.h.bf16 %v1740
  %v1771 = vunpack.c.l.bf16 %v1741
  %v1772 = vunpack.c.h.bf16 %v1741
  %v1773 = vunpack.c.l.bf16 %v1742
  %v1774 = vunpack.c.h.bf16 %v1742
  %1775 = vmatprep.subr.mxu0 %v1774
  %1776 = vmatpush1.msra.mxu0 %v1773
  %1777 = vmatprep.subr.mxu0 %v1772
  %1778 = vmatpush1.msra.mxu0 %v1771
  %1779 = vmatprep.subr.mxu0 %v1770
  %1780 = vmatpush1.msra.mxu0 %v1769
  %1781 = vmatprep.subr.mxu0 %v1768
  %1782 = vmatpush1.msra.mxu0 %v1767
  %1783 = vmatprep.subr.mxu0 %v1766
  %1784 = vmatpush1.msra.mxu0 %v1765
  %1785 = vmatprep.subr.mxu0 %v1764
  %1786 = vmatpush1.msra.mxu0 %v1763
  %1787 = vmatprep.subr.mxu0 %v1762
  %1788 = vmatpush1.msra.mxu0 %v1761
  %1789 = vmatprep.subr.mxu0 %v1760
  %1790 = vmatpush1.msra.mxu0 %v1759
  %1791 = vmatprep.subr.mxu0 %v1758
  %1792 = vmatpush1.msra.mxu0 %v1757
  %1793 = vmatprep.subr.mxu0 %v1756
  %1794 = vmatpush1.msra.mxu0 %v1755
  %1795 = vmatprep.subr.mxu0 %v1754
  %1796 = vmatpush1.msra.mxu0 %v1753
  %1797 = vmatprep.subr.mxu0 %v1752
  %1798 = vmatpush1.msra.mxu0 %v1751
  %1799 = vmatprep.subr.mxu0 %v1750
  %1800 = vmatpush1.msra.mxu0 %v1749
  %1801 = vmatprep.subr.mxu0 %v1748
  %1802 = vmatpush1.msra.mxu0 %v1747
  %1803 = vmatprep.subr.mxu0 %v1746
  %1804 = vmatpush1.msra.mxu0 %v1745
  %1805 = vmatprep.subr.mxu0 %v1744
  %1806 = vmatpush1.msra.mxu0 %v1743
  %1807 = vmatprep.subr.mxu0 0.0
  %1808 = vmatpush2.msra.mxu0 0.0
  %1809 = vmatprep.subr.mxu0 0.0
  %1810 = vmatpush2.msra.mxu0 0.0
  %1811 = vmatprep.subr.mxu0 0.0
  %1812 = vmatpush2.msra.mxu0 0.0
  %1813 = vmatprep.subr.mxu0 0.0
  %1814 = vmatpush2.msra.mxu0 0.0
  %1815 = vmatprep.subr.mxu0 0.0
  %1816 = vmatpush2.msra.mxu0 0.0
  %1817 = vmatprep.subr.mxu0 0.0
  %1818 = vmatpush2.msra.mxu0 0.0
  %1819 = vmatprep.subr.mxu0 0.0
  %1820 = vmatpush2.msra.mxu0 0.0
  %1821 = vmatprep.subr.mxu0 0.0
  %1822 = vmatpush2.msra.mxu0 0.0
  %1823 = vmatprep.subr.mxu0 0.0
  %1824 = vmatpush2.msra.mxu0 0.0
  %1825 = vmatprep.subr.mxu0 0.0
  %1826 = vmatpush2.msra.mxu0 0.0
  %1827 = vmatprep.subr.mxu0 0.0
  %1828 = vmatpush2.msra.mxu0 0.0
  %1829 = vmatprep.subr.mxu0 0.0
  %1830 = vmatpush2.msra.mxu0 0.0
  %1831 = vmatprep.subr.mxu0 0.0
  %1832 = vmatpush2.msra.mxu0 0.0
  %1833 = vmatprep.subr.mxu0 0.0
  %1834 = vmatpush2.msra.mxu0 0.0
  %1835 = vmatprep.subr.mxu0 0.0
  %1836 = vmatpush2.msra.mxu0 0.0
  %1837 = vmatprep.subr.mxu0 0.0
  %1838 = vmatpush2.msra.mxu0 0.0
  %1839 = vmatprep.mubr.f32.mxu0 0.0
  %1840 = vmatmul.mubr.f32.gmra.mxu0 %v1725
  %v1841 = vpop.f32.mrf.mxu0
  %v1842 = vadd.f32 0.0, %v1841
  %v1843 = vpop.f32.mrf.mxu0
  %v1844 = vadd.f32 0.0, %v1843
  %1845 = vdwg.mxu0
  %1846 = vmatprep.subr.mxu0 %v1724
  %1847 = vmatpush1.msra.mxu0 %v1723
  %1848 = vmatprep.subr.mxu0 %v1722
  %1849 = vmatpush1.msra.mxu0 %v1721
  %1850 = vmatprep.subr.mxu0 %v1720
  %1851 = vmatpush1.msra.mxu0 %v1719
  %1852 = vmatprep.subr.mxu0 %v1718
  %1853 = vmatpush1.msra.mxu0 %v1717
  %1854 = vmatprep.subr.mxu0 %v1716
  %1855 = vmatpush1.msra.mxu0 %v1715
  %1856 = vmatprep.subr.mxu0 %v1714
  %1857 = vmatpush1.msra.mxu0 %v1713
  %1858 = vmatprep.subr.mxu0 %v1712
  %1859 = vmatpush1.msra.mxu0 %v1711
  %1860 = vmatprep.subr.mxu0 %v1710
  %1861 = vmatpush1.msra.mxu0 %v1709
  %1862 = vmatprep.subr.mxu0 %v1708
  %1863 = vmatpush1.msra.mxu0 %v1707
  %1864 = vmatprep.subr.mxu0 %v1706
  %1865 = vmatpush1.msra.mxu0 %v1705
  %1866 = vmatprep.subr.mxu0 %v1704
  %1867 = vmatpush1.msra.mxu0 %v1703
  %1868 = vmatprep.subr.mxu0 %v1702
  %1869 = vmatpush1.msra.mxu0 %v1701
  %1870 = vmatprep.subr.mxu0 %v1700
  %1871 = vmatpush1.msra.mxu0 %v1699
  %1872 = vmatprep.subr.mxu0 %v1698
  %1873 = vmatpush1.msra.mxu0 %v1697
  %1874 = vmatprep.subr.mxu0 %v1696
  %1875 = vmatpush1.msra.mxu0 %v1695
  %1876 = vmatprep.subr.mxu0 %v1694
  %1877 = vmatpush1.msra.mxu0 %v1693
  %1878 = vmatprep.subr.mxu0 0.0
  %1879 = vmatpush2.msra.mxu0 0.0
  %1880 = vmatprep.subr.mxu0 0.0
  %1881 = vmatpush2.msra.mxu0 0.0
  %1882 = vmatprep.subr.mxu0 0.0
  %1883 = vmatpush2.msra.mxu0 0.0
  %1884 = vmatprep.subr.mxu0 0.0
  %1885 = vmatpush2.msra.mxu0 0.0
  %1886 = vmatprep.subr.mxu0 0.0
  %1887 = vmatpush2.msra.mxu0 0.0
  %1888 = vmatprep.subr.mxu0 0.0
  %1889 = vmatpush2.msra.mxu0 0.0
  %1890 = vmatprep.subr.mxu0 0.0
  %1891 = vmatpush2.msra.mxu0 0.0
  %1892 = vmatprep.subr.mxu0 0.0
  %1893 = vmatpush2.msra.mxu0 0.0
  %1894 = vmatprep.subr.mxu0 0.0
  %1895 = vmatpush2.msra.mxu0 0.0
  %1896 = vmatprep.subr.mxu0 0.0
  %1897 = vmatpush2.msra.mxu0 0.0
  %1898 = vmatprep.subr.mxu0 0.0
  %1899 = vmatpush2.msra.mxu0 0.0
  %1900 = vmatprep.subr.mxu0 0.0
  %1901 = vmatpush2.msra.mxu0 0.0
  %1902 = vmatprep.subr.mxu0 0.0
  %1903 = vmatpush2.msra.mxu0 0.0
  %1904 = vmatprep.subr.mxu0 0.0
  %1905 = vmatpush2.msra.mxu0 0.0
  %1906 = vmatprep.subr.mxu0 0.0
  %1907 = vmatpush2.msra.mxu0 0.0
  %1908 = vmatprep.subr.mxu0 0.0
  %1909 = vmatpush2.msra.mxu0 0.0
  %1910 = vmatprep.mubr.f32.mxu0 0.0
  %1911 = vmatmul.mubr.f32.gmra.mxu0 %v1676
  %v1912 = vpop.f32.mrf.mxu0
  %v1913 = vadd.f32 %v1842, %v1912
  %v1914 = vpop.f32.mrf.mxu0
  %v1915 = vadd.f32 %v1844, %v1914
  %1916 = vdwg.mxu0
  %v1917 = vld [vmem:[#allocation4 + $0x4] sm:$0x3f]
  %s1918 = scalar_lea.vmem %s7, 256
  %v1919 = vld [vmem:[%s1918] sm:$0xff]
  %v1920 = vld [vmem:[%s1918 + $0x8] sm:$0xff]
  %v1921 = vld [vmem:[%s1918 + $0x10] sm:$0xff]
  %v1922 = vld [vmem:[%s1918 + $0x18] sm:$0xff]
  %v1923 = vld [vmem:[%s1918 + $0x20] sm:$0xff]
  %v1924 = vld [vmem:[%s1918 + $0x28] sm:$0xff]
  %v1925 = vld [vmem:[%s1918 + $0x30] sm:$0xff]
  %v1926 = vld [vmem:[%s1918 + $0x38] sm:$0xff]
  %v1927 = vld [vmem:[%s1918 + $0x40] sm:$0xff]
  %v1928 = vld [vmem:[%s1918 + $0x48] sm:$0xff]
  %v1929 = vld [vmem:[%s1918 + $0x50] sm:$0xff]
  %v1930 = vld [vmem:[%s1918 + $0x58] sm:$0xff]
  %v1931 = vld [vmem:[%s1918 + $0x60] sm:$0xff]
  %v1932 = vld [vmem:[%s1918 + $0x68] sm:$0xff]
  %v1933 = vld [vmem:[%s1918 + $0x70] sm:$0xff]
  %v1934 = vld [vmem:[%s1918 + $0x78] sm:$0xff]
  %v1935 = vunpack.c.l.bf16 %v1919
  %v1936 = vunpack.c.h.bf16 %v1919
  %v1937 = vunpack.c.l.bf16 %v1920
  %v1938 = vunpack.c.h.bf16 %v1920
  %v1939 = vunpack.c.l.bf16 %v1921
  %v1940 = vunpack.c.h.bf16 %v1921
  %v1941 = vunpack.c.l.bf16 %v1922
  %v1942 = vunpack.c.h.bf16 %v1922
  %v1943 = vunpack.c.l.bf16 %v1923
  %v1944 = vunpack.c.h.bf16 %v1923
  %v1945 = vunpack.c.l.bf16 %v1924
  %v1946 = vunpack.c.h.bf16 %v1924
  %v1947 = vunpack.c.l.bf16 %v1925
  %v1948 = vunpack.c.h.bf16 %v1925
  %v1949 = vunpack.c.l.bf16 %v1926
  %v1950 = vunpack.c.h.bf16 %v1926
  %v1951 = vunpack.c.l.bf16 %v1927
  %v1952 = vunpack.c.h.bf16 %v1927
  %v1953 = vunpack.c.l.bf16 %v1928
  %v1954 = vunpack.c.h.bf16 %v1928
  %v1955 = vunpack.c.l.bf16 %v1929
  %v1956 = vunpack.c.h.bf16 %v1929
  %v1957 = vunpack.c.l.bf16 %v1930
  %v1958 = vunpack.c.h.bf16 %v1930
  %v1959 = vunpack.c.l.bf16 %v1931
  %v1960 = vunpack.c.h.bf16 %v1931
  %v1961 = vunpack.c.l.bf16 %v1932
  %v1962 = vunpack.c.h.bf16 %v1932
  %v1963 = vunpack.c.l.bf16 %v1933
  %v1964 = vunpack.c.h.bf16 %v1933
  %v1965 = vunpack.c.l.bf16 %v1934
  %v1966 = vunpack.c.h.bf16 %v1934
  %1967 = vmatprep.subr.mxu0 %v1966
  %1968 = vmatpush1.msra.mxu0 %v1965
  %1969 = vmatprep.subr.mxu0 %v1964
  %1970 = vmatpush1.msra.mxu0 %v1963
  %1971 = vmatprep.subr.mxu0 %v1962
  %1972 = vmatpush1.msra.mxu0 %v1961
  %1973 = vmatprep.subr.mxu0 %v1960
  %1974 = vmatpush1.msra.mxu0 %v1959
  %1975 = vmatprep.subr.mxu0 %v1958
  %1976 = vmatpush1.msra.mxu0 %v1957
  %1977 = vmatprep.subr.mxu0 %v1956
  %1978 = vmatpush1.msra.mxu0 %v1955
  %1979 = vmatprep.subr.mxu0 %v1954
  %1980 = vmatpush1.msra.mxu0 %v1953
  %1981 = vmatprep.subr.mxu0 %v1952
  %1982 = vmatpush1.msra.mxu0 %v1951
  %1983 = vmatprep.subr.mxu0 %v1950
  %1984 = vmatpush1.msra.mxu0 %v1949
  %1985 = vmatprep.subr.mxu0 %v1948
  %1986 = vmatpush1.msra.mxu0 %v1947
  %1987 = vmatprep.subr.mxu0 %v1946
  %1988 = vmatpush1.msra.mxu0 %v1945
  %1989 = vmatprep.subr.mxu0 %v1944
  %1990 = vmatpush1.msra.mxu0 %v1943
  %1991 = vmatprep.subr.mxu0 %v1942
  %1992 = vmatpush1.msra.mxu0 %v1941
  %1993 = vmatprep.subr.mxu0 %v1940
  %1994 = vmatpush1.msra.mxu0 %v1939
  %1995 = vmatprep.subr.mxu0 %v1938
  %1996 = vmatpush1.msra.mxu0 %v1937
  %1997 = vmatprep.subr.mxu0 %v1936
  %1998 = vmatpush1.msra.mxu0 %v1935
  %1999 = vmatprep.subr.mxu0 0.0
  %2000 = vmatpush2.msra.mxu0 0.0
  %2001 = vmatprep.subr.mxu0 0.0
  %2002 = vmatpush2.msra.mxu0 0.0
  %2003 = vmatprep.subr.mxu0 0.0
  %2004 = vmatpush2.msra.mxu0 0.0
  %2005 = vmatprep.subr.mxu0 0.0
  %2006 = vmatpush2.msra.mxu0 0.0
  %2007 = vmatprep.subr.mxu0 0.0
  %2008 = vmatpush2.msra.mxu0 0.0
  %2009 = vmatprep.subr.mxu0 0.0
  %2010 = vmatpush2.msra.mxu0 0.0
  %2011 = vmatprep.subr.mxu0 0.0
  %2012 = vmatpush2.msra.mxu0 0.0
  %2013 = vmatprep.subr.mxu0 0.0
  %2014 = vmatpush2.msra.mxu0 0.0
  %2015 = vmatprep.subr.mxu0 0.0
  %2016 = vmatpush2.msra.mxu0 0.0
  %2017 = vmatprep.subr.mxu0 0.0
  %2018 = vmatpush2.msra.mxu0 0.0
  %2019 = vmatprep.subr.mxu0 0.0
  %2020 = vmatpush2.msra.mxu0 0.0
  %2021 = vmatprep.subr.mxu0 0.0
  %2022 = vmatpush2.msra.mxu0 0.0
  %2023 = vmatprep.subr.mxu0 0.0
  %2024 = vmatpush2.msra.mxu0 0.0
  %2025 = vmatprep.subr.mxu0 0.0
  %2026 = vmatpush2.msra.mxu0 0.0
  %2027 = vmatprep.subr.mxu0 0.0
  %2028 = vmatpush2.msra.mxu0 0.0
  %2029 = vmatprep.subr.mxu0 0.0
  %2030 = vmatpush2.msra.mxu0 0.0
  %2031 = vmatprep.mubr.f32.mxu0 0.0
  %2032 = vmatmul.mubr.f32.gmra.mxu0 %v1917
  %v2033 = vpop.f32.mrf.mxu0
  %v2034 = vadd.f32 0.0, %v2033
  %v2035 = vpop.f32.mrf.mxu0
  %v2036 = vadd.f32 0.0, %v2035
  %2037 = vdwg.mxu0
  %v2038 = vadd.f32 %v1913, %v2034
  %v2039 = vadd.f32 %v1915, %v2036
  %v2040 = vld [vmem:[#allocation4 + $0x6] sm:$0x3f]
  %s2041 = scalar_lea.vmem %s7, 384
  %v2042 = vld [vmem:[%s2041] sm:$0xff]
  %v2043 = vld [vmem:[%s2041 + $0x8] sm:$0xff]
  %v2044 = vld [vmem:[%s2041 + $0x10] sm:$0xff]
  %v2045 = vld [vmem:[%s2041 + $0x18] sm:$0xff]
  %v2046 = vld [vmem:[%s2041 + $0x20] sm:$0xff]
  %v2047 = vld [vmem:[%s2041 + $0x28] sm:$0xff]
  %v2048 = vld [vmem:[%s2041 + $0x30] sm:$0xff]
  %v2049 = vld [vmem:[%s2041 + $0x38] sm:$0xff]
  %v2050 = vld [vmem:[%s2041 + $0x40] sm:$0xff]
  %v2051 = vld [vmem:[%s2041 + $0x48] sm:$0xff]
  %v2052 = vld [vmem:[%s2041 + $0x50] sm:$0xff]
  %v2053 = vld [vmem:[%s2041 + $0x58] sm:$0xff]
  %v2054 = vld [vmem:[%s2041 + $0x60] sm:$0xff]
  %v2055 = vld [vmem:[%s2041 + $0x68] sm:$0xff]
  %v2056 = vld [vmem:[%s2041 + $0x70] sm:$0xff]
  %v2057 = vld [vmem:[%s2041 + $0x78] sm:$0xff]
  %v2058 = vunpack.c.l.bf16 %v2042
  %v2059 = vunpack.c.h.bf16 %v2042
  %v2060 = vunpack.c.l.bf16 %v2043
  %v2061 = vunpack.c.h.bf16 %v2043
  %v2062 = vunpack.c.l.bf16 %v2044
  %v2063 = vunpack.c.h.bf16 %v2044
  %v2064 = vunpack.c.l.bf16 %v2045
  %v2065 = vunpack.c.h.bf16 %v2045
  %v2066 = vunpack.c.l.bf16 %v2046
  %v2067 = vunpack.c.h.bf16 %v2046
  %v2068 = vunpack.c.l.bf16 %v2047
  %v2069 = vunpack.c.h.bf16 %v2047
  %v2070 = vunpack.c.l.bf16 %v2048
  %v2071 = vunpack.c.h.bf16 %v2048
  %v2072 = vunpack.c.l.bf16 %v2049
  %v2073 = vunpack.c.h.bf16 %v2049
  %v2074 = vunpack.c.l.bf16 %v2050
  %v2075 = vunpack.c.h.bf16 %v2050
  %v2076 = vunpack.c.l.bf16 %v2051
  %v2077 = vunpack.c.h.bf16 %v2051
  %v2078 = vunpack.c.l.bf16 %v2052
  %v2079 = vunpack.c.h.bf16 %v2052
  %v2080 = vunpack.c.l.bf16 %v2053
  %v2081 = vunpack.c.h.bf16 %v2053
  %v2082 = vunpack.c.l.bf16 %v2054
  %v2083 = vunpack.c.h.bf16 %v2054
  %v2084 = vunpack.c.l.bf16 %v2055
  %v2085 = vunpack.c.h.bf16 %v2055
  %v2086 = vunpack.c.l.bf16 %v2056
  %v2087 = vunpack.c.h.bf16 %v2056
  %v2088 = vunpack.c.l.bf16 %v2057
  %v2089 = vunpack.c.h.bf16 %v2057
  %2090 = vmatprep.subr.mxu0 %v2089
  %2091 = vmatpush1.msra.mxu0 %v2088
  %2092 = vmatprep.subr.mxu0 %v2087
  %2093 = vmatpush1.msra.mxu0 %v2086
  %2094 = vmatprep.subr.mxu0 %v2085
  %2095 = vmatpush1.msra.mxu0 %v2084
  %2096 = vmatprep.subr.mxu0 %v2083
  %2097 = vmatpush1.msra.mxu0 %v2082
  %2098 = vmatprep.subr.mxu0 %v2081
  %2099 = vmatpush1.msra.mxu0 %v2080
  %2100 = vmatprep.subr.mxu0 %v2079
  %2101 = vmatpush1.msra.mxu0 %v2078
  %2102 = vmatprep.subr.mxu0 %v2077
  %2103 = vmatpush1.msra.mxu0 %v2076
  %2104 = vmatprep.subr.mxu0 %v2075
  %2105 = vmatpush1.msra.mxu0 %v2074
  %2106 = vmatprep.subr.mxu0 %v2073
  %2107 = vmatpush1.msra.mxu0 %v2072
  %2108 = vmatprep.subr.mxu0 %v2071
  %2109 = vmatpush1.msra.mxu0 %v2070
  %2110 = vmatprep.subr.mxu0 %v2069
  %2111 = vmatpush1.msra.mxu0 %v2068
  %2112 = vmatprep.subr.mxu0 %v2067
  %2113 = vmatpush1.msra.mxu0 %v2066
  %2114 = vmatprep.subr.mxu0 %v2065
  %2115 = vmatpush1.msra.mxu0 %v2064
  %2116 = vmatprep.subr.mxu0 %v2063
  %2117 = vmatpush1.msra.mxu0 %v2062
  %2118 = vmatprep.subr.mxu0 %v2061
  %2119 = vmatpush1.msra.mxu0 %v2060
  %2120 = vmatprep.subr.mxu0 %v2059
  %2121 = vmatpush1.msra.mxu0 %v2058
  %2122 = vmatprep.subr.mxu0 0.0
  %2123 = vmatpush2.msra.mxu0 0.0
  %2124 = vmatprep.subr.mxu0 0.0
  %2125 = vmatpush2.msra.mxu0 0.0
  %2126 = vmatprep.subr.mxu0 0.0
  %2127 = vmatpush2.msra.mxu0 0.0
  %2128 = vmatprep.subr.mxu0 0.0
  %2129 = vmatpush2.msra.mxu0 0.0
  %2130 = vmatprep.subr.mxu0 0.0
  %2131 = vmatpush2.msra.mxu0 0.0
  %2132 = vmatprep.subr.mxu0 0.0
  %2133 = vmatpush2.msra.mxu0 0.0
  %2134 = vmatprep.subr.mxu0 0.0
  %2135 = vmatpush2.msra.mxu0 0.0
  %2136 = vmatprep.subr.mxu0 0.0
  %2137 = vmatpush2.msra.mxu0 0.0
  %2138 = vmatprep.subr.mxu0 0.0
  %2139 = vmatpush2.msra.mxu0 0.0
  %2140 = vmatprep.subr.mxu0 0.0
  %2141 = vmatpush2.msra.mxu0 0.0
  %2142 = vmatprep.subr.mxu0 0.0
  %2143 = vmatpush2.msra.mxu0 0.0
  %2144 = vmatprep.subr.mxu0 0.0
  %2145 = vmatpush2.msra.mxu0 0.0
  %2146 = vmatprep.subr.mxu0 0.0
  %2147 = vmatpush2.msra.mxu0 0.0
  %2148 = vmatprep.subr.mxu0 0.0
  %2149 = vmatpush2.msra.mxu0 0.0
  %2150 = vmatprep.subr.mxu0 0.0
  %2151 = vmatpush2.msra.mxu0 0.0
  %2152 = vmatprep.subr.mxu0 0.0
  %2153 = vmatpush2.msra.mxu0 0.0
  %2154 = vmatprep.mubr.f32.mxu0 0.0
  %2155 = vmatmul.mubr.f32.gmra.mxu0 %v2040
  %v2156 = vpop.f32.mrf.mxu0
  %v2157 = vadd.f32 0.0, %v2156
  %v2158 = vpop.f32.mrf.mxu0
  %v2159 = vadd.f32 0.0, %v2158
  %2160 = vdwg.mxu0
  %v2161 = vadd.f32 %v2038, %v2157
  %v2162 = vadd.f32 %v2039, %v2159
  %v2163 = vld [vmem:[%s8] sm:$0x3]
  %v2165 = vlaneseq
  %v2166 = vshrl.u32 %v2165, 7
  %v2167 = vsub.s32 0, %v2166
  %v2168 = vrot.slane %v2163, %v2167
  %v2169 = vlaneseq
  %v2170 = vshrl.u32 %v2169, 7
  %v2171 = vsub.s32 1, %v2170
  %v2172 = vrot.slane %v2163, %v2171
  %v2175 = vadd.f32 %v2161, %v2168
  %v2176 = vadd.f32 %v2162, %v2172
  %vm2177 = vcmp.ge.f32.partialorder %v2175, 0.0
  %vm2178 = vcmp.ge.f32.partialorder %v2176, 0.0
  %v2179 = vmul.f32 %v2175, 0.2
  %v2180 = vmul.f32 %v2176, 0.2
  %v2181 = vsel %vm2177, %v2175, %v2179
  %v2182 = vsel %vm2178, %v2176, %v2180
  %v2185 = vrot.slane %v2181, 6
  %v2186 = vrot.slane %v2182, 6
  %2189 = vst [vmem:[#allocation5] sm:$0xfc] %v2185
  %vm2190 = vcmask 523266
  %2191 = vst.msk [vmem:[#allocation5 + $0x8] sm:$0xfc] %vm2190, %v2186
  %v2192 = vld [vmem:[#allocation5] sm:$0xf]
  %v2193 = vld [vmem:[#allocation5 + $0x8] sm:$0xf]
  %v2194 = vld [vmem:[%s9] sm:$0xf]
  %v2195 = vld [vmem:[%s9 + $0x4] sm:$0xf]
  %v2196 = vld [vmem:[%s9 + $0x8] sm:$0xf]
  %v2197 = vld [vmem:[%s9 + $0xc] sm:$0xf]
  %v2198 = vld [vmem:[%s9 + $0x10] sm:$0xf]
  %v2199 = vld [vmem:[%s9 + $0x14] sm:$0xf]
  %v2200 = vld [vmem:[%s9 + $0x18] sm:$0xf]
  %v2201 = vld [vmem:[%s9 + $0x1c] sm:$0xf]
  %v2202 = vld [vmem:[%s9 + $0x20] sm:$0xf]
  %v2203 = vld [vmem:[%s9 + $0x24] sm:$0xf]
  %v2204 = vld [vmem:[%s9 + $0x28] sm:$0xf]
  %v2205 = vld [vmem:[%s9 + $0x2c] sm:$0xf]
  %v2206 = vld [vmem:[%s9 + $0x30] sm:$0xf]
  %v2207 = vld [vmem:[%s9 + $0x34] sm:$0xf]
  %v2208 = vld [vmem:[%s9 + $0x38] sm:$0xf]
  %v2209 = vld [vmem:[%s9 + $0x3c] sm:$0xf]
  %v2210 = vld [vmem:[%s9 + $0x40] sm:$0xf]
  %v2211 = vld [vmem:[%s9 + $0x44] sm:$0xf]
  %v2212 = vld [vmem:[%s9 + $0x48] sm:$0xf]
  %v2213 = vld [vmem:[%s9 + $0x4c] sm:$0xf]
  %v2214 = vld [vmem:[%s9 + $0x50] sm:$0xf]
  %v2215 = vld [vmem:[%s9 + $0x54] sm:$0xf]
  %v2216 = vld [vmem:[%s9 + $0x58] sm:$0xf]
  %v2217 = vld [vmem:[%s9 + $0x5c] sm:$0xf]
  %v2218 = vunpack.c.l.bf16 %v2194
  %v2219 = vunpack.c.l.bf16 %v2195
  %v2220 = vunpack.c.l.bf16 %v2196
  %v2221 = vunpack.c.l.bf16 %v2197
  %v2222 = vunpack.c.l.bf16 %v2198
  %v2223 = vunpack.c.l.bf16 %v2199
  %v2224 = vunpack.c.l.bf16 %v2200
  %v2225 = vunpack.c.l.bf16 %v2201
  %v2226 = vunpack.c.l.bf16 %v2202
  %v2227 = vunpack.c.l.bf16 %v2203
  %v2228 = vunpack.c.l.bf16 %v2204
  %v2229 = vunpack.c.l.bf16 %v2205
  %v2230 = vunpack.c.l.bf16 %v2206
  %v2231 = vunpack.c.l.bf16 %v2207
  %v2232 = vunpack.c.l.bf16 %v2208
  %v2233 = vunpack.c.l.bf16 %v2209
  %v2234 = vunpack.c.l.bf16 %v2210
  %v2235 = vunpack.c.l.bf16 %v2211
  %v2236 = vunpack.c.l.bf16 %v2212
  %v2237 = vunpack.c.l.bf16 %v2213
  %v2238 = vunpack.c.l.bf16 %v2214
  %v2239 = vunpack.c.l.bf16 %v2215
  %v2240 = vunpack.c.l.bf16 %v2216
  %v2241 = vunpack.c.l.bf16 %v2217
  %v2242 = vld [vmem:[#allocation5] sm:$0x3c]
  %v2243 = vld [vmem:[#allocation5 + $0x8] sm:$0x3c]
  %s2244 = scalar_lea.vmem %s9, 96
  %v2245 = vld [vmem:[%s2244] sm:$0xf]
  %v2246 = vld [vmem:[%s2244 + $0x4] sm:$0xf]
  %v2247 = vld [vmem:[%s2244 + $0x8] sm:$0xf]
  %v2248 = vld [vmem:[%s2244 + $0xc] sm:$0xf]
  %v2249 = vld [vmem:[%s2244 + $0x10] sm:$0xf]
  %v2250 = vld [vmem:[%s2244 + $0x14] sm:$0xf]
  %v2251 = vld [vmem:[%s2244 + $0x18] sm:$0xf]
  %v2252 = vld [vmem:[%s2244 + $0x1c] sm:$0xf]
  %v2253 = vld [vmem:[%s2244 + $0x20] sm:$0xf]
  %v2254 = vld [vmem:[%s2244 + $0x24] sm:$0xf]
  %v2255 = vld [vmem:[%s2244 + $0x28] sm:$0xf]
  %v2256 = vld [vmem:[%s2244 + $0x2c] sm:$0xf]
  %v2257 = vld [vmem:[%s2244 + $0x30] sm:$0xf]
  %v2258 = vld [vmem:[%s2244 + $0x34] sm:$0xf]
  %v2259 = vld [vmem:[%s2244 + $0x38] sm:$0xf]
  %v2260 = vld [vmem:[%s2244 + $0x3c] sm:$0xf]
  %v2261 = vld [vmem:[%s2244 + $0x40] sm:$0xf]
  %v2262 = vld [vmem:[%s2244 + $0x44] sm:$0xf]
  %v2263 = vld [vmem:[%s2244 + $0x48] sm:$0xf]
  %v2264 = vld [vmem:[%s2244 + $0x4c] sm:$0xf]
  %v2265 = vld [vmem:[%s2244 + $0x50] sm:$0xf]
  %v2266 = vld [vmem:[%s2244 + $0x54] sm:$0xf]
  %v2267 = vld [vmem:[%s2244 + $0x58] sm:$0xf]
  %v2268 = vld [vmem:[%s2244 + $0x5c] sm:$0xf]
  %v2269 = vunpack.c.l.bf16 %v2245
  %v2270 = vunpack.c.l.bf16 %v2246
  %v2271 = vunpack.c.l.bf16 %v2247
  %v2272 = vunpack.c.l.bf16 %v2248
  %v2273 = vunpack.c.l.bf16 %v2249
  %v2274 = vunpack.c.l.bf16 %v2250
  %v2275 = vunpack.c.l.bf16 %v2251
  %v2276 = vunpack.c.l.bf16 %v2252
  %v2277 = vunpack.c.l.bf16 %v2253
  %v2278 = vunpack.c.l.bf16 %v2254
  %v2279 = vunpack.c.l.bf16 %v2255
  %v2280 = vunpack.c.l.bf16 %v2256
  %v2281 = vunpack.c.l.bf16 %v2257
  %v2282 = vunpack.c.l.bf16 %v2258
  %v2283 = vunpack.c.l.bf16 %v2259
  %v2284 = vunpack.c.l.bf16 %v2260
  %v2285 = vunpack.c.l.bf16 %v2261
  %v2286 = vunpack.c.l.bf16 %v2262
  %v2287 = vunpack.c.l.bf16 %v2263
  %v2288 = vunpack.c.l.bf16 %v2264
  %v2289 = vunpack.c.l.bf16 %v2265
  %v2290 = vunpack.c.l.bf16 %v2266
  %v2291 = vunpack.c.l.bf16 %v2267
  %v2292 = vunpack.c.l.bf16 %v2268
  %v2295 = vrot.slane %v2242, 2
  %v2296 = vrot.slane %v2243, 2
  %vm2298 = vcmask 523264
  %v2299 = vsel %vm2298, %v2296, 0
  %2301 = vmatprep.subr.mxu0 0.0
  %2302 = vmatpush1.msra.mxu0 %v2284
  %2303 = vmatprep.subr.mxu0 0.0
  %2304 = vmatpush1.msra.mxu0 %v2283
  %2305 = vmatprep.subr.mxu0 0.0
  %2306 = vmatpush1.msra.mxu0 %v2282
  %2307 = vmatprep.subr.mxu0 0.0
  %2308 = vmatpush1.msra.mxu0 %v2281
  %2309 = vmatprep.subr.mxu0 0.0
  %2310 = vmatpush1.msra.mxu0 %v2280
  %2311 = vmatprep.subr.mxu0 0.0
  %2312 = vmatpush1.msra.mxu0 %v2279
  %2313 = vmatprep.subr.mxu0 0.0
  %2314 = vmatpush1.msra.mxu0 %v2278
  %2315 = vmatprep.subr.mxu0 0.0
  %2316 = vmatpush1.msra.mxu0 %v2277
  %2317 = vmatprep.subr.mxu0 0.0
  %2318 = vmatpush1.msra.mxu0 %v2276
  %2319 = vmatprep.subr.mxu0 0.0
  %2320 = vmatpush1.msra.mxu0 %v2275
  %2321 = vmatprep.subr.mxu0 0.0
  %2322 = vmatpush1.msra.mxu0 %v2274
  %2323 = vmatprep.subr.mxu0 0.0
  %2324 = vmatpush1.msra.mxu0 %v2273
  %2325 = vmatprep.subr.mxu0 0.0
  %2326 = vmatpush1.msra.mxu0 %v2272
  %2327 = vmatprep.subr.mxu0 0.0
  %2328 = vmatpush1.msra.mxu0 %v2271
  %2329 = vmatprep.subr.mxu0 0.0
  %2330 = vmatpush1.msra.mxu0 %v2270
  %2331 = vmatprep.subr.mxu0 0.0
  %2332 = vmatpush1.msra.mxu0 %v2269
  %2333 = vmatprep.subr.mxu0 0.0
  %2334 = vmatpush2.msra.mxu0 0.0
  %2335 = vmatprep.subr.mxu0 0.0
  %2336 = vmatpush2.msra.mxu0 0.0
  %2337 = vmatprep.subr.mxu0 0.0
  %2338 = vmatpush2.msra.mxu0 0.0
  %2339 = vmatprep.subr.mxu0 0.0
  %2340 = vmatpush2.msra.mxu0 0.0
  %2341 = vmatprep.subr.mxu0 0.0
  %2342 = vmatpush2.msra.mxu0 0.0
  %2343 = vmatprep.subr.mxu0 0.0
  %2344 = vmatpush2.msra.mxu0 0.0
  %2345 = vmatprep.subr.mxu0 0.0
  %2346 = vmatpush2.msra.mxu0 0.0
  %2347 = vmatprep.subr.mxu0 0.0
  %2348 = vmatpush2.msra.mxu0 0.0
  %2349 = vmatprep.subr.mxu0 0.0
  %2350 = vmatpush2.msra.mxu0 %v2292
  %2351 = vmatprep.subr.mxu0 0.0
  %2352 = vmatpush2.msra.mxu0 %v2291
  %2353 = vmatprep.subr.mxu0 0.0
  %2354 = vmatpush2.msra.mxu0 %v2290
  %2355 = vmatprep.subr.mxu0 0.0
  %2356 = vmatpush2.msra.mxu0 %v2289
  %2357 = vmatprep.subr.mxu0 0.0
  %2358 = vmatpush2.msra.mxu0 %v2288
  %2359 = vmatprep.subr.mxu0 0.0
  %2360 = vmatpush2.msra.mxu0 %v2287
  %2361 = vmatprep.subr.mxu0 0.0
  %2362 = vmatpush2.msra.mxu0 %v2286
  %2363 = vmatprep.subr.mxu0 0.0
  %2364 = vmatpush2.msra.mxu0 %v2285
  %2365 = vmatprep.mubr.f32.mxu0 %v2299
  %2366 = vmatmul.mubr.f32.gmra.mxu0 %v2295
  %v2367 = vpop.f32.mrf.mxu0
  %v2368 = vadd.f32 0.0, %v2367
  %v2369 = vpop.f32.mrf.mxu0
  %2370 = vdwg.mxu0
  %v2372 = vsel %vm2298, %v2193, 0
  %2374 = vmatprep.subr.mxu0 0.0
  %2375 = vmatpush1.msra.mxu0 %v2233
  %2376 = vmatprep.subr.mxu0 0.0
  %2377 = vmatpush1.msra.mxu0 %v2232
  %2378 = vmatprep.subr.mxu0 0.0
  %2379 = vmatpush1.msra.mxu0 %v2231
  %2380 = vmatprep.subr.mxu0 0.0
  %2381 = vmatpush1.msra.mxu0 %v2230
  %2382 = vmatprep.subr.mxu0 0.0
  %2383 = vmatpush1.msra.mxu0 %v2229
  %2384 = vmatprep.subr.mxu0 0.0
  %2385 = vmatpush1.msra.mxu0 %v2228
  %2386 = vmatprep.subr.mxu0 0.0
  %2387 = vmatpush1.msra.mxu0 %v2227
  %2388 = vmatprep.subr.mxu0 0.0
  %2389 = vmatpush1.msra.mxu0 %v2226
  %2390 = vmatprep.subr.mxu0 0.0
  %2391 = vmatpush1.msra.mxu0 %v2225
  %2392 = vmatprep.subr.mxu0 0.0
  %2393 = vmatpush1.msra.mxu0 %v2224
  %2394 = vmatprep.subr.mxu0 0.0
  %2395 = vmatpush1.msra.mxu0 %v2223
  %2396 = vmatprep.subr.mxu0 0.0
  %2397 = vmatpush1.msra.mxu0 %v2222
  %2398 = vmatprep.subr.mxu0 0.0
  %2399 = vmatpush1.msra.mxu0 %v2221
  %2400 = vmatprep.subr.mxu0 0.0
  %2401 = vmatpush1.msra.mxu0 %v2220
  %2402 = vmatprep.subr.mxu0 0.0
  %2403 = vmatpush1.msra.mxu0 %v2219
  %2404 = vmatprep.subr.mxu0 0.0
  %2405 = vmatpush1.msra.mxu0 %v2218
  %2406 = vmatprep.subr.mxu0 0.0
  %2407 = vmatpush2.msra.mxu0 0.0
  %2408 = vmatprep.subr.mxu0 0.0
  %2409 = vmatpush2.msra.mxu0 0.0
  %2410 = vmatprep.subr.mxu0 0.0
  %2411 = vmatpush2.msra.mxu0 0.0
  %2412 = vmatprep.subr.mxu0 0.0
  %2413 = vmatpush2.msra.mxu0 0.0
  %2414 = vmatprep.subr.mxu0 0.0
  %2415 = vmatpush2.msra.mxu0 0.0
  %2416 = vmatprep.subr.mxu0 0.0
  %2417 = vmatpush2.msra.mxu0 0.0
  %2418 = vmatprep.subr.mxu0 0.0
  %2419 = vmatpush2.msra.mxu0 0.0
  %2420 = vmatprep.subr.mxu0 0.0
  %2421 = vmatpush2.msra.mxu0 0.0
  %2422 = vmatprep.subr.mxu0 0.0
  %2423 = vmatpush2.msra.mxu0 %v2241
  %2424 = vmatprep.subr.mxu0 0.0
  %2425 = vmatpush2.msra.mxu0 %v2240
  %2426 = vmatprep.subr.mxu0 0.0
  %2427 = vmatpush2.msra.mxu0 %v2239
  %2428 = vmatprep.subr.mxu0 0.0
  %2429 = vmatpush2.msra.mxu0 %v2238
  %2430 = vmatprep.subr.mxu0 0.0
  %2431 = vmatpush2.msra.mxu0 %v2237
  %2432 = vmatprep.subr.mxu0 0.0
  %2433 = vmatpush2.msra.mxu0 %v2236
  %2434 = vmatprep.subr.mxu0 0.0
  %2435 = vmatpush2.msra.mxu0 %v2235
  %2436 = vmatprep.subr.mxu0 0.0
  %2437 = vmatpush2.msra.mxu0 %v2234
  %2438 = vmatprep.mubr.f32.mxu0 %v2372
  %2439 = vmatmul.mubr.f32.gmra.mxu0 %v2192
  %v2440 = vpop.f32.mrf.mxu0
  %v2441 = vadd.f32 %v2368, %v2440
  %v2442 = vpop.f32.mrf.mxu0
  %2443 = vdwg.mxu0
  %v2444 = vld [vmem:[#allocation5] sm:$0xf0]
  %v2445 = vld [vmem:[#allocation5 + $0x8] sm:$0xf0]
  %s2446 = scalar_lea.vmem %s9, 192
  %v2447 = vld [vmem:[%s2446] sm:$0xf]
  %v2448 = vld [vmem:[%s2446 + $0x4] sm:$0xf]
  %v2449 = vld [vmem:[%s2446 + $0x8] sm:$0xf]
  %v2450 = vld [vmem:[%s2446 + $0xc] sm:$0xf]
  %v2451 = vld [vmem:[%s2446 + $0x10] sm:$0xf]
  %v2452 = vld [vmem:[%s2446 + $0x14] sm:$0xf]
  %v2453 = vld [vmem:[%s2446 + $0x18] sm:$0xf]
  %v2454 = vld [vmem:[%s2446 + $0x1c] sm:$0xf]
  %v2455 = vld [vmem:[%s2446 + $0x20] sm:$0xf]
  %v2456 = vld [vmem:[%s2446 + $0x24] sm:$0xf]
  %v2457 = vld [vmem:[%s2446 + $0x28] sm:$0xf]
  %v2458 = vld [vmem:[%s2446 + $0x2c] sm:$0xf]
  %v2459 = vld [vmem:[%s2446 + $0x30] sm:$0xf]
  %v2460 = vld [vmem:[%s2446 + $0x34] sm:$0xf]
  %v2461 = vld [vmem:[%s2446 + $0x38] sm:$0xf]
  %v2462 = vld [vmem:[%s2446 + $0x3c] sm:$0xf]
  %v2463 = vld [vmem:[%s2446 + $0x40] sm:$0xf]
  %v2464 = vld [vmem:[%s2446 + $0x44] sm:$0xf]
  %v2465 = vld [vmem:[%s2446 + $0x48] sm:$0xf]
  %v2466 = vld [vmem:[%s2446 + $0x4c] sm:$0xf]
  %v2467 = vld [vmem:[%s2446 + $0x50] sm:$0xf]
  %v2468 = vld [vmem:[%s2446 + $0x54] sm:$0xf]
  %v2469 = vld [vmem:[%s2446 + $0x58] sm:$0xf]
  %v2470 = vld [vmem:[%s2446 + $0x5c] sm:$0xf]
  %v2471 = vunpack.c.l.bf16 %v2447
  %v2472 = vunpack.c.l.bf16 %v2448
  %v2473 = vunpack.c.l.bf16 %v2449
  %v2474 = vunpack.c.l.bf16 %v2450
  %v2475 = vunpack.c.l.bf16 %v2451
  %v2476 = vunpack.c.l.bf16 %v2452
  %v2477 = vunpack.c.l.bf16 %v2453
  %v2478 = vunpack.c.l.bf16 %v2454
  %v2479 = vunpack.c.l.bf16 %v2455
  %v2480 = vunpack.c.l.bf16 %v2456
  %v2481 = vunpack.c.l.bf16 %v2457
  %v2482 = vunpack.c.l.bf16 %v2458
  %v2483 = vunpack.c.l.bf16 %v2459
  %v2484 = vunpack.c.l.bf16 %v2460
  %v2485 = vunpack.c.l.bf16 %v2461
  %v2486 = vunpack.c.l.bf16 %v2462
  %v2487 = vunpack.c.l.bf16 %v2463
  %v2488 = vunpack.c.l.bf16 %v2464
  %v2489 = vunpack.c.l.bf16 %v2465
  %v2490 = vunpack.c.l.bf16 %v2466
  %v2491 = vunpack.c.l.bf16 %v2467
  %v2492 = vunpack.c.l.bf16 %v2468
  %v2493 = vunpack.c.l.bf16 %v2469
  %v2494 = vunpack.c.l.bf16 %v2470
  %v2497 = vrot.slane %v2444, 4
  %v2498 = vrot.slane %v2445, 4
  %v2500 = vsel %vm2298, %v2498, 0
  %2502 = vmatprep.subr.mxu0 0.0
  %2503 = vmatpush1.msra.mxu0 %v2486
  %2504 = vmatprep.subr.mxu0 0.0
  %2505 = vmatpush1.msra.mxu0 %v2485
  %2506 = vmatprep.subr.mxu0 0.0
  %2507 = vmatpush1.msra.mxu0 %v2484
  %2508 = vmatprep.subr.mxu0 0.0
  %2509 = vmatpush1.msra.mxu0 %v2483
  %2510 = vmatprep.subr.mxu0 0.0
  %2511 = vmatpush1.msra.mxu0 %v2482
  %2512 = vmatprep.subr.mxu0 0.0
  %2513 = vmatpush1.msra.mxu0 %v2481
  %2514 = vmatprep.subr.mxu0 0.0
  %2515 = vmatpush1.msra.mxu0 %v2480
  %2516 = vmatprep.subr.mxu0 0.0
  %2517 = vmatpush1.msra.mxu0 %v2479
  %2518 = vmatprep.subr.mxu0 0.0
  %2519 = vmatpush1.msra.mxu0 %v2478
  %2520 = vmatprep.subr.mxu0 0.0
  %2521 = vmatpush1.msra.mxu0 %v2477
  %2522 = vmatprep.subr.mxu0 0.0
  %2523 = vmatpush1.msra.mxu0 %v2476
  %2524 = vmatprep.subr.mxu0 0.0
  %2525 = vmatpush1.msra.mxu0 %v2475
  %2526 = vmatprep.subr.mxu0 0.0
  %2527 = vmatpush1.msra.mxu0 %v2474
  %2528 = vmatprep.subr.mxu0 0.0
  %2529 = vmatpush1.msra.mxu0 %v2473
  %2530 = vmatprep.subr.mxu0 0.0
  %2531 = vmatpush1.msra.mxu0 %v2472
  %2532 = vmatprep.subr.mxu0 0.0
  %2533 = vmatpush1.msra.mxu0 %v2471
  %2534 = vmatprep.subr.mxu0 0.0
  %2535 = vmatpush2.msra.mxu0 0.0
  %2536 = vmatprep.subr.mxu0 0.0
  %2537 = vmatpush2.msra.mxu0 0.0
  %2538 = vmatprep.subr.mxu0 0.0
  %2539 = vmatpush2.msra.mxu0 0.0
  %2540 = vmatprep.subr.mxu0 0.0
  %2541 = vmatpush2.msra.mxu0 0.0
  %2542 = vmatprep.subr.mxu0 0.0
  %2543 = vmatpush2.msra.mxu0 0.0
  %2544 = vmatprep.subr.mxu0 0.0
  %2545 = vmatpush2.msra.mxu0 0.0
  %2546 = vmatprep.subr.mxu0 0.0
  %2547 = vmatpush2.msra.mxu0 0.0
  %2548 = vmatprep.subr.mxu0 0.0
  %2549 = vmatpush2.msra.mxu0 0.0
  %2550 = vmatprep.subr.mxu0 0.0
  %2551 = vmatpush2.msra.mxu0 %v2494
  %2552 = vmatprep.subr.mxu0 0.0
  %2553 = vmatpush2.msra.mxu0 %v2493
  %2554 = vmatprep.subr.mxu0 0.0
  %2555 = vmatpush2.msra.mxu0 %v2492
  %2556 = vmatprep.subr.mxu0 0.0
  %2557 = vmatpush2.msra.mxu0 %v2491
  %2558 = vmatprep.subr.mxu0 0.0
  %2559 = vmatpush2.msra.mxu0 %v2490
  %2560 = vmatprep.subr.mxu0 0.0
  %2561 = vmatpush2.msra.mxu0 %v2489
  %2562 = vmatprep.subr.mxu0 0.0
  %2563 = vmatpush2.msra.mxu0 %v2488
  %2564 = vmatprep.subr.mxu0 0.0
  %2565 = vmatpush2.msra.mxu0 %v2487
  %2566 = vmatprep.mubr.f32.mxu0 %v2500
  %2567 = vmatmul.mubr.f32.gmra.mxu0 %v2497
  %v2568 = vpop.f32.mrf.mxu0
  %v2569 = vadd.f32 0.0, %v2568
  %v2570 = vpop.f32.mrf.mxu0
  %2571 = vdwg.mxu0
  %v2572 = vadd.f32 %v2441, %v2569
  %v2573 = vld [vmem:[#allocation5] sm:$0xc0]
  %v2574 = vld [vmem:[#allocation5 + $0x8] sm:$0xc0]
  %v2575 = vld [vmem:[#allocation5 + $0x10] sm:$0x3]
  %v2576 = vld [vmem:[#allocation5 + $0x18] sm:$0x3]
  %s2577 = scalar_lea.vmem %s9, 288
  %v2578 = vld [vmem:[%s2577] sm:$0xf]
  %v2579 = vld [vmem:[%s2577 + $0x4] sm:$0xf]
  %v2580 = vld [vmem:[%s2577 + $0x8] sm:$0xf]
  %v2581 = vld [vmem:[%s2577 + $0xc] sm:$0xf]
  %v2582 = vld [vmem:[%s2577 + $0x10] sm:$0xf]
  %v2583 = vld [vmem:[%s2577 + $0x14] sm:$0xf]
  %v2584 = vld [vmem:[%s2577 + $0x18] sm:$0xf]
  %v2585 = vld [vmem:[%s2577 + $0x1c] sm:$0xf]
  %v2586 = vld [vmem:[%s2577 + $0x20] sm:$0xf]
  %v2587 = vld [vmem:[%s2577 + $0x24] sm:$0xf]
  %v2588 = vld [vmem:[%s2577 + $0x28] sm:$0xf]
  %v2589 = vld [vmem:[%s2577 + $0x2c] sm:$0xf]
  %v2590 = vld [vmem:[%s2577 + $0x30] sm:$0xf]
  %v2591 = vld [vmem:[%s2577 + $0x34] sm:$0xf]
  %v2592 = vld [vmem:[%s2577 + $0x38] sm:$0xf]
  %v2593 = vld [vmem:[%s2577 + $0x3c] sm:$0xf]
  %v2594 = vld [vmem:[%s2577 + $0x40] sm:$0xf]
  %v2595 = vld [vmem:[%s2577 + $0x44] sm:$0xf]
  %v2596 = vld [vmem:[%s2577 + $0x48] sm:$0xf]
  %v2597 = vld [vmem:[%s2577 + $0x4c] sm:$0xf]
  %v2598 = vld [vmem:[%s2577 + $0x50] sm:$0xf]
  %v2599 = vld [vmem:[%s2577 + $0x54] sm:$0xf]
  %v2600 = vld [vmem:[%s2577 + $0x58] sm:$0xf]
  %v2601 = vld [vmem:[%s2577 + $0x5c] sm:$0xf]
  %v2602 = vunpack.c.l.bf16 %v2578
  %v2603 = vunpack.c.l.bf16 %v2579
  %v2604 = vunpack.c.l.bf16 %v2580
  %v2605 = vunpack.c.l.bf16 %v2581
  %v2606 = vunpack.c.l.bf16 %v2582
  %v2607 = vunpack.c.l.bf16 %v2583
  %v2608 = vunpack.c.l.bf16 %v2584
  %v2609 = vunpack.c.l.bf16 %v2585
  %v2610 = vunpack.c.l.bf16 %v2586
  %v2611 = vunpack.c.l.bf16 %v2587
  %v2612 = vunpack.c.l.bf16 %v2588
  %v2613 = vunpack.c.l.bf16 %v2589
  %v2614 = vunpack.c.l.bf16 %v2590
  %v2615 = vunpack.c.l.bf16 %v2591
  %v2616 = vunpack.c.l.bf16 %v2592
  %v2617 = vunpack.c.l.bf16 %v2593
  %v2618 = vunpack.c.l.bf16 %v2594
  %v2619 = vunpack.c.l.bf16 %v2595
  %v2620 = vunpack.c.l.bf16 %v2596
  %v2621 = vunpack.c.l.bf16 %v2597
  %v2622 = vunpack.c.l.bf16 %v2598
  %v2623 = vunpack.c.l.bf16 %v2599
  %v2624 = vunpack.c.l.bf16 %v2600
  %v2625 = vunpack.c.l.bf16 %v2601
  %vm2630 = vcmask 1041408
  %v2631 = vrot.slane %v2573, 6
  %v2632 = vrot.slane %v2575, 6
  %v2633 = vsel %vm2630, %v2631, %v2632
  %v2634 = vrot.slane %v2574, 6
  %v2635 = vrot.slane %v2576, 6
  %v2636 = vsel %vm2630, %v2634, %v2635
  %v2638 = vsel %vm2298, %v2636, 0
  %2640 = vmatprep.subr.mxu0 0.0
  %2641 = vmatpush1.msra.mxu0 %v2617
  %2642 = vmatprep.subr.mxu0 0.0
  %2643 = vmatpush1.msra.mxu0 %v2616
  %2644 = vmatprep.subr.mxu0 0.0
  %2645 = vmatpush1.msra.mxu0 %v2615
  %2646 = vmatprep.subr.mxu0 0.0
  %2647 = vmatpush1.msra.mxu0 %v2614
  %2648 = vmatprep.subr.mxu0 0.0
  %2649 = vmatpush1.msra.mxu0 %v2613
  %2650 = vmatprep.subr.mxu0 0.0
  %2651 = vmatpush1.msra.mxu0 %v2612
  %2652 = vmatprep.subr.mxu0 0.0
  %2653 = vmatpush1.msra.mxu0 %v2611
  %2654 = vmatprep.subr.mxu0 0.0
  %2655 = vmatpush1.msra.mxu0 %v2610
  %2656 = vmatprep.subr.mxu0 0.0
  %2657 = vmatpush1.msra.mxu0 %v2609
  %2658 = vmatprep.subr.mxu0 0.0
  %2659 = vmatpush1.msra.mxu0 %v2608
  %2660 = vmatprep.subr.mxu0 0.0
  %2661 = vmatpush1.msra.mxu0 %v2607
  %2662 = vmatprep.subr.mxu0 0.0
  %2663 = vmatpush1.msra.mxu0 %v2606
  %2664 = vmatprep.subr.mxu0 0.0
  %2665 = vmatpush1.msra.mxu0 %v2605
  %2666 = vmatprep.subr.mxu0 0.0
  %2667 = vmatpush1.msra.mxu0 %v2604
  %2668 = vmatprep.subr.mxu0 0.0
  %2669 = vmatpush1.msra.mxu0 %v2603
  %2670 = vmatprep.subr.mxu0 0.0
  %2671 = vmatpush1.msra.mxu0 %v2602
  %2672 = vmatprep.subr.mxu0 0.0
  %2673 = vmatpush2.msra.mxu0 0.0
  %2674 = vmatprep.subr.mxu0 0.0
  %2675 = vmatpush2.msra.mxu0 0.0
  %2676 = vmatprep.subr.mxu0 0.0
  %2677 = vmatpush2.msra.mxu0 0.0
  %2678 = vmatprep.subr.mxu0 0.0
  %2679 = vmatpush2.msra.mxu0 0.0
  %2680 = vmatprep.subr.mxu0 0.0
  %2681 = vmatpush2.msra.mxu0 0.0
  %2682 = vmatprep.subr.mxu0 0.0
  %2683 = vmatpush2.msra.mxu0 0.0
  %2684 = vmatprep.subr.mxu0 0.0
  %2685 = vmatpush2.msra.mxu0 0.0
  %2686 = vmatprep.subr.mxu0 0.0
  %2687 = vmatpush2.msra.mxu0 0.0
  %2688 = vmatprep.subr.mxu0 0.0
  %2689 = vmatpush2.msra.mxu0 %v2625
  %2690 = vmatprep.subr.mxu0 0.0
  %2691 = vmatpush2.msra.mxu0 %v2624
  %2692 = vmatprep.subr.mxu0 0.0
  %2693 = vmatpush2.msra.mxu0 %v2623
  %2694 = vmatprep.subr.mxu0 0.0
  %2695 = vmatpush2.msra.mxu0 %v2622
  %2696 = vmatprep.subr.mxu0 0.0
  %2697 = vmatpush2.msra.mxu0 %v2621
  %2698 = vmatprep.subr.mxu0 0.0
  %2699 = vmatpush2.msra.mxu0 %v2620
  %2700 = vmatprep.subr.mxu0 0.0
  %2701 = vmatpush2.msra.mxu0 %v2619
  %2702 = vmatprep.subr.mxu0 0.0
  %2703 = vmatpush2.msra.mxu0 %v2618
  %2704 = vmatprep.mubr.f32.mxu0 %v2638
  %2705 = vmatmul.mubr.f32.gmra.mxu0 %v2633
  %v2706 = vpop.f32.mrf.mxu0
  %v2707 = vadd.f32 0.0, %v2706
  %v2708 = vpop.f32.mrf.mxu0
  %2709 = vdwg.mxu0
  %v2710 = vadd.f32 %v2572, %v2707
  %v2711 = vld [vmem:[%s10] sm:$0x1]
  %v2713 = vlaneseq
  %v2714 = vshrl.u32 %v2713, 7
  %v2715 = vsub.s32 0, %v2714
  %v2716 = vrot.slane %v2711, %v2715
  %v2718 = vadd.f32 %v2710, %v2716
  %vm2719 = vcmask 11264
  %2720 = vst.msk [vmem:[%s11] sm:$0xf] %vm2719, %v2718
  %2721 = vst.msk [vmem:[%s11 + $0x4] sm:$0xf] %vm2719, 0.0
  // Predicated region
  $region46: #{_lambda_.1} parent=0 // pred_check
    _
  $region47: #{_lambda_.1} parent=0 // pred_check_branch
    %2723 = sbr.rel (0) target = $region49
  $region48: #{_lambda_.1} parent=0 // pred_region
    _
  $region49: #{_lambda_.1} parent=0 // pred_fallthru
    _
  // Predicated region
  $region50: #{_lambda_.1} parent=0 // pred_check
    _
  $region51: #{_lambda_.1} parent=0 // pred_check_branch
    %2725 = sbr.rel (0) target = $region53
  $region52: #{_lambda_.1} parent=0 // pred_region
    _
  $region53: #{_lambda_.1} parent=0 // pred_fallthru
    _

</llo_original>
